<compile_context>
chip_gen: v6e
topology: v6e:2x2x1
jax: 0.10.0
libtpu: 0.0.40
codegen_flags: <defaults>
</compile_context>

<pallas_src>
import jax
import jax.numpy as jnp
from jax import lax
from jax.experimental import pallas as pl
from jax.experimental.pallas import tpu as pltpu

LANE = 128


def _conv3x3_folded(ap, w):
    """3x3 conv with reflection padding, as a single im2col matmul.

    ap: (H+2, W, Cp) activation, already reflection-padded along H; the W reflection
        halo is handled here with two shifted views.
    w:  (9*Cp, Cp) weight matrix, rows ordered k*Cp + cin with k = dy*3 + dx.
    returns: (H*W, Cp) float32
    """
    Hp2, W, Cp = ap.shape
    H = Hp2 - 2

    # Horizontal reflect-shifted views: value at column j is ap[:, reflect(j-1)] / ap[:, reflect(j+1)].
    left = jnp.concatenate([ap[:, 1:2, :], ap[:, : W - 1, :]], axis=1)
    right = jnp.concatenate([ap[:, 1:, :], ap[:, W - 2 : W - 1, :]], axis=1)

    cols = []
    for dy in range(3):                       # vertical taps: aligned leading-dim slices
        for src in (left, ap, right):         # horizontal taps dx = 0, 1, 2
            cols.append(src[dy : dy + H].reshape(H * W, Cp))
    patches = jnp.concatenate(cols, axis=-1)  # (H*W, 9*Cp), lane-aligned concat
    return jnp.dot(patches, w, preferred_element_type=jnp.float32)


def _instance_norm(y, leaky=None, eps=1e-5):
    """Single-pass InstanceNorm over axis 0 (spatial), optional fused LeakyReLU."""
    hw = y.shape[0]
    inv_hw = 1.0 / hw
    mean = jnp.sum(y, axis=0, keepdims=True) * inv_hw
    mean_sq = jnp.sum(y * y, axis=0, keepdims=True) * inv_hw
    var = jnp.maximum(mean_sq - mean * mean, 0.0)
    inv = lax.rsqrt(var + eps)
    yc = y - mean
    if leaky is None:
        return yc * inv
    # LeakyReLU fused into the normalization scale (sign(yc * inv) == sign(yc) since inv > 0).
    return yc * jnp.where(yc >= 0, inv, leaky * inv)


def resnet_block_kernel(xp_ref, w1_ref, w2_ref, o_ref):
    xp = xp_ref[0]                    # (H+2, W, Cp), reflection-padded along H in the wrapper
    Hp2, W, Cp = xp.shape
    H = Hp2 - 2

    # ReflectionPad2d(1) -> Conv2d(3x3) -> InstanceNorm2d -> LeakyReLU(0.2)
    y = _conv3x3_folded(xp, w1_ref[...])
    y = _instance_norm(y, leaky=0.2)

    # ReflectionPad2d(1) -> Conv2d(3x3) -> InstanceNorm2d
    y = y.reshape(H, W, Cp)
    yp = jnp.concatenate([y[1:2], y, y[H - 2 : H - 1]], axis=0)   # H reflect pad (aligned slabs)
    y = _conv3x3_folded(yp, w2_ref[...])
    y = _instance_norm(y, leaky=None)

    # Residual / skip connection (rows 1..H of xp are the original, unpadded image).
    o_ref[0] = xp[1 : 1 + H] + y.reshape(H, W, Cp)


def resnet_block(x_nchw, w1, b1, w2, b2):
    """x_nchw: (B, C, H, W) f32; w*: (C, C, 3, 3) PyTorch OIHW; b*: (C,) (cancelled by IN)."""
    B, C, H, W = x_nchw.shape
    Cp = ((C + LANE - 1) // LANE) * LANE      # lane-dense channel count

    # NCHW -> NHWC, zero-pad channels to Cp, reflection-pad H once in HBM (conv1's top/bottom halo).
    x = jnp.transpose(x_nchw, (0, 2, 3, 1)).astype(jnp.float32)
    x = jnp.pad(x, ((0, 0), (0, 0), (0, 0), (0, Cp - C)))
    xp = jnp.pad(x, ((0, 0), (1, 1), (0, 0), (0, 0)), mode="reflect")   # (B, H+2, W, Cp)

    def to_mat(w):
        # OIHW -> (kh, kw, cin, cout) -> zero-pad channels -> (9*Cp, Cp) single matmul operand.
        w = jnp.transpose(w.astype(jnp.float32), (2, 3, 1, 0))
        w = jnp.pad(w, ((0, 0), (0, 0), (0, Cp - C), (0, Cp - C)))
        return w.reshape(9 * Cp, Cp)

    # Conv biases are intentionally NOT passed to the kernel: a per-channel constant shift is
    # removed exactly by InstanceNorm's mean subtraction, so they have no effect on the output.
    w1m, w2m = to_mat(w1), to_mat(w2)

    out = pl.pallas_call(
        resnet_block_kernel,
        out_shape=jax.ShapeDtypeStruct((B, H, W, Cp), jnp.float32),
        grid=(B,),
        in_specs=[
            pl.BlockSpec((1, H + 2, W, Cp), lambda b: (b, 0, 0, 0)),
            pl.BlockSpec((9 * Cp, Cp), lambda b: (0, 0)),
            pl.BlockSpec((9 * Cp, Cp), lambda b: (0, 0)),
        ],
        out_specs=pl.BlockSpec((1, H, W, Cp), lambda b: (b, 0, 0, 0)),
        compiler_params=pltpu.CompilerParams(
            dimension_semantics=("parallel",),
            vmem_limit_bytes=32 * 1024 * 1024,
        ),
    )(xp, w1m, w2m)

    out = out[:, :, :, :C]                                   # drop padded channels
    return jnp.transpose(out, (0, 3, 1, 2))                  # back to NCHW


def reference(x, w1, b1, w2, b2):
    """Pure-JAX NCHW reference mirroring the PyTorch module (biases included)."""
    def conv(a, w, b):
        a = jnp.pad(a, ((0, 0), (0, 0), (1, 1), (1, 1)), mode="reflect")
        y = lax.conv_general_dilated(a, w, (1, 1), "VALID",
                                     dimension_numbers=("NCHW", "OIHW", "NCHW"))
        return y + b.reshape(1, -1, 1, 1)

    def inorm(a, eps=1e-5):
        m = a.mean(axis=(2, 3), keepdims=True)
        v = ((a - m) ** 2).mean(axis=(2, 3), keepdims=True)
        return (a - m) / jnp.sqrt(v + eps)

    y = inorm(conv(x, w1, b1))
    y = jnp.where(y >= 0, y, 0.2 * y)
    y = inorm(conv(y, w2, b2))
    return x + y


if __name__ == "__main__":
    key = jax.random.PRNGKey(0)
    B, C, H, W = 2, 8, 16, 16
    k1, k2, k3, k4, k5 = jax.random.split(key, 5)

    x = jax.random.normal(k1, (B, C, H, W), jnp.float32)

    # Deterministic, PyTorch-style uniform init (kaiming-uniform-ish bounds).
    bound = 1.0 / jnp.sqrt(jnp.float32(C * 9))
    w1 = jax.random.uniform(k2, (C, C, 3, 3), jnp.float32, -bound, bound)
    b1 = jax.random.uniform(k3, (C,), jnp.float32, -bound, bound)
    w2 = jax.random.uniform(k4, (C, C, 3, 3), jnp.float32, -bound, bound)
    b2 = jax.random.uniform(k5, (C,), jnp.float32, -bound, bound)

    out = jax.block_until_ready(resnet_block(x, w1, b1, w2, b2))
    assert out.shape == (B, C, H, W)

    ref = reference(x, w1, b1, w2, b2)
    max_err = float(jnp.max(jnp.abs(out - ref)))
    assert jnp.allclose(out, ref, atol=1e-4, rtol=1e-4), f"max_err={max_err}"

    print("KERNEL_OK")
</pallas_src>

<mosaic_0001>
module attributes {stable_mosaic.version = 11 : i64} {
  func.func @resnet_block_kernel(%arg0: i32, %arg1: memref<1x18x16x128xf32, #tpu.memory_space<vmem>>, %arg2: memref<1152x128xf32, #tpu.memory_space<vmem>>, %arg3: memref<1152x128xf32, #tpu.memory_space<vmem>>, %arg4: memref<1x16x16x128xf32, #tpu.memory_space<vmem>>) attributes {dimension_semantics = [#tpu.dimension_semantics<parallel>], iteration_bounds = array<i64: 2>, scalar_prefetch = 0 : i64, scratch_operands = 0 : i64, tpu.core_type = #tpu.core_type<tc>, window_params = [{transform_indices = @transform_0, window_bounds = array<i64: 1, 18, 16, 128>}, {pipeline_mode = #tpu.pipeline_mode<synchronous>, transform_indices = @transform_1, window_bounds = array<i64: 1152, 128>}, {pipeline_mode = #tpu.pipeline_mode<synchronous>, transform_indices = @transform_2, window_bounds = array<i64: 1152, 128>}, {transform_indices = @transform_3, window_bounds = array<i64: 1, 16, 16, 128>}]} {
    %c0 = arith.constant 0 : index
    %c0_0 = arith.constant 0 : index
    %c0_1 = arith.constant 0 : index
    %c0_2 = arith.constant 0 : index
    %0 = vector.load %arg1[%c0, %c0_0, %c0_1, %c0_2] : memref<1x18x16x128xf32, #tpu.memory_space<vmem>>, vector<1x18x16x128xf32>
    %1 = vector.shape_cast %0 : vector<1x18x16x128xf32> to vector<18x16x128xf32>
    %c0_3 = arith.constant 0 : index
    %c0_4 = arith.constant 0 : index
    %2 = vector.load %arg2[%c0_3, %c0_4] : memref<1152x128xf32, #tpu.memory_space<vmem>>, vector<1152x128xf32>
    %3 = vector.extract_strided_slice %1 {offsets = [0, 1, 0], sizes = [18, 1, 128], strides = [1, 1, 1]} : vector<18x16x128xf32> to vector<18x1x128xf32>
    %4 = vector.extract_strided_slice %1 {offsets = [0, 0, 0], sizes = [18, 15, 128], strides = [1, 1, 1]} : vector<18x16x128xf32> to vector<18x15x128xf32>
    %5 = tpu.concatenate %3, %4 in 1 : vector<18x1x128xf32>, vector<18x15x128xf32> -> vector<18x16x128xf32>
    %6 = vector.extract_strided_slice %1 {offsets = [0, 1, 0], sizes = [18, 15, 128], strides = [1, 1, 1]} : vector<18x16x128xf32> to vector<18x15x128xf32>
    %7 = vector.extract_strided_slice %1 {offsets = [0, 14, 0], sizes = [18, 1, 128], strides = [1, 1, 1]} : vector<18x16x128xf32> to vector<18x1x128xf32>
    %8 = tpu.concatenate %6, %7 in 1 : vector<18x15x128xf32>, vector<18x1x128xf32> -> vector<18x16x128xf32>
    %9 = vector.extract_strided_slice %5 {offsets = [0, 0, 0], sizes = [16, 16, 128], strides = [1, 1, 1]} : vector<18x16x128xf32> to vector<16x16x128xf32>
    %10 = vector.shape_cast %9 : vector<16x16x128xf32> to vector<256x128xf32>
    %11 = vector.extract_strided_slice %1 {offsets = [0, 0, 0], sizes = [16, 16, 128], strides = [1, 1, 1]} : vector<18x16x128xf32> to vector<16x16x128xf32>
    %12 = vector.shape_cast %11 : vector<16x16x128xf32> to vector<256x128xf32>
    %13 = vector.extract_strided_slice %8 {offsets = [0, 0, 0], sizes = [16, 16, 128], strides = [1, 1, 1]} : vector<18x16x128xf32> to vector<16x16x128xf32>
    %14 = vector.shape_cast %13 : vector<16x16x128xf32> to vector<256x128xf32>
    %15 = vector.extract_strided_slice %5 {offsets = [1, 0, 0], sizes = [16, 16, 128], strides = [1, 1, 1]} : vector<18x16x128xf32> to vector<16x16x128xf32>
    %16 = vector.shape_cast %15 : vector<16x16x128xf32> to vector<256x128xf32>
    %17 = vector.extract_strided_slice %1 {offsets = [1, 0, 0], sizes = [16, 16, 128], strides = [1, 1, 1]} : vector<18x16x128xf32> to vector<16x16x128xf32>
    %18 = vector.shape_cast %17 : vector<16x16x128xf32> to vector<256x128xf32>
    %19 = vector.extract_strided_slice %8 {offsets = [1, 0, 0], sizes = [16, 16, 128], strides = [1, 1, 1]} : vector<18x16x128xf32> to vector<16x16x128xf32>
    %20 = vector.shape_cast %19 : vector<16x16x128xf32> to vector<256x128xf32>
    %21 = vector.extract_strided_slice %5 {offsets = [2, 0, 0], sizes = [16, 16, 128], strides = [1, 1, 1]} : vector<18x16x128xf32> to vector<16x16x128xf32>
    %22 = vector.shape_cast %21 : vector<16x16x128xf32> to vector<256x128xf32>
    %23 = vector.extract_strided_slice %1 {offsets = [2, 0, 0], sizes = [16, 16, 128], strides = [1, 1, 1]} : vector<18x16x128xf32> to vector<16x16x128xf32>
    %24 = vector.shape_cast %23 : vector<16x16x128xf32> to vector<256x128xf32>
    %25 = vector.extract_strided_slice %8 {offsets = [2, 0, 0], sizes = [16, 16, 128], strides = [1, 1, 1]} : vector<18x16x128xf32> to vector<16x16x128xf32>
    %26 = vector.shape_cast %25 : vector<16x16x128xf32> to vector<256x128xf32>
    %27 = tpu.concatenate %10, %12, %14, %16, %18, %20, %22, %24, %26 in 1 : vector<256x128xf32>, vector<256x128xf32>, vector<256x128xf32>, vector<256x128xf32>, vector<256x128xf32>, vector<256x128xf32>, vector<256x128xf32>, vector<256x128xf32>, vector<256x128xf32> -> vector<256x1152xf32>
    %cst = arith.constant dense<0.000000e+00> : vector<256x128xf32>
    %28 = tpu.matmul %27, %2, %cst {dimension_numbers = #tpu.dot_dimension_numbers<[1], [0], [0], [1], [0, 0, 1, 1], [], []>} : vector<256x1152xf32>, vector<1152x128xf32>, vector<256x128xf32> -> vector<256x128xf32>
    %cst_5 = arith.constant dense<0.000000e+00> : vector<128xf32>
    %29 = vector.multi_reduction <add>, %28, %cst_5 [0] : vector<256x128xf32> to vector<128xf32>
    %30 = vector.shape_cast %29 : vector<128xf32> to vector<1x128xf32>
    %cst_6 = arith.constant 3.906250e-03 : f32
    %31 = vector.broadcast %cst_6 : f32 to vector<1x128xf32>
    %32 = arith.mulf %30, %31 : vector<1x128xf32>
    %33 = arith.mulf %28, %28 : vector<256x128xf32>
    %cst_7 = arith.constant dense<0.000000e+00> : vector<128xf32>
    %34 = vector.multi_reduction <add>, %33, %cst_7 [0] : vector<256x128xf32> to vector<128xf32>
    %35 = vector.shape_cast %34 : vector<128xf32> to vector<1x128xf32>
    %cst_8 = arith.constant 3.906250e-03 : f32
    %36 = vector.broadcast %cst_8 : f32 to vector<1x128xf32>
    %37 = arith.mulf %35, %36 : vector<1x128xf32>
    %38 = arith.mulf %32, %32 : vector<1x128xf32>
    %39 = arith.subf %37, %38 : vector<1x128xf32>
    %cst_9 = arith.constant 0.000000e+00 : f32
    %40 = vector.broadcast %cst_9 : f32 to vector<1x128xf32>
    %41 = arith.maximumf %39, %40 : vector<1x128xf32>
    %cst_10 = arith.constant 9.99999974E-6 : f32
    %42 = vector.broadcast %cst_10 : f32 to vector<1x128xf32>
    %43 = arith.addf %41, %42 : vector<1x128xf32>
    %44 = math.rsqrt %43 : vector<1x128xf32>
    %45 = vector.broadcast %32 : vector<1x128xf32> to vector<256x128xf32>
    %46 = arith.subf %28, %45 : vector<256x128xf32>
    %cst_11 = arith.constant 0.000000e+00 : f32
    %47 = vector.broadcast %cst_11 : f32 to vector<256x128xf32>
    %48 = arith.cmpf oge, %46, %47 : vector<256x128xf32>
    %cst_12 = arith.constant 2.000000e-01 : f32
    %49 = vector.broadcast %cst_12 : f32 to vector<1x128xf32>
    %50 = arith.mulf %49, %44 : vector<1x128xf32>
    %51 = vector.shape_cast %44 : vector<1x128xf32> to vector<1x128xf32>
    %52 = vector.broadcast %51 : vector<1x128xf32> to vector<256x128xf32>
    %53 = vector.shape_cast %50 : vector<1x128xf32> to vector<1x128xf32>
    %54 = vector.broadcast %53 : vector<1x128xf32> to vector<256x128xf32>
    %55 = arith.select %48, %52, %54 : vector<256x128xi1>, vector<256x128xf32>
    %56 = arith.mulf %46, %55 : vector<256x128xf32>
    %57 = vector.shape_cast %56 : vector<256x128xf32> to vector<16x16x128xf32>
    %58 = vector.extract_strided_slice %57 {offsets = [1, 0, 0], sizes = [1, 16, 128], strides = [1, 1, 1]} : vector<16x16x128xf32> to vector<1x16x128xf32>
    %59 = vector.extract_strided_slice %57 {offsets = [14, 0, 0], sizes = [1, 16, 128], strides = [1, 1, 1]} : vector<16x16x128xf32> to vector<1x16x128xf32>
    %60 = tpu.concatenate %58, %57, %59 in 0 : vector<1x16x128xf32>, vector<16x16x128xf32>, vector<1x16x128xf32> -> vector<18x16x128xf32>
    %c0_13 = arith.constant 0 : index
    %c0_14 = arith.constant 0 : index
    %61 = vector.load %arg3[%c0_13, %c0_14] : memref<1152x128xf32, #tpu.memory_space<vmem>>, vector<1152x128xf32>
    %62 = vector.extract_strided_slice %60 {offsets = [0, 1, 0], sizes = [18, 1, 128], strides = [1, 1, 1]} : vector<18x16x128xf32> to vector<18x1x128xf32>
    %63 = vector.extract_strided_slice %60 {offsets = [0, 0, 0], sizes = [18, 15, 128], strides = [1, 1, 1]} : vector<18x16x128xf32> to vector<18x15x128xf32>
    %64 = tpu.concatenate %62, %63 in 1 : vector<18x1x128xf32>, vector<18x15x128xf32> -> vector<18x16x128xf32>
    %65 = vector.extract_strided_slice %60 {offsets = [0, 1, 0], sizes = [18, 15, 128], strides = [1, 1, 1]} : vector<18x16x128xf32> to vector<18x15x128xf32>
    %66 = vector.extract_strided_slice %60 {offsets = [0, 14, 0], sizes = [18, 1, 128], strides = [1, 1, 1]} : vector<18x16x128xf32> to vector<18x1x128xf32>
    %67 = tpu.concatenate %65, %66 in 1 : vector<18x15x128xf32>, vector<18x1x128xf32> -> vector<18x16x128xf32>
    %68 = vector.extract_strided_slice %64 {offsets = [0, 0, 0], sizes = [16, 16, 128], strides = [1, 1, 1]} : vector<18x16x128xf32> to vector<16x16x128xf32>
    %69 = vector.shape_cast %68 : vector<16x16x128xf32> to vector<256x128xf32>
    %70 = vector.extract_strided_slice %60 {offsets = [0, 0, 0], sizes = [16, 16, 128], strides = [1, 1, 1]} : vector<18x16x128xf32> to vector<16x16x128xf32>
    %71 = vector.shape_cast %70 : vector<16x16x128xf32> to vector<256x128xf32>
    %72 = vector.extract_strided_slice %67 {offsets = [0, 0, 0], sizes = [16, 16, 128], strides = [1, 1, 1]} : vector<18x16x128xf32> to vector<16x16x128xf32>
    %73 = vector.shape_cast %72 : vector<16x16x128xf32> to vector<256x128xf32>
    %74 = vector.extract_strided_slice %64 {offsets = [1, 0, 0], sizes = [16, 16, 128], strides = [1, 1, 1]} : vector<18x16x128xf32> to vector<16x16x128xf32>
    %75 = vector.shape_cast %74 : vector<16x16x128xf32> to vector<256x128xf32>
    %76 = vector.extract_strided_slice %60 {offsets = [1, 0, 0], sizes = [16, 16, 128], strides = [1, 1, 1]} : vector<18x16x128xf32> to vector<16x16x128xf32>
    %77 = vector.shape_cast %76 : vector<16x16x128xf32> to vector<256x128xf32>
    %78 = vector.extract_strided_slice %67 {offsets = [1, 0, 0], sizes = [16, 16, 128], strides = [1, 1, 1]} : vector<18x16x128xf32> to vector<16x16x128xf32>
    %79 = vector.shape_cast %78 : vector<16x16x128xf32> to vector<256x128xf32>
    %80 = vector.extract_strided_slice %64 {offsets = [2, 0, 0], sizes = [16, 16, 128], strides = [1, 1, 1]} : vector<18x16x128xf32> to vector<16x16x128xf32>
    %81 = vector.shape_cast %80 : vector<16x16x128xf32> to vector<256x128xf32>
    %82 = vector.extract_strided_slice %60 {offsets = [2, 0, 0], sizes = [16, 16, 128], strides = [1, 1, 1]} : vector<18x16x128xf32> to vector<16x16x128xf32>
    %83 = vector.shape_cast %82 : vector<16x16x128xf32> to vector<256x128xf32>
    %84 = vector.extract_strided_slice %67 {offsets = [2, 0, 0], sizes = [16, 16, 128], strides = [1, 1, 1]} : vector<18x16x128xf32> to vector<16x16x128xf32>
    %85 = vector.shape_cast %84 : vector<16x16x128xf32> to vector<256x128xf32>
    %86 = tpu.concatenate %69, %71, %73, %75, %77, %79, %81, %83, %85 in 1 : vector<256x128xf32>, vector<256x128xf32>, vector<256x128xf32>, vector<256x128xf32>, vector<256x128xf32>, vector<256x128xf32>, vector<256x128xf32>, vector<256x128xf32>, vector<256x128xf32> -> vector<256x1152xf32>
    %cst_15 = arith.constant dense<0.000000e+00> : vector<256x128xf32>
    %87 = tpu.matmul %86, %61, %cst_15 {dimension_numbers = #tpu.dot_dimension_numbers<[1], [0], [0], [1], [0, 0, 1, 1], [], []>} : vector<256x1152xf32>, vector<1152x128xf32>, vector<256x128xf32> -> vector<256x128xf32>
    %cst_16 = arith.constant dense<0.000000e+00> : vector<128xf32>
    %88 = vector.multi_reduction <add>, %87, %cst_16 [0] : vector<256x128xf32> to vector<128xf32>
    %89 = vector.shape_cast %88 : vector<128xf32> to vector<1x128xf32>
    %cst_17 = arith.constant 3.906250e-03 : f32
    %90 = vector.broadcast %cst_17 : f32 to vector<1x128xf32>
    %91 = arith.mulf %89, %90 : vector<1x128xf32>
    %92 = arith.mulf %87, %87 : vector<256x128xf32>
    %cst_18 = arith.constant dense<0.000000e+00> : vector<128xf32>
    %93 = vector.multi_reduction <add>, %92, %cst_18 [0] : vector<256x128xf32> to vector<128xf32>
    %94 = vector.shape_cast %93 : vector<128xf32> to vector<1x128xf32>
    %cst_19 = arith.constant 3.906250e-03 : f32
    %95 = vector.broadcast %cst_19 : f32 to vector<1x128xf32>
    %96 = arith.mulf %94, %95 : vector<1x128xf32>
    %97 = arith.mulf %91, %91 : vector<1x128xf32>
    %98 = arith.subf %96, %97 : vector<1x128xf32>
    %cst_20 = arith.constant 0.000000e+00 : f32
    %99 = vector.broadcast %cst_20 : f32 to vector<1x128xf32>
    %100 = arith.maximumf %98, %99 : vector<1x128xf32>
    %cst_21 = arith.constant 9.99999974E-6 : f32
    %101 = vector.broadcast %cst_21 : f32 to vector<1x128xf32>
    %102 = arith.addf %100, %101 : vector<1x128xf32>
    %103 = math.rsqrt %102 : vector<1x128xf32>
    %104 = vector.broadcast %91 : vector<1x128xf32> to vector<256x128xf32>
    %105 = arith.subf %87, %104 : vector<256x128xf32>
    %106 = vector.broadcast %103 : vector<1x128xf32> to vector<256x128xf32>
    %107 = arith.mulf %105, %106 : vector<256x128xf32>
    %108 = vector.extract_strided_slice %1 {offsets = [1, 0, 0], sizes = [16, 16, 128], strides = [1, 1, 1]} : vector<18x16x128xf32> to vector<16x16x128xf32>
    %109 = vector.shape_cast %107 : vector<256x128xf32> to vector<16x16x128xf32>
    %110 = arith.addf %108, %109 : vector<16x16x128xf32>
    %c0_22 = arith.constant 0 : index
    %c0_23 = arith.constant 0 : index
    %c0_24 = arith.constant 0 : index
    %c0_25 = arith.constant 0 : index
    %111 = vector.load %arg4[%c0_22, %c0_23, %c0_24, %c0_25] : memref<1x16x16x128xf32, #tpu.memory_space<vmem>>, vector<1x16x16x128xf32>
    %112 = vector.shape_cast %111 : vector<1x16x16x128xf32> to vector<16x16x128xf32>
    %113 = vector.shape_cast %110 : vector<16x16x128xf32> to vector<1x16x16x128xf32>
    tpu.vector_store %arg4[%c0_22, %c0_23, %c0_24, %c0_25], %113 {strides = array<i32>} : memref<1x16x16x128xf32, #tpu.memory_space<vmem>>, vector<1x16x16x128xf32>,
    return
  }
  func.func @transform_0(%arg0: i32) -> (i32, i32, i32, i32) {
    %c0_i32 = arith.constant 0 : i32
    %c0_i32_0 = arith.constant 0 : i32
    %c0_i32_1 = arith.constant 0 : i32
    %c0_i32_2 = arith.constant 0 : i32
    return %arg0, %c0_i32, %c0_i32_0, %c0_i32_1 : i32, i32, i32, i32
  }
  func.func @transform_1(%arg0: i32) -> (i32, i32) {
    %c0_i32 = arith.constant 0 : i32
    %c0_i32_0 = arith.constant 0 : i32
    %c0_i32_1 = arith.constant 0 : i32
    return %c0_i32, %c0_i32_0 : i32, i32
  }
  func.func @transform_2(%arg0: i32) -> (i32, i32) {
    %c0_i32 = arith.constant 0 : i32
    %c0_i32_0 = arith.constant 0 : i32
    %c0_i32_1 = arith.constant 0 : i32
    return %c0_i32, %c0_i32_0 : i32, i32
  }
  func.func @transform_3(%arg0: i32) -> (i32, i32, i32, i32) {
    %c0_i32 = arith.constant 0 : i32
    %c0_i32_0 = arith.constant 0 : i32
    %c0_i32_1 = arith.constant 0 : i32
    %c0_i32_2 = arith.constant 0 : i32
    return %arg0, %c0_i32, %c0_i32_0, %c0_i32_1 : i32, i32, i32, i32
  }
}

</mosaic_0001>

<llo_original>
// kernel: tpu_custom_call.1
$region0: #{tpu_custom_call.1}
  #allocation0 [shape = 'u32[]', space=smem, size = 0x4, offset = 0x4, fixed_abs, tag = 'smem constant byte address 0x4 - core index']
  #allocation1 [shape = 'u32[144,128]{1,0:T(1,128)}', space=vmem, size = 0x12000, scoped, tag = 'internal scratch']
  %s0 = inlined_call_operand.hbm [shape: f32[2,18,16,128], index: 0, kind: input, shape index: {}]
  %s1 = inlined_call_operand.hbm [shape: f32[1152,128], index: 1, kind: input, shape index: {}]
  %s2 = inlined_call_operand.hbm [shape: f32[1152,128], index: 2, kind: input, shape index: {}]
  %s3 = inlined_call_operand.hbm [shape: f32[2,16,16,128], index: 3, kind: output, shape index: {}]
  %s4 = sld [smem:[#allocation0]]
  $region57: #{tpu_custom_call.1} parent=0
    _
  %s6 = ssub.s32 1, %s4
  %s7 = scalar_select 0, %s6, %s4
  $region1: #{tpu_custom_call.1} parent=0
    #allocation2 [shape = 'u8[294912]{0}', space=vmem, size = 0x48000, scoped, tag = 'input window, operand 0']
    #allocation3 [shape = 's32[2]{0}', space=sflag, size = 0x8, scoped, tag = 'scoped memory for tpu_custom_call.1']
    #allocation4 [shape = 's32[2]{0}', space=sflag, size = 0x8, scoped, tag = 'scoped memory for tpu_custom_call.1']
    #allocation5 [shape = 'u8[589824]{0}', space=vmem, size = 0x90000, scoped, tag = 'input window, operand 1, single buffered']
    #allocation6 [shape = 's32[1]{0}', space=sflag, size = 0x4, scoped, tag = 'scoped memory for tpu_custom_call.1']
    #allocation7 [shape = 'u8[589824]{0}', space=vmem, size = 0x90000, scoped, tag = 'input window, operand 2, single buffered']
    #allocation8 [shape = 'u8[262144]{0}', space=vmem, size = 0x40000, scoped, tag = 'output window, operand 0']
    %8 = vsyncpa [#allocation3], 0
    %s9 = scalar_lea.sflag [#allocation3], 1
    %10 = vsyncpa %s9, 0
    %11 = vsyncpa [#allocation6], 0
    %12 = vsyncpa [#allocation4], 0
    %s13 = scalar_lea.sflag [#allocation4], 1
    %14 = vsyncpa %s13, 0
    loop: start=0, step=1, limit=4
    $region2: #{tpu_custom_call.1} parent=1 // loop_pre_header
      _
    $region3: #{tpu_custom_call.1} parent=1 // loop_header
      %s16 = sphi 0, %s20
      %p17 = scmp.ge.s32.totalorder %s16, 4
      %s26 = sphi 0, %s28
      %s29 = sphi 0, %s26
      %s30 = sphi 0, %s29
      %s46 = sphi 0, %s30
      %s50 = sphi 0, %s50
      %s52 = sphi 0, %s50
      %s53 = sphi 0, %s52
      %s67 = sphi 0, %s53
      %s71 = sphi 0, %s71
      %s73 = sphi 0, %s71
      %s74 = sphi 0, %s73
      %s88 = sphi 0, %s74
      %s94 = sphi 0, %s96
      %s97 = sphi 0, %s94
      %s98 = sphi 0, %s97
      %s114 = sphi 0, %s98
    $region4: #{tpu_custom_call.1} parent=1 // loop_header_branch
      %19 = sbr.rel (%p17) target = $region8
    $region5: #{tpu_custom_call.1} parent=1 // loop_body
      %s21 = ssub.s32 %s16, 1
      %s22 = ssub.s32 %s16, 2
      %s23 = sadd.s32 %s16, 1
      %s24 = ssub.s32 %s16, %s23
      %p25 = scmp.eq.s32.totalorder %s24, 0
      %s27 = sadd.s32 %s26, 1
      %s28 = scalar_select %p25, %s26, %s27
      %p31 = pneg %p25
      %p32 = scmp.eq.s32.totalorder %s16, 1
      %p33 = por %p31, %p32
      %p34 = scmp.ne.s32.totalorder %s26, %s29
      %p35 = scmp.eq.s32.totalorder %s16, 0
      %p36 = por %p34, %p35
      %p37 = scmp.ne.s32.totalorder %s26, %s29
      %p38 = scmp.eq.s32.totalorder %s21, 1
      %p39 = por %p37, %p38
      %p40 = scmp.ne.s32.totalorder %s29, %s30
      %p41 = scmp.eq.s32.totalorder %s21, 0
      %p42 = por %p40, %p41
      %p43 = scmp.ne.s32.totalorder %s29, %s30
      %p44 = scmp.eq.s32.totalorder %s22, 1
      %p45 = por %p43, %p44
      %p47 = scmp.ne.s32.totalorder %s30, %s46
      %p48 = scmp.eq.s32.totalorder %s22, 0
      %p49 = por %p47, %p48
      %s51 = sadd.s32 %s50, 1
      %p54 = scmp.eq.s32.totalorder %s16, 1
      %p55 = scmp.ne.s32.totalorder %s50, %s52
      %p56 = scmp.eq.s32.totalorder %s16, 0
      %p57 = por %p55, %p56
      %p58 = scmp.ne.s32.totalorder %s50, %s52
      %p59 = scmp.eq.s32.totalorder %s21, 1
      %p60 = por %p58, %p59
      %p61 = scmp.ne.s32.totalorder %s52, %s53
      %p62 = scmp.eq.s32.totalorder %s21, 0
      %p63 = por %p61, %p62
      %p64 = scmp.ne.s32.totalorder %s52, %s53
      %p65 = scmp.eq.s32.totalorder %s22, 1
      %p66 = por %p64, %p65
      %p68 = scmp.ne.s32.totalorder %s53, %s67
      %p69 = scmp.eq.s32.totalorder %s22, 0
      %p70 = por %p68, %p69
      %s72 = sadd.s32 %s71, 1
      %p75 = scmp.eq.s32.totalorder %s16, 1
      %p76 = scmp.ne.s32.totalorder %s71, %s73
      %p77 = scmp.eq.s32.totalorder %s16, 0
      %p78 = por %p76, %p77
      %p79 = scmp.ne.s32.totalorder %s71, %s73
      %p80 = scmp.eq.s32.totalorder %s21, 1
      %p81 = por %p79, %p80
      %p82 = scmp.ne.s32.totalorder %s73, %s74
      %p83 = scmp.eq.s32.totalorder %s21, 0
      %p84 = por %p82, %p83
      %p85 = scmp.ne.s32.totalorder %s73, %s74
      %p86 = scmp.eq.s32.totalorder %s22, 1
      %p87 = por %p85, %p86
      %p89 = scmp.ne.s32.totalorder %s74, %s88
      %p90 = scmp.eq.s32.totalorder %s22, 0
      %p91 = por %p89, %p90
      %s92 = ssub.s32 %s16, %s23
      %p93 = scmp.eq.s32.totalorder %s92, 0
      %s95 = sadd.s32 %s94, 1
      %s96 = scalar_select %p93, %s94, %s95
      %p99 = pneg %p93
      %p100 = scmp.eq.s32.totalorder %s16, 1
      %p101 = por %p99, %p100
      %p102 = scmp.ne.s32.totalorder %s94, %s97
      %p103 = scmp.eq.s32.totalorder %s16, 0
      %p104 = por %p102, %p103
      %p105 = scmp.ne.s32.totalorder %s94, %s97
      %p106 = scmp.eq.s32.totalorder %s21, 1
      %p107 = por %p105, %p106
      %p108 = scmp.ne.s32.totalorder %s97, %s98
      %p109 = scmp.eq.s32.totalorder %s21, 0
      %p110 = por %p108, %p109
      %p111 = scmp.ne.s32.totalorder %s97, %s98
      %p112 = scmp.eq.s32.totalorder %s22, 1
      %p113 = por %p111, %p112
      %p115 = scmp.ne.s32.totalorder %s98, %s114
      %p116 = scmp.eq.s32.totalorder %s22, 0
      %p117 = por %p115, %p116
      %p118 = scmp.le.s32.totalorder 1, %s16
      %p119 = scmp.lt.s32.totalorder %s16, 3
      %p120 = pnand %p118, %p119
      %p121 = pneg %p120
      // Predicated region
      $region9: #{tpu_custom_call.1} parent=5 // pred_check
        _
      $region10: #{tpu_custom_call.1} parent=5 // pred_check_branch
        %123 = sbr.rel (%p120) target = $region12
      $region11: #{tpu_custom_call.1} parent=5 // pred_region
        %s124 = ssub.s32 %s16, 1
        // Predicated region
        $region13: #{tpu_custom_call.1} parent=11 // pred_check
          %p125 = pneg %p63
        $region14: #{tpu_custom_call.1} parent=11 // pred_check_branch
          %127 = sbr.rel (%p125) target = $region16
        $region15: #{tpu_custom_call.1} parent=11 // pred_region
          %s129 = ssub.s32 18432, 18432
          %130 = vsyncadd [#allocation6], %s129
          %s131 = sshll.u32 [#allocation5], 4
          %s132 = int_to_ptr.vmem [resolvable:$true] %s131
          %137 = dma.hbm_to_vmem [thread:$0]  %s1, 18432, %s132, [#allocation6], 128, 128, 8
        $region16: #{tpu_custom_call.1} parent=11 // pred_fallthru
          _
        // Predicated region
        $region17: #{tpu_custom_call.1} parent=11 // pred_check
          %p138 = pneg %p84
        $region18: #{tpu_custom_call.1} parent=11 // pred_check_branch
          %140 = sbr.rel (%p138) target = $region20
        $region19: #{tpu_custom_call.1} parent=11 // pred_region
          %s142 = ssub.s32 18432, 18432
          %143 = vsyncadd [#allocation6], %s142
          %s144 = sshll.u32 [#allocation7], 4
          %s145 = int_to_ptr.vmem [resolvable:$true] %s144
          %150 = dma.hbm_to_vmem [thread:$0]  %s2, 18432, %s145, [#allocation6], 128, 128, 8
        $region20: #{tpu_custom_call.1} parent=11 // pred_fallthru
          _
      $region12: #{tpu_custom_call.1} parent=5 // pred_fallthru
        _
      %p151 = scmp.lt.s32.totalorder %s16, 2
      // Predicated region
      $region21: #{tpu_custom_call.1} parent=5 // pred_check
        %p152 = pneg %p151
      $region22: #{tpu_custom_call.1} parent=5 // pred_check_branch
        %154 = sbr.rel (%p152) target = $region24
      $region23: #{tpu_custom_call.1} parent=5 // pred_region
        // Predicated region
        $region25: #{tpu_custom_call.1} parent=23 // pred_check
          %p155 = pneg %p36
        $region26: #{tpu_custom_call.1} parent=23 // pred_check_branch
          %157 = sbr.rel (%p155) target = $region28
        $region27: #{tpu_custom_call.1} parent=23 // pred_region
          %s158 = sand.u32 %s26, 1
          %s159 = scalar_lea.sflag [#allocation3], %s158
          %s160 = sand.u32 %s26, 1
          %s161 = smul.addr %s160, 288
          %s162 = scalar_lea.vmem [#allocation2], %s161
          %s164 = ssub.s32 4608, 4608
          %165 = vsyncadd %s159, %s164
          %s166 = smul.addr %s16, 36
          %s167 = smul.addr %s166, 128
          %s168 = scalar_lea.hbm %s0, %s167
          %s169 = sshll.u32 %s162, 4
          %s170 = int_to_ptr.vmem [resolvable:$true] %s169
          %175 = dma.hbm_to_vmem [thread:$0]  %s168, 4608, %s170, %s159, 128, 128, 8
        $region28: #{tpu_custom_call.1} parent=23 // pred_fallthru
          _
      $region24: #{tpu_custom_call.1} parent=5 // pred_fallthru
        _
      %p176 = scmp.le.s32.totalorder 1, %s16
      %p177 = scmp.lt.s32.totalorder %s16, 3
      %p178 = pnand %p176, %p177
      %p179 = pneg %p178
      // Predicated region
      $region29: #{tpu_custom_call.1} parent=5 // pred_check
        _
      $region30: #{tpu_custom_call.1} parent=5 // pred_check_branch
        %181 = sbr.rel (%p178) target = $region32
      $region31: #{tpu_custom_call.1} parent=5 // pred_region
        %s182 = ssub.s32 %s16, 1
        %s183 = sand.u32 %s29, 1
        %s184 = scalar_lea.sflag [#allocation3], %s183
        %s185 = sand.u32 %s29, 1
        %s186 = smul.addr %s185, 288
        %s187 = scalar_lea.vmem [#allocation2], %s186
        // Predicated region
        $region33: #{tpu_custom_call.1} parent=31 // pred_check
          %p188 = pneg %p42
        $region34: #{tpu_custom_call.1} parent=31 // pred_check_branch
          %190 = sbr.rel (%p188) target = $region36
        $region35: #{tpu_custom_call.1} parent=31 // pred_region
          %191 = dma.done %s184, 4608
        $region36: #{tpu_custom_call.1} parent=31 // pred_fallthru
          _
        // Predicated region
        $region37: #{tpu_custom_call.1} parent=31 // pred_check
          %p192 = pneg %p63
        $region38: #{tpu_custom_call.1} parent=31 // pred_check_branch
          %194 = sbr.rel (%p192) target = $region40
        $region39: #{tpu_custom_call.1} parent=31 // pred_region
          %195 = dma.done [#allocation6], 18432
        $region40: #{tpu_custom_call.1} parent=31 // pred_fallthru
          _
        // Predicated region
        $region41: #{tpu_custom_call.1} parent=31 // pred_check
          %p196 = pneg %p84
        $region42: #{tpu_custom_call.1} parent=31 // pred_check_branch
          %198 = sbr.rel (%p196) target = $region44
        $region43: #{tpu_custom_call.1} parent=31 // pred_region
          %199 = dma.done [#allocation6], 18432
        $region44: #{tpu_custom_call.1} parent=31 // pred_fallthru
          _
        %s200 = sand.u32 %s29, 1
        %s201 = scalar_lea.sflag [#allocation3], %s200
        %s202 = sand.u32 %s29, 1
        %s203 = smul.addr %s202, 288
        %s204 = scalar_lea.vmem [#allocation2], %s203
        %p205 = pneg %p42
        %p206 = pneg %p39
        %p207 = pneg %p63
        %p208 = pneg %p60
        %p209 = pneg %p84
        %p210 = pneg %p81
        %p211 = pneg %p110
        %p212 = pneg %p107
        %s213 = sand.u32 %s97, 1
        %s214 = scalar_lea.sflag [#allocation4], %s213
        %s215 = sand.u32 %s97, 1
        %s216 = smul.addr %s215, 256
        %s217 = scalar_lea.vmem [#allocation8], %s216
        %v218 = vld [vmem:[%s187] sm:$0xff]
        %v219 = vld [vmem:[%s187 + $0x8] sm:$0xff]
        %v220 = vld [vmem:[%s187 + $0x10] sm:$0xff]
        %v221 = vld [vmem:[%s187 + $0x18] sm:$0xff]
        %v222 = vld [vmem:[%s187 + $0x20] sm:$0xff]
        %v223 = vld [vmem:[%s187 + $0x28] sm:$0xff]
        %v224 = vld [vmem:[%s187 + $0x30] sm:$0xff]
        %v225 = vld [vmem:[%s187 + $0x38] sm:$0xff]
        %v226 = vld [vmem:[%s187 + $0x40] sm:$0xff]
        %v227 = vld [vmem:[%s187 + $0x48] sm:$0xff]
        %v228 = vld [vmem:[%s187 + $0x50] sm:$0xff]
        %v229 = vld [vmem:[%s187 + $0x58] sm:$0xff]
        %v230 = vld [vmem:[%s187 + $0x60] sm:$0xff]
        %v231 = vld [vmem:[%s187 + $0x68] sm:$0xff]
        %v232 = vld [vmem:[%s187 + $0x70] sm:$0xff]
        %v233 = vld [vmem:[%s187 + $0x78] sm:$0xff]
        %v234 = vld [vmem:[%s187 + $0x80] sm:$0xff]
        %v235 = vld [vmem:[%s187 + $0x88] sm:$0xff]
        %v236 = vld [vmem:[%s187 + $0x90] sm:$0xff]
        %v237 = vld [vmem:[%s187 + $0x98] sm:$0xff]
        %v238 = vld [vmem:[%s187 + $0xa0] sm:$0xff]
        %v239 = vld [vmem:[%s187 + $0xa8] sm:$0xff]
        %v240 = vld [vmem:[%s187 + $0xb0] sm:$0xff]
        %v241 = vld [vmem:[%s187 + $0xb8] sm:$0xff]
        %v242 = vld [vmem:[%s187 + $0xc0] sm:$0xff]
        %v243 = vld [vmem:[%s187 + $0xc8] sm:$0xff]
        %v244 = vld [vmem:[%s187 + $0xd0] sm:$0xff]
        %v245 = vld [vmem:[%s187 + $0xd8] sm:$0xff]
        %v246 = vld [vmem:[%s187 + $0xe0] sm:$0xff]
        %v247 = vld [vmem:[%s187 + $0xe8] sm:$0xff]
        %v248 = vld [vmem:[%s187 + $0xf0] sm:$0xff]
        %v249 = vld [vmem:[%s187 + $0xf8] sm:$0xff]
        %v250 = vld [vmem:[%s187 + $0x100] sm:$0xff]
        %v251 = vld [vmem:[%s187 + $0x108] sm:$0xff]
        %v252 = vld [vmem:[%s187 + $0x110] sm:$0xff]
        %v253 = vld [vmem:[%s187 + $0x118] sm:$0xff]
        %v254 = vld [vmem:[#allocation5] sm:$0xff]
        %v255 = vld [vmem:[#allocation5 + $0x8] sm:$0xff]
        %v256 = vld [vmem:[#allocation5 + $0x10] sm:$0xff]
        %v257 = vld [vmem:[#allocation5 + $0x18] sm:$0xff]
        %v258 = vld [vmem:[#allocation5 + $0x20] sm:$0xff]
        %v259 = vld [vmem:[#allocation5 + $0x28] sm:$0xff]
        %v260 = vld [vmem:[#allocation5 + $0x30] sm:$0xff]
        %v261 = vld [vmem:[#allocation5 + $0x38] sm:$0xff]
        %v262 = vld [vmem:[#allocation5 + $0x40] sm:$0xff]
        %v263 = vld [vmem:[#allocation5 + $0x48] sm:$0xff]
        %v264 = vld [vmem:[#allocation5 + $0x50] sm:$0xff]
        %v265 = vld [vmem:[#allocation5 + $0x58] sm:$0xff]
        %v266 = vld [vmem:[#allocation5 + $0x60] sm:$0xff]
        %v267 = vld [vmem:[#allocation5 + $0x68] sm:$0xff]
        %v268 = vld [vmem:[#allocation5 + $0x70] sm:$0xff]
        %v269 = vld [vmem:[#allocation5 + $0x78] sm:$0xff]
        %v270 = vld [vmem:[#allocation5 + $0x80] sm:$0xff]
        %v271 = vld [vmem:[#allocation5 + $0x88] sm:$0xff]
        %v272 = vld [vmem:[#allocation5 + $0x90] sm:$0xff]
        %v273 = vld [vmem:[#allocation5 + $0x98] sm:$0xff]
        %v274 = vld [vmem:[#allocation5 + $0xa0] sm:$0xff]
        %v275 = vld [vmem:[#allocation5 + $0xa8] sm:$0xff]
        %v276 = vld [vmem:[#allocation5 + $0xb0] sm:$0xff]
        %v277 = vld [vmem:[#allocation5 + $0xb8] sm:$0xff]
        %v278 = vld [vmem:[#allocation5 + $0xc0] sm:$0xff]
        %v279 = vld [vmem:[#allocation5 + $0xc8] sm:$0xff]
        %v280 = vld [vmem:[#allocation5 + $0xd0] sm:$0xff]
        %v281 = vld [vmem:[#allocation5 + $0xd8] sm:$0xff]
        %v282 = vld [vmem:[#allocation5 + $0xe0] sm:$0xff]
        %v283 = vld [vmem:[#allocation5 + $0xe8] sm:$0xff]
        %v284 = vld [vmem:[#allocation5 + $0xf0] sm:$0xff]
        %v285 = vld [vmem:[#allocation5 + $0xf8] sm:$0xff]
        %v286 = vld [vmem:[#allocation5 + $0x100] sm:$0xff]
        %v287 = vld [vmem:[#allocation5 + $0x108] sm:$0xff]
        %v288 = vld [vmem:[#allocation5 + $0x110] sm:$0xff]
        %v289 = vld [vmem:[#allocation5 + $0x118] sm:$0xff]
        %v290 = vld [vmem:[#allocation5 + $0x120] sm:$0xff]
        %v291 = vld [vmem:[#allocation5 + $0x128] sm:$0xff]
        %v292 = vld [vmem:[#allocation5 + $0x130] sm:$0xff]
        %v293 = vld [vmem:[#allocation5 + $0x138] sm:$0xff]
        %v294 = vld [vmem:[#allocation5 + $0x140] sm:$0xff]
        %v295 = vld [vmem:[#allocation5 + $0x148] sm:$0xff]
        %v296 = vld [vmem:[#allocation5 + $0x150] sm:$0xff]
        %v297 = vld [vmem:[#allocation5 + $0x158] sm:$0xff]
        %v298 = vld [vmem:[#allocation5 + $0x160] sm:$0xff]
        %v299 = vld [vmem:[#allocation5 + $0x168] sm:$0xff]
        %v300 = vld [vmem:[#allocation5 + $0x170] sm:$0xff]
        %v301 = vld [vmem:[#allocation5 + $0x178] sm:$0xff]
        %v302 = vld [vmem:[#allocation5 + $0x180] sm:$0xff]
        %v303 = vld [vmem:[#allocation5 + $0x188] sm:$0xff]
        %v304 = vld [vmem:[#allocation5 + $0x190] sm:$0xff]
        %v305 = vld [vmem:[#allocation5 + $0x198] sm:$0xff]
        %v306 = vld [vmem:[#allocation5 + $0x1a0] sm:$0xff]
        %v307 = vld [vmem:[#allocation5 + $0x1a8] sm:$0xff]
        %v308 = vld [vmem:[#allocation5 + $0x1b0] sm:$0xff]
        %v309 = vld [vmem:[#allocation5 + $0x1b8] sm:$0xff]
        %v310 = vld [vmem:[#allocation5 + $0x1c0] sm:$0xff]
        %v311 = vld [vmem:[#allocation5 + $0x1c8] sm:$0xff]
        %v312 = vld [vmem:[#allocation5 + $0x1d0] sm:$0xff]
        %v313 = vld [vmem:[#allocation5 + $0x1d8] sm:$0xff]
        %v314 = vld [vmem:[#allocation5 + $0x1e0] sm:$0xff]
        %v315 = vld [vmem:[#allocation5 + $0x1e8] sm:$0xff]
        %v316 = vld [vmem:[#allocation5 + $0x1f0] sm:$0xff]
        %v317 = vld [vmem:[#allocation5 + $0x1f8] sm:$0xff]
        %v318 = vld [vmem:[#allocation5 + $0x200] sm:$0xff]
        %v319 = vld [vmem:[#allocation5 + $0x208] sm:$0xff]
        %v320 = vld [vmem:[#allocation5 + $0x210] sm:$0xff]
        %v321 = vld [vmem:[#allocation5 + $0x218] sm:$0xff]
        %v322 = vld [vmem:[#allocation5 + $0x220] sm:$0xff]
        %v323 = vld [vmem:[#allocation5 + $0x228] sm:$0xff]
        %v324 = vld [vmem:[#allocation5 + $0x230] sm:$0xff]
        %v325 = vld [vmem:[#allocation5 + $0x238] sm:$0xff]
        %v326 = vld [vmem:[#allocation5 + $0x240] sm:$0xff]
        %v327 = vld [vmem:[#allocation5 + $0x248] sm:$0xff]
        %v328 = vld [vmem:[#allocation5 + $0x250] sm:$0xff]
        %v329 = vld [vmem:[#allocation5 + $0x258] sm:$0xff]
        %v330 = vld [vmem:[#allocation5 + $0x260] sm:$0xff]
        %v331 = vld [vmem:[#allocation5 + $0x268] sm:$0xff]
        %v332 = vld [vmem:[#allocation5 + $0x270] sm:$0xff]
        %v333 = vld [vmem:[#allocation5 + $0x278] sm:$0xff]
        %v334 = vld [vmem:[#allocation5 + $0x280] sm:$0xff]
        %v335 = vld [vmem:[#allocation5 + $0x288] sm:$0xff]
        %v336 = vld [vmem:[#allocation5 + $0x290] sm:$0xff]
        %v337 = vld [vmem:[#allocation5 + $0x298] sm:$0xff]
        %v338 = vld [vmem:[#allocation5 + $0x2a0] sm:$0xff]
        %v339 = vld [vmem:[#allocation5 + $0x2a8] sm:$0xff]
        %v340 = vld [vmem:[#allocation5 + $0x2b0] sm:$0xff]
        %v341 = vld [vmem:[#allocation5 + $0x2b8] sm:$0xff]
        %v342 = vld [vmem:[#allocation5 + $0x2c0] sm:$0xff]
        %v343 = vld [vmem:[#allocation5 + $0x2c8] sm:$0xff]
        %v344 = vld [vmem:[#allocation5 + $0x2d0] sm:$0xff]
        %v345 = vld [vmem:[#allocation5 + $0x2d8] sm:$0xff]
        %v346 = vld [vmem:[#allocation5 + $0x2e0] sm:$0xff]
        %v347 = vld [vmem:[#allocation5 + $0x2e8] sm:$0xff]
        %v348 = vld [vmem:[#allocation5 + $0x2f0] sm:$0xff]
        %v349 = vld [vmem:[#allocation5 + $0x2f8] sm:$0xff]
        %v350 = vld [vmem:[#allocation5 + $0x300] sm:$0xff]
        %v351 = vld [vmem:[#allocation5 + $0x308] sm:$0xff]
        %v352 = vld [vmem:[#allocation5 + $0x310] sm:$0xff]
        %v353 = vld [vmem:[#allocation5 + $0x318] sm:$0xff]
        %v354 = vld [vmem:[#allocation5 + $0x320] sm:$0xff]
        %v355 = vld [vmem:[#allocation5 + $0x328] sm:$0xff]
        %v356 = vld [vmem:[#allocation5 + $0x330] sm:$0xff]
        %v357 = vld [vmem:[#allocation5 + $0x338] sm:$0xff]
        %v358 = vld [vmem:[#allocation5 + $0x340] sm:$0xff]
        %v359 = vld [vmem:[#allocation5 + $0x348] sm:$0xff]
        %v360 = vld [vmem:[#allocation5 + $0x350] sm:$0xff]
        %v361 = vld [vmem:[#allocation5 + $0x358] sm:$0xff]
        %v362 = vld [vmem:[#allocation5 + $0x360] sm:$0xff]
        %v363 = vld [vmem:[#allocation5 + $0x368] sm:$0xff]
        %v364 = vld [vmem:[#allocation5 + $0x370] sm:$0xff]
        %v365 = vld [vmem:[#allocation5 + $0x378] sm:$0xff]
        %v366 = vld [vmem:[#allocation5 + $0x380] sm:$0xff]
        %v367 = vld [vmem:[#allocation5 + $0x388] sm:$0xff]
        %v368 = vld [vmem:[#allocation5 + $0x390] sm:$0xff]
        %v369 = vld [vmem:[#allocation5 + $0x398] sm:$0xff]
        %v370 = vld [vmem:[#allocation5 + $0x3a0] sm:$0xff]
        %v371 = vld [vmem:[#allocation5 + $0x3a8] sm:$0xff]
        %v372 = vld [vmem:[#allocation5 + $0x3b0] sm:$0xff]
        %v373 = vld [vmem:[#allocation5 + $0x3b8] sm:$0xff]
        %v374 = vld [vmem:[#allocation5 + $0x3c0] sm:$0xff]
        %v375 = vld [vmem:[#allocation5 + $0x3c8] sm:$0xff]
        %v376 = vld [vmem:[#allocation5 + $0x3d0] sm:$0xff]
        %v377 = vld [vmem:[#allocation5 + $0x3d8] sm:$0xff]
        %v378 = vld [vmem:[#allocation5 + $0x3e0] sm:$0xff]
        %v379 = vld [vmem:[#allocation5 + $0x3e8] sm:$0xff]
        %v380 = vld [vmem:[#allocation5 + $0x3f0] sm:$0xff]
        %v381 = vld [vmem:[#allocation5 + $0x3f8] sm:$0xff]
        %v382 = vld [vmem:[#allocation5 + $0x400] sm:$0xff]
        %v383 = vld [vmem:[#allocation5 + $0x408] sm:$0xff]
        %v384 = vld [vmem:[#allocation5 + $0x410] sm:$0xff]
        %v385 = vld [vmem:[#allocation5 + $0x418] sm:$0xff]
        %v386 = vld [vmem:[#allocation5 + $0x420] sm:$0xff]
        %v387 = vld [vmem:[#allocation5 + $0x428] sm:$0xff]
        %v388 = vld [vmem:[#allocation5 + $0x430] sm:$0xff]
        %v389 = vld [vmem:[#allocation5 + $0x438] sm:$0xff]
        %v390 = vld [vmem:[#allocation5 + $0x440] sm:$0xff]
        %v391 = vld [vmem:[#allocation5 + $0x448] sm:$0xff]
        %v392 = vld [vmem:[#allocation5 + $0x450] sm:$0xff]
        %v393 = vld [vmem:[#allocation5 + $0x458] sm:$0xff]
        %v394 = vld [vmem:[#allocation5 + $0x460] sm:$0xff]
        %v395 = vld [vmem:[#allocation5 + $0x468] sm:$0xff]
        %v396 = vld [vmem:[#allocation5 + $0x470] sm:$0xff]
        %v397 = vld [vmem:[#allocation5 + $0x478] sm:$0xff]
        %v416 = vrot.slane %v218, 1
        %v417 = vrot.slane %v220, 1
        %v418 = vrot.slane %v222, 1
        %v419 = vrot.slane %v224, 1
        %v420 = vrot.slane %v226, 1
        %v421 = vrot.slane %v228, 1
        %v422 = vrot.slane %v230, 1
        %v423 = vrot.slane %v232, 1
        %v424 = vrot.slane %v234, 1
        %v425 = vrot.slane %v236, 1
        %v426 = vrot.slane %v238, 1
        %v427 = vrot.slane %v240, 1
        %v428 = vrot.slane %v242, 1
        %v429 = vrot.slane %v244, 1
        %v430 = vrot.slane %v246, 1
        %v431 = vrot.slane %v248, 1
        %v432 = vrot.slane %v250, 1
        %v433 = vrot.slane %v252, 1
        %vm470 = vcmask 1040384
        %v471 = vrot.slane %v218, 7
        %v472 = vrot.slane %v219, 7
        %v473 = vsel %vm470, %v471, %v472
        %v474 = vrot.slane %v220, 7
        %v475 = vrot.slane %v221, 7
        %v476 = vsel %vm470, %v474, %v475
        %v477 = vrot.slane %v222, 7
        %v478 = vrot.slane %v223, 7
        %v479 = vsel %vm470, %v477, %v478
        %v480 = vrot.slane %v224, 7
        %v481 = vrot.slane %v225, 7
        %v482 = vsel %vm470, %v480, %v481
        %v483 = vrot.slane %v226, 7
        %v484 = vrot.slane %v227, 7
        %v485 = vsel %vm470, %v483, %v484
        %v486 = vrot.slane %v228, 7
        %v487 = vrot.slane %v229, 7
        %v488 = vsel %vm470, %v486, %v487
        %v489 = vrot.slane %v230, 7
        %v490 = vrot.slane %v231, 7
        %v491 = vsel %vm470, %v489, %v490
        %v492 = vrot.slane %v232, 7
        %v493 = vrot.slane %v233, 7
        %v494 = vsel %vm470, %v492, %v493
        %v495 = vrot.slane %v234, 7
        %v496 = vrot.slane %v235, 7
        %v497 = vsel %vm470, %v495, %v496
        %v498 = vrot.slane %v236, 7
        %v499 = vrot.slane %v237, 7
        %v500 = vsel %vm470, %v498, %v499
        %v501 = vrot.slane %v238, 7
        %v502 = vrot.slane %v239, 7
        %v503 = vsel %vm470, %v501, %v502
        %v504 = vrot.slane %v240, 7
        %v505 = vrot.slane %v241, 7
        %v506 = vsel %vm470, %v504, %v505
        %v507 = vrot.slane %v242, 7
        %v508 = vrot.slane %v243, 7
        %v509 = vsel %vm470, %v507, %v508
        %v510 = vrot.slane %v244, 7
        %v511 = vrot.slane %v245, 7
        %v512 = vsel %vm470, %v510, %v511
        %v513 = vrot.slane %v246, 7
        %v514 = vrot.slane %v247, 7
        %v515 = vsel %vm470, %v513, %v514
        %v516 = vrot.slane %v248, 7
        %v517 = vrot.slane %v249, 7
        %v518 = vsel %vm470, %v516, %v517
        %v519 = vrot.slane %v250, 7
        %v520 = vrot.slane %v251, 7
        %v521 = vsel %vm470, %v519, %v520
        %v522 = vrot.slane %v252, 7
        %v523 = vrot.slane %v253, 7
        %v524 = vsel %vm470, %v522, %v523
        %v561 = vsel %vm470, %v416, %v471
        %v562 = vsel %vm470, %v417, %v474
        %v563 = vsel %vm470, %v418, %v477
        %v564 = vsel %vm470, %v419, %v480
        %v565 = vsel %vm470, %v420, %v483
        %v566 = vsel %vm470, %v421, %v486
        %v567 = vsel %vm470, %v422, %v489
        %v568 = vsel %vm470, %v423, %v492
        %v569 = vsel %vm470, %v424, %v495
        %v570 = vsel %vm470, %v425, %v498
        %v571 = vsel %vm470, %v426, %v501
        %v572 = vsel %vm470, %v427, %v504
        %v573 = vsel %vm470, %v428, %v507
        %v574 = vsel %vm470, %v429, %v510
        %v575 = vsel %vm470, %v430, %v513
        %v576 = vsel %vm470, %v431, %v516
        %v577 = vsel %vm470, %v432, %v519
        %v578 = vsel %vm470, %v433, %v522
        %vm579 = vcmask 1046528
        %v580 = vrot.slane %v219, 1
        %v581 = vsel %vm579, %v416, %v580
        %v582 = vrot.slane %v221, 1
        %v583 = vsel %vm579, %v417, %v582
        %v584 = vrot.slane %v223, 1
        %v585 = vsel %vm579, %v418, %v584
        %v586 = vrot.slane %v225, 1
        %v587 = vsel %vm579, %v419, %v586
        %v588 = vrot.slane %v227, 1
        %v589 = vsel %vm579, %v420, %v588
        %v590 = vrot.slane %v229, 1
        %v591 = vsel %vm579, %v421, %v590
        %v592 = vrot.slane %v231, 1
        %v593 = vsel %vm579, %v422, %v592
        %v594 = vrot.slane %v233, 1
        %v595 = vsel %vm579, %v423, %v594
        %v596 = vrot.slane %v235, 1
        %v597 = vsel %vm579, %v424, %v596
        %v598 = vrot.slane %v237, 1
        %v599 = vsel %vm579, %v425, %v598
        %v600 = vrot.slane %v239, 1
        %v601 = vsel %vm579, %v426, %v600
        %v602 = vrot.slane %v241, 1
        %v603 = vsel %vm579, %v427, %v602
        %v604 = vrot.slane %v243, 1
        %v605 = vsel %vm579, %v428, %v604
        %v606 = vrot.slane %v245, 1
        %v607 = vsel %vm579, %v429, %v606
        %v608 = vrot.slane %v247, 1
        %v609 = vsel %vm579, %v430, %v608
        %v610 = vrot.slane %v249, 1
        %v611 = vsel %vm579, %v431, %v610
        %v612 = vrot.slane %v251, 1
        %v613 = vsel %vm579, %v432, %v612
        %v614 = vrot.slane %v253, 1
        %v615 = vsel %vm579, %v433, %v614
        %v670 = vsel %vm579, %v580, %v472
        %v671 = vsel %vm579, %v582, %v475
        %v672 = vsel %vm579, %v584, %v478
        %v673 = vsel %vm579, %v586, %v481
        %v674 = vsel %vm579, %v588, %v484
        %v675 = vsel %vm579, %v590, %v487
        %v676 = vsel %vm579, %v592, %v490
        %v677 = vsel %vm579, %v594, %v493
        %v678 = vsel %vm579, %v596, %v496
        %v679 = vsel %vm579, %v598, %v499
        %v680 = vsel %vm579, %v600, %v502
        %v681 = vsel %vm579, %v602, %v505
        %v682 = vsel %vm579, %v604, %v508
        %v683 = vsel %vm579, %v606, %v511
        %v684 = vsel %vm579, %v608, %v514
        %v685 = vsel %vm579, %v610, %v517
        %v686 = vsel %vm579, %v612, %v520
        %v687 = vsel %vm579, %v614, %v523
        %688 = vmatprep.subr.mxu0 0.0
        %689 = vmatpush1.msra.mxu0 %v269
        %690 = vmatprep.subr.mxu0 0.0
        %691 = vmatpush1.msra.mxu0 %v268
        %692 = vmatprep.subr.mxu0 0.0
        %693 = vmatpush1.msra.mxu0 %v267
        %694 = vmatprep.subr.mxu0 0.0
        %695 = vmatpush1.msra.mxu0 %v266
        %696 = vmatprep.subr.mxu0 0.0
        %697 = vmatpush1.msra.mxu0 %v265
        %698 = vmatprep.subr.mxu0 0.0
        %699 = vmatpush1.msra.mxu0 %v264
        %700 = vmatprep.subr.mxu0 0.0
        %701 = vmatpush1.msra.mxu0 %v263
        %702 = vmatprep.subr.mxu0 0.0
        %703 = vmatpush1.msra.mxu0 %v262
        %704 = vmatprep.subr.mxu0 0.0
        %705 = vmatpush1.msra.mxu0 %v261
        %706 = vmatprep.subr.mxu0 0.0
        %707 = vmatpush1.msra.mxu0 %v260
        %708 = vmatprep.subr.mxu0 0.0
        %709 = vmatpush1.msra.mxu0 %v259
        %710 = vmatprep.subr.mxu0 0.0
        %711 = vmatpush1.msra.mxu0 %v258
        %712 = vmatprep.subr.mxu0 0.0
        %713 = vmatpush1.msra.mxu0 %v257
        %714 = vmatprep.subr.mxu0 0.0
        %715 = vmatpush1.msra.mxu0 %v256
        %716 = vmatprep.subr.mxu0 0.0
        %717 = vmatpush1.msra.mxu0 %v255
        %718 = vmatprep.subr.mxu0 0.0
        %719 = vmatpush1.msra.mxu0 %v254
        %720 = vmatprep.subr.mxu0 0.0
        %721 = vmatpush2.msra.mxu0 %v285
        %722 = vmatprep.subr.mxu0 0.0
        %723 = vmatpush2.msra.mxu0 %v284
        %724 = vmatprep.subr.mxu0 0.0
        %725 = vmatpush2.msra.mxu0 %v283
        %726 = vmatprep.subr.mxu0 0.0
        %727 = vmatpush2.msra.mxu0 %v282
        %728 = vmatprep.subr.mxu0 0.0
        %729 = vmatpush2.msra.mxu0 %v281
        %730 = vmatprep.subr.mxu0 0.0
        %731 = vmatpush2.msra.mxu0 %v280
        %732 = vmatprep.subr.mxu0 0.0
        %733 = vmatpush2.msra.mxu0 %v279
        %734 = vmatprep.subr.mxu0 0.0
        %735 = vmatpush2.msra.mxu0 %v278
        %736 = vmatprep.subr.mxu0 0.0
        %737 = vmatpush2.msra.mxu0 %v277
        %738 = vmatprep.subr.mxu0 0.0
        %739 = vmatpush2.msra.mxu0 %v276
        %740 = vmatprep.subr.mxu0 0.0
        %741 = vmatpush2.msra.mxu0 %v275
        %742 = vmatprep.subr.mxu0 0.0
        %743 = vmatpush2.msra.mxu0 %v274
        %744 = vmatprep.subr.mxu0 0.0
        %745 = vmatpush2.msra.mxu0 %v273
        %746 = vmatprep.subr.mxu0 0.0
        %747 = vmatpush2.msra.mxu0 %v272
        %748 = vmatprep.subr.mxu0 0.0
        %749 = vmatpush2.msra.mxu0 %v271
        %750 = vmatprep.subr.mxu0 0.0
        %751 = vmatpush2.msra.mxu0 %v270
        %752 = vmatprep.mubr.f32.mxu0 %v218
        %753 = vmatmul.mubr.f32.gmra.mxu0 %v561
        %v754 = vpop.f32.mrf.mxu0
        %v755 = vadd.f32 0.0, %v754
        %v756 = vpop.f32.mrf.mxu0
        %757 = vmatprep.mubr.f32.mxu0 %v219
        %758 = vmatmul.mubr.f32.gmra.mxu0 %v473
        %v759 = vpop.f32.mrf.mxu0
        %v760 = vadd.f32 0.0, %v759
        %v761 = vpop.f32.mrf.mxu0
        %762 = vmatprep.mubr.f32.mxu0 %v220
        %763 = vmatmul.mubr.f32.gmra.mxu0 %v562
        %v764 = vpop.f32.mrf.mxu0
        %v765 = vadd.f32 0.0, %v764
        %v766 = vpop.f32.mrf.mxu0
        %767 = vmatprep.mubr.f32.mxu0 %v221
        %768 = vmatmul.mubr.f32.gmra.mxu0 %v476
        %v769 = vpop.f32.mrf.mxu0
        %v770 = vadd.f32 0.0, %v769
        %v771 = vpop.f32.mrf.mxu0
        %772 = vmatprep.mubr.f32.mxu0 %v222
        %773 = vmatmul.mubr.f32.gmra.mxu0 %v563
        %v774 = vpop.f32.mrf.mxu0
        %v775 = vadd.f32 0.0, %v774
        %v776 = vpop.f32.mrf.mxu0
        %777 = vmatprep.mubr.f32.mxu0 %v223
        %778 = vmatmul.mubr.f32.gmra.mxu0 %v479
        %v779 = vpop.f32.mrf.mxu0
        %v780 = vadd.f32 0.0, %v779
        %v781 = vpop.f32.mrf.mxu0
        %782 = vmatprep.mubr.f32.mxu0 %v224
        %783 = vmatmul.mubr.f32.gmra.mxu0 %v564
        %v784 = vpop.f32.mrf.mxu0
        %v785 = vadd.f32 0.0, %v784
        %v786 = vpop.f32.mrf.mxu0
        %787 = vmatprep.mubr.f32.mxu0 %v225
        %788 = vmatmul.mubr.f32.gmra.mxu0 %v482
        %v789 = vpop.f32.mrf.mxu0
        %v790 = vadd.f32 0.0, %v789
        %v791 = vpop.f32.mrf.mxu0
        %792 = vmatprep.mubr.f32.mxu0 %v226
        %793 = vmatmul.mubr.f32.gmra.mxu0 %v565
        %v794 = vpop.f32.mrf.mxu0
        %v795 = vadd.f32 0.0, %v794
        %v796 = vpop.f32.mrf.mxu0
        %797 = vmatprep.mubr.f32.mxu0 %v227
        %798 = vmatmul.mubr.f32.gmra.mxu0 %v485
        %v799 = vpop.f32.mrf.mxu0
        %v800 = vadd.f32 0.0, %v799
        %v801 = vpop.f32.mrf.mxu0
        %802 = vmatprep.mubr.f32.mxu0 %v228
        %803 = vmatmul.mubr.f32.gmra.mxu0 %v566
        %v804 = vpop.f32.mrf.mxu0
        %v805 = vadd.f32 0.0, %v804
        %v806 = vpop.f32.mrf.mxu0
        %807 = vmatprep.mubr.f32.mxu0 %v229
        %808 = vmatmul.mubr.f32.gmra.mxu0 %v488
        %v809 = vpop.f32.mrf.mxu0
        %v810 = vadd.f32 0.0, %v809
        %v811 = vpop.f32.mrf.mxu0
        %812 = vmatprep.mubr.f32.mxu0 %v230
        %813 = vmatmul.mubr.f32.gmra.mxu0 %v567
        %v814 = vpop.f32.mrf.mxu0
        %v815 = vadd.f32 0.0, %v814
        %v816 = vpop.f32.mrf.mxu0
        %817 = vmatprep.mubr.f32.mxu0 %v231
        %818 = vmatmul.mubr.f32.gmra.mxu0 %v491
        %v819 = vpop.f32.mrf.mxu0
        %v820 = vadd.f32 0.0, %v819
        %v821 = vpop.f32.mrf.mxu0
        %822 = vmatprep.mubr.f32.mxu0 %v232
        %823 = vmatmul.mubr.f32.gmra.mxu0 %v568
        %v824 = vpop.f32.mrf.mxu0
        %v825 = vadd.f32 0.0, %v824
        %v826 = vpop.f32.mrf.mxu0
        %827 = vmatprep.mubr.f32.mxu0 %v233
        %828 = vmatmul.mubr.f32.gmra.mxu0 %v494
        %v829 = vpop.f32.mrf.mxu0
        %v830 = vadd.f32 0.0, %v829
        %v831 = vpop.f32.mrf.mxu0
        %832 = vmatprep.mubr.f32.mxu0 %v234
        %833 = vmatmul.mubr.f32.gmra.mxu0 %v569
        %v834 = vpop.f32.mrf.mxu0
        %v835 = vadd.f32 0.0, %v834
        %v836 = vpop.f32.mrf.mxu0
        %837 = vmatprep.mubr.f32.mxu0 %v235
        %838 = vmatmul.mubr.f32.gmra.mxu0 %v497
        %v839 = vpop.f32.mrf.mxu0
        %v840 = vadd.f32 0.0, %v839
        %v841 = vpop.f32.mrf.mxu0
        %842 = vmatprep.mubr.f32.mxu0 %v236
        %843 = vmatmul.mubr.f32.gmra.mxu0 %v570
        %v844 = vpop.f32.mrf.mxu0
        %v845 = vadd.f32 0.0, %v844
        %v846 = vpop.f32.mrf.mxu0
        %847 = vmatprep.mubr.f32.mxu0 %v237
        %848 = vmatmul.mubr.f32.gmra.mxu0 %v500
        %v849 = vpop.f32.mrf.mxu0
        %v850 = vadd.f32 0.0, %v849
        %v851 = vpop.f32.mrf.mxu0
        %852 = vmatprep.mubr.f32.mxu0 %v238
        %853 = vmatmul.mubr.f32.gmra.mxu0 %v571
        %v854 = vpop.f32.mrf.mxu0
        %v855 = vadd.f32 0.0, %v854
        %v856 = vpop.f32.mrf.mxu0
        %857 = vmatprep.mubr.f32.mxu0 %v239
        %858 = vmatmul.mubr.f32.gmra.mxu0 %v503
        %v859 = vpop.f32.mrf.mxu0
        %v860 = vadd.f32 0.0, %v859
        %v861 = vpop.f32.mrf.mxu0
        %862 = vmatprep.mubr.f32.mxu0 %v240
        %863 = vmatmul.mubr.f32.gmra.mxu0 %v572
        %v864 = vpop.f32.mrf.mxu0
        %v865 = vadd.f32 0.0, %v864
        %v866 = vpop.f32.mrf.mxu0
        %867 = vmatprep.mubr.f32.mxu0 %v241
        %868 = vmatmul.mubr.f32.gmra.mxu0 %v506
        %v869 = vpop.f32.mrf.mxu0
        %v870 = vadd.f32 0.0, %v869
        %v871 = vpop.f32.mrf.mxu0
        %872 = vmatprep.mubr.f32.mxu0 %v242
        %873 = vmatmul.mubr.f32.gmra.mxu0 %v573
        %v874 = vpop.f32.mrf.mxu0
        %v875 = vadd.f32 0.0, %v874
        %v876 = vpop.f32.mrf.mxu0
        %877 = vmatprep.mubr.f32.mxu0 %v243
        %878 = vmatmul.mubr.f32.gmra.mxu0 %v509
        %v879 = vpop.f32.mrf.mxu0
        %v880 = vadd.f32 0.0, %v879
        %v881 = vpop.f32.mrf.mxu0
        %882 = vmatprep.mubr.f32.mxu0 %v244
        %883 = vmatmul.mubr.f32.gmra.mxu0 %v574
        %v884 = vpop.f32.mrf.mxu0
        %v885 = vadd.f32 0.0, %v884
        %v886 = vpop.f32.mrf.mxu0
        %887 = vmatprep.mubr.f32.mxu0 %v245
        %888 = vmatmul.mubr.f32.gmra.mxu0 %v512
        %v889 = vpop.f32.mrf.mxu0
        %v890 = vadd.f32 0.0, %v889
        %v891 = vpop.f32.mrf.mxu0
        %892 = vmatprep.mubr.f32.mxu0 %v246
        %893 = vmatmul.mubr.f32.gmra.mxu0 %v575
        %v894 = vpop.f32.mrf.mxu0
        %v895 = vadd.f32 0.0, %v894
        %v896 = vpop.f32.mrf.mxu0
        %897 = vmatprep.mubr.f32.mxu0 %v247
        %898 = vmatmul.mubr.f32.gmra.mxu0 %v515
        %v899 = vpop.f32.mrf.mxu0
        %v900 = vadd.f32 0.0, %v899
        %v901 = vpop.f32.mrf.mxu0
        %902 = vmatprep.mubr.f32.mxu0 %v248
        %903 = vmatmul.mubr.f32.gmra.mxu0 %v576
        %v904 = vpop.f32.mrf.mxu0
        %v905 = vadd.f32 0.0, %v904
        %v906 = vpop.f32.mrf.mxu0
        %907 = vmatprep.mubr.f32.mxu0 %v249
        %908 = vmatmul.mubr.f32.gmra.mxu0 %v518
        %v909 = vpop.f32.mrf.mxu0
        %v910 = vadd.f32 0.0, %v909
        %v911 = vpop.f32.mrf.mxu0
        %912 = vdwg.mxu0
        %913 = vmatprep.subr.mxu0 0.0
        %914 = vmatpush1.msra.mxu0 %v301
        %915 = vmatprep.subr.mxu0 0.0
        %916 = vmatpush1.msra.mxu0 %v300
        %917 = vmatprep.subr.mxu0 0.0
        %918 = vmatpush1.msra.mxu0 %v299
        %919 = vmatprep.subr.mxu0 0.0
        %920 = vmatpush1.msra.mxu0 %v298
        %921 = vmatprep.subr.mxu0 0.0
        %922 = vmatpush1.msra.mxu0 %v297
        %923 = vmatprep.subr.mxu0 0.0
        %924 = vmatpush1.msra.mxu0 %v296
        %925 = vmatprep.subr.mxu0 0.0
        %926 = vmatpush1.msra.mxu0 %v295
        %927 = vmatprep.subr.mxu0 0.0
        %928 = vmatpush1.msra.mxu0 %v294
        %929 = vmatprep.subr.mxu0 0.0
        %930 = vmatpush1.msra.mxu0 %v293
        %931 = vmatprep.subr.mxu0 0.0
        %932 = vmatpush1.msra.mxu0 %v292
        %933 = vmatprep.subr.mxu0 0.0
        %934 = vmatpush1.msra.mxu0 %v291
        %935 = vmatprep.subr.mxu0 0.0
        %936 = vmatpush1.msra.mxu0 %v290
        %937 = vmatprep.subr.mxu0 0.0
        %938 = vmatpush1.msra.mxu0 %v289
        %939 = vmatprep.subr.mxu0 0.0
        %940 = vmatpush1.msra.mxu0 %v288
        %941 = vmatprep.subr.mxu0 0.0
        %942 = vmatpush1.msra.mxu0 %v287
        %943 = vmatprep.subr.mxu0 0.0
        %944 = vmatpush1.msra.mxu0 %v286
        %945 = vmatprep.subr.mxu0 0.0
        %946 = vmatpush2.msra.mxu0 %v317
        %947 = vmatprep.subr.mxu0 0.0
        %948 = vmatpush2.msra.mxu0 %v316
        %949 = vmatprep.subr.mxu0 0.0
        %950 = vmatpush2.msra.mxu0 %v315
        %951 = vmatprep.subr.mxu0 0.0
        %952 = vmatpush2.msra.mxu0 %v314
        %953 = vmatprep.subr.mxu0 0.0
        %954 = vmatpush2.msra.mxu0 %v313
        %955 = vmatprep.subr.mxu0 0.0
        %956 = vmatpush2.msra.mxu0 %v312
        %957 = vmatprep.subr.mxu0 0.0
        %958 = vmatpush2.msra.mxu0 %v311
        %959 = vmatprep.subr.mxu0 0.0
        %960 = vmatpush2.msra.mxu0 %v310
        %961 = vmatprep.subr.mxu0 0.0
        %962 = vmatpush2.msra.mxu0 %v309
        %963 = vmatprep.subr.mxu0 0.0
        %964 = vmatpush2.msra.mxu0 %v308
        %965 = vmatprep.subr.mxu0 0.0
        %966 = vmatpush2.msra.mxu0 %v307
        %967 = vmatprep.subr.mxu0 0.0
        %968 = vmatpush2.msra.mxu0 %v306
        %969 = vmatprep.subr.mxu0 0.0
        %970 = vmatpush2.msra.mxu0 %v305
        %971 = vmatprep.subr.mxu0 0.0
        %972 = vmatpush2.msra.mxu0 %v304
        %973 = vmatprep.subr.mxu0 0.0
        %974 = vmatpush2.msra.mxu0 %v303
        %975 = vmatprep.subr.mxu0 0.0
        %976 = vmatpush2.msra.mxu0 %v302
        %977 = vmatprep.mubr.f32.mxu0 %v562
        %978 = vmatmul.mubr.f32.gmra.mxu0 %v581
        %v979 = vpop.f32.mrf.mxu0
        %v980 = vadd.f32 %v755, %v979
        %v981 = vpop.f32.mrf.mxu0
        %982 = vmatprep.mubr.f32.mxu0 %v476
        %983 = vmatmul.mubr.f32.gmra.mxu0 %v670
        %v984 = vpop.f32.mrf.mxu0
        %v985 = vadd.f32 %v760, %v984
        %v986 = vpop.f32.mrf.mxu0
        %987 = vmatprep.mubr.f32.mxu0 %v563
        %988 = vmatmul.mubr.f32.gmra.mxu0 %v583
        %v989 = vpop.f32.mrf.mxu0
        %v990 = vadd.f32 %v765, %v989
        %v991 = vpop.f32.mrf.mxu0
        %992 = vmatprep.mubr.f32.mxu0 %v479
        %993 = vmatmul.mubr.f32.gmra.mxu0 %v671
        %v994 = vpop.f32.mrf.mxu0
        %v995 = vadd.f32 %v770, %v994
        %v996 = vpop.f32.mrf.mxu0
        %997 = vmatprep.mubr.f32.mxu0 %v564
        %998 = vmatmul.mubr.f32.gmra.mxu0 %v585
        %v999 = vpop.f32.mrf.mxu0
        %v1000 = vadd.f32 %v775, %v999
        %v1001 = vpop.f32.mrf.mxu0
        %1002 = vmatprep.mubr.f32.mxu0 %v482
        %1003 = vmatmul.mubr.f32.gmra.mxu0 %v672
        %v1004 = vpop.f32.mrf.mxu0
        %v1005 = vadd.f32 %v780, %v1004
        %v1006 = vpop.f32.mrf.mxu0
        %1007 = vmatprep.mubr.f32.mxu0 %v565
        %1008 = vmatmul.mubr.f32.gmra.mxu0 %v587
        %v1009 = vpop.f32.mrf.mxu0
        %v1010 = vadd.f32 %v785, %v1009
        %v1011 = vpop.f32.mrf.mxu0
        %1012 = vmatprep.mubr.f32.mxu0 %v485
        %1013 = vmatmul.mubr.f32.gmra.mxu0 %v673
        %v1014 = vpop.f32.mrf.mxu0
        %v1015 = vadd.f32 %v790, %v1014
        %v1016 = vpop.f32.mrf.mxu0
        %1017 = vmatprep.mubr.f32.mxu0 %v566
        %1018 = vmatmul.mubr.f32.gmra.mxu0 %v589
        %v1019 = vpop.f32.mrf.mxu0
        %v1020 = vadd.f32 %v795, %v1019
        %v1021 = vpop.f32.mrf.mxu0
        %1022 = vmatprep.mubr.f32.mxu0 %v488
        %1023 = vmatmul.mubr.f32.gmra.mxu0 %v674
        %v1024 = vpop.f32.mrf.mxu0
        %v1025 = vadd.f32 %v800, %v1024
        %v1026 = vpop.f32.mrf.mxu0
        %1027 = vmatprep.mubr.f32.mxu0 %v567
        %1028 = vmatmul.mubr.f32.gmra.mxu0 %v591
        %v1029 = vpop.f32.mrf.mxu0
        %v1030 = vadd.f32 %v805, %v1029
        %v1031 = vpop.f32.mrf.mxu0
        %1032 = vmatprep.mubr.f32.mxu0 %v491
        %1033 = vmatmul.mubr.f32.gmra.mxu0 %v675
        %v1034 = vpop.f32.mrf.mxu0
        %v1035 = vadd.f32 %v810, %v1034
        %v1036 = vpop.f32.mrf.mxu0
        %1037 = vmatprep.mubr.f32.mxu0 %v568
        %1038 = vmatmul.mubr.f32.gmra.mxu0 %v593
        %v1039 = vpop.f32.mrf.mxu0
        %v1040 = vadd.f32 %v815, %v1039
        %v1041 = vpop.f32.mrf.mxu0
        %1042 = vmatprep.mubr.f32.mxu0 %v494
        %1043 = vmatmul.mubr.f32.gmra.mxu0 %v676
        %v1044 = vpop.f32.mrf.mxu0
        %v1045 = vadd.f32 %v820, %v1044
        %v1046 = vpop.f32.mrf.mxu0
        %1047 = vmatprep.mubr.f32.mxu0 %v569
        %1048 = vmatmul.mubr.f32.gmra.mxu0 %v595
        %v1049 = vpop.f32.mrf.mxu0
        %v1050 = vadd.f32 %v825, %v1049
        %v1051 = vpop.f32.mrf.mxu0
        %1052 = vmatprep.mubr.f32.mxu0 %v497
        %1053 = vmatmul.mubr.f32.gmra.mxu0 %v677
        %v1054 = vpop.f32.mrf.mxu0
        %v1055 = vadd.f32 %v830, %v1054
        %v1056 = vpop.f32.mrf.mxu0
        %1057 = vmatprep.mubr.f32.mxu0 %v570
        %1058 = vmatmul.mubr.f32.gmra.mxu0 %v597
        %v1059 = vpop.f32.mrf.mxu0
        %v1060 = vadd.f32 %v835, %v1059
        %v1061 = vpop.f32.mrf.mxu0
        %1062 = vmatprep.mubr.f32.mxu0 %v500
        %1063 = vmatmul.mubr.f32.gmra.mxu0 %v678
        %v1064 = vpop.f32.mrf.mxu0
        %v1065 = vadd.f32 %v840, %v1064
        %v1066 = vpop.f32.mrf.mxu0
        %1067 = vmatprep.mubr.f32.mxu0 %v571
        %1068 = vmatmul.mubr.f32.gmra.mxu0 %v599
        %v1069 = vpop.f32.mrf.mxu0
        %v1070 = vadd.f32 %v845, %v1069
        %v1071 = vpop.f32.mrf.mxu0
        %1072 = vmatprep.mubr.f32.mxu0 %v503
        %1073 = vmatmul.mubr.f32.gmra.mxu0 %v679
        %v1074 = vpop.f32.mrf.mxu0
        %v1075 = vadd.f32 %v850, %v1074
        %v1076 = vpop.f32.mrf.mxu0
        %1077 = vmatprep.mubr.f32.mxu0 %v572
        %1078 = vmatmul.mubr.f32.gmra.mxu0 %v601
        %v1079 = vpop.f32.mrf.mxu0
        %v1080 = vadd.f32 %v855, %v1079
        %v1081 = vpop.f32.mrf.mxu0
        %1082 = vmatprep.mubr.f32.mxu0 %v506
        %1083 = vmatmul.mubr.f32.gmra.mxu0 %v680
        %v1084 = vpop.f32.mrf.mxu0
        %v1085 = vadd.f32 %v860, %v1084
        %v1086 = vpop.f32.mrf.mxu0
        %1087 = vmatprep.mubr.f32.mxu0 %v573
        %1088 = vmatmul.mubr.f32.gmra.mxu0 %v603
        %v1089 = vpop.f32.mrf.mxu0
        %v1090 = vadd.f32 %v865, %v1089
        %v1091 = vpop.f32.mrf.mxu0
        %1092 = vmatprep.mubr.f32.mxu0 %v509
        %1093 = vmatmul.mubr.f32.gmra.mxu0 %v681
        %v1094 = vpop.f32.mrf.mxu0
        %v1095 = vadd.f32 %v870, %v1094
        %v1096 = vpop.f32.mrf.mxu0
        %1097 = vmatprep.mubr.f32.mxu0 %v574
        %1098 = vmatmul.mubr.f32.gmra.mxu0 %v605
        %v1099 = vpop.f32.mrf.mxu0
        %v1100 = vadd.f32 %v875, %v1099
        %v1101 = vpop.f32.mrf.mxu0
        %1102 = vmatprep.mubr.f32.mxu0 %v512
        %1103 = vmatmul.mubr.f32.gmra.mxu0 %v682
        %v1104 = vpop.f32.mrf.mxu0
        %v1105 = vadd.f32 %v880, %v1104
        %v1106 = vpop.f32.mrf.mxu0
        %1107 = vmatprep.mubr.f32.mxu0 %v575
        %1108 = vmatmul.mubr.f32.gmra.mxu0 %v607
        %v1109 = vpop.f32.mrf.mxu0
        %v1110 = vadd.f32 %v885, %v1109
        %v1111 = vpop.f32.mrf.mxu0
        %1112 = vmatprep.mubr.f32.mxu0 %v515
        %1113 = vmatmul.mubr.f32.gmra.mxu0 %v683
        %v1114 = vpop.f32.mrf.mxu0
        %v1115 = vadd.f32 %v890, %v1114
        %v1116 = vpop.f32.mrf.mxu0
        %1117 = vmatprep.mubr.f32.mxu0 %v576
        %1118 = vmatmul.mubr.f32.gmra.mxu0 %v609
        %v1119 = vpop.f32.mrf.mxu0
        %v1120 = vadd.f32 %v895, %v1119
        %v1121 = vpop.f32.mrf.mxu0
        %1122 = vmatprep.mubr.f32.mxu0 %v518
        %1123 = vmatmul.mubr.f32.gmra.mxu0 %v684
        %v1124 = vpop.f32.mrf.mxu0
        %v1125 = vadd.f32 %v900, %v1124
        %v1126 = vpop.f32.mrf.mxu0
        %1127 = vmatprep.mubr.f32.mxu0 %v577
        %1128 = vmatmul.mubr.f32.gmra.mxu0 %v611
        %v1129 = vpop.f32.mrf.mxu0
        %v1130 = vadd.f32 %v905, %v1129
        %v1131 = vpop.f32.mrf.mxu0
        %1132 = vmatprep.mubr.f32.mxu0 %v521
        %1133 = vmatmul.mubr.f32.gmra.mxu0 %v685
        %v1134 = vpop.f32.mrf.mxu0
        %v1135 = vadd.f32 %v910, %v1134
        %v1136 = vpop.f32.mrf.mxu0
        %1137 = vdwg.mxu0
        %1138 = vmatprep.subr.mxu0 0.0
        %1139 = vmatpush1.msra.mxu0 %v333
        %1140 = vmatprep.subr.mxu0 0.0
        %1141 = vmatpush1.msra.mxu0 %v332
        %1142 = vmatprep.subr.mxu0 0.0
        %1143 = vmatpush1.msra.mxu0 %v331
        %1144 = vmatprep.subr.mxu0 0.0
        %1145 = vmatpush1.msra.mxu0 %v330
        %1146 = vmatprep.subr.mxu0 0.0
        %1147 = vmatpush1.msra.mxu0 %v329
        %1148 = vmatprep.subr.mxu0 0.0
        %1149 = vmatpush1.msra.mxu0 %v328
        %1150 = vmatprep.subr.mxu0 0.0
        %1151 = vmatpush1.msra.mxu0 %v327
        %1152 = vmatprep.subr.mxu0 0.0
        %1153 = vmatpush1.msra.mxu0 %v326
        %1154 = vmatprep.subr.mxu0 0.0
        %1155 = vmatpush1.msra.mxu0 %v325
        %1156 = vmatprep.subr.mxu0 0.0
        %1157 = vmatpush1.msra.mxu0 %v324
        %1158 = vmatprep.subr.mxu0 0.0
        %1159 = vmatpush1.msra.mxu0 %v323
        %1160 = vmatprep.subr.mxu0 0.0
        %1161 = vmatpush1.msra.mxu0 %v322
        %1162 = vmatprep.subr.mxu0 0.0
        %1163 = vmatpush1.msra.mxu0 %v321
        %1164 = vmatprep.subr.mxu0 0.0
        %1165 = vmatpush1.msra.mxu0 %v320
        %1166 = vmatprep.subr.mxu0 0.0
        %1167 = vmatpush1.msra.mxu0 %v319
        %1168 = vmatprep.subr.mxu0 0.0
        %1169 = vmatpush1.msra.mxu0 %v318
        %1170 = vmatprep.subr.mxu0 0.0
        %1171 = vmatpush2.msra.mxu0 %v349
        %1172 = vmatprep.subr.mxu0 0.0
        %1173 = vmatpush2.msra.mxu0 %v348
        %1174 = vmatprep.subr.mxu0 0.0
        %1175 = vmatpush2.msra.mxu0 %v347
        %1176 = vmatprep.subr.mxu0 0.0
        %1177 = vmatpush2.msra.mxu0 %v346
        %1178 = vmatprep.subr.mxu0 0.0
        %1179 = vmatpush2.msra.mxu0 %v345
        %1180 = vmatprep.subr.mxu0 0.0
        %1181 = vmatpush2.msra.mxu0 %v344
        %1182 = vmatprep.subr.mxu0 0.0
        %1183 = vmatpush2.msra.mxu0 %v343
        %1184 = vmatprep.subr.mxu0 0.0
        %1185 = vmatpush2.msra.mxu0 %v342
        %1186 = vmatprep.subr.mxu0 0.0
        %1187 = vmatpush2.msra.mxu0 %v341
        %1188 = vmatprep.subr.mxu0 0.0
        %1189 = vmatpush2.msra.mxu0 %v340
        %1190 = vmatprep.subr.mxu0 0.0
        %1191 = vmatpush2.msra.mxu0 %v339
        %1192 = vmatprep.subr.mxu0 0.0
        %1193 = vmatpush2.msra.mxu0 %v338
        %1194 = vmatprep.subr.mxu0 0.0
        %1195 = vmatpush2.msra.mxu0 %v337
        %1196 = vmatprep.subr.mxu0 0.0
        %1197 = vmatpush2.msra.mxu0 %v336
        %1198 = vmatprep.subr.mxu0 0.0
        %1199 = vmatpush2.msra.mxu0 %v335
        %1200 = vmatprep.subr.mxu0 0.0
        %1201 = vmatpush2.msra.mxu0 %v334
        %1202 = vmatprep.mubr.f32.mxu0 %v583
        %1203 = vmatmul.mubr.f32.gmra.mxu0 %v220
        %v1204 = vpop.f32.mrf.mxu0
        %v1205 = vadd.f32 %v980, %v1204
        %v1206 = vpop.f32.mrf.mxu0
        %1207 = vmatprep.mubr.f32.mxu0 %v671
        %1208 = vmatmul.mubr.f32.gmra.mxu0 %v221
        %v1209 = vpop.f32.mrf.mxu0
        %v1210 = vadd.f32 %v985, %v1209
        %v1211 = vpop.f32.mrf.mxu0
        %1212 = vmatprep.mubr.f32.mxu0 %v585
        %1213 = vmatmul.mubr.f32.gmra.mxu0 %v222
        %v1214 = vpop.f32.mrf.mxu0
        %v1215 = vadd.f32 %v990, %v1214
        %v1216 = vpop.f32.mrf.mxu0
        %1217 = vmatprep.mubr.f32.mxu0 %v672
        %1218 = vmatmul.mubr.f32.gmra.mxu0 %v223
        %v1219 = vpop.f32.mrf.mxu0
        %v1220 = vadd.f32 %v995, %v1219
        %v1221 = vpop.f32.mrf.mxu0
        %1222 = vmatprep.mubr.f32.mxu0 %v587
        %1223 = vmatmul.mubr.f32.gmra.mxu0 %v224
        %v1224 = vpop.f32.mrf.mxu0
        %v1225 = vadd.f32 %v1000, %v1224
        %v1226 = vpop.f32.mrf.mxu0
        %1227 = vmatprep.mubr.f32.mxu0 %v673
        %1228 = vmatmul.mubr.f32.gmra.mxu0 %v225
        %v1229 = vpop.f32.mrf.mxu0
        %v1230 = vadd.f32 %v1005, %v1229
        %v1231 = vpop.f32.mrf.mxu0
        %1232 = vmatprep.mubr.f32.mxu0 %v589
        %1233 = vmatmul.mubr.f32.gmra.mxu0 %v226
        %v1234 = vpop.f32.mrf.mxu0
        %v1235 = vadd.f32 %v1010, %v1234
        %v1236 = vpop.f32.mrf.mxu0
        %1237 = vmatprep.mubr.f32.mxu0 %v674
        %1238 = vmatmul.mubr.f32.gmra.mxu0 %v227
        %v1239 = vpop.f32.mrf.mxu0
        %v1240 = vadd.f32 %v1015, %v1239
        %v1241 = vpop.f32.mrf.mxu0
        %1242 = vmatprep.mubr.f32.mxu0 %v591
        %1243 = vmatmul.mubr.f32.gmra.mxu0 %v228
        %v1244 = vpop.f32.mrf.mxu0
        %v1245 = vadd.f32 %v1020, %v1244
        %v1246 = vpop.f32.mrf.mxu0
        %1247 = vmatprep.mubr.f32.mxu0 %v675
        %1248 = vmatmul.mubr.f32.gmra.mxu0 %v229
        %v1249 = vpop.f32.mrf.mxu0
        %v1250 = vadd.f32 %v1025, %v1249
        %v1251 = vpop.f32.mrf.mxu0
        %1252 = vmatprep.mubr.f32.mxu0 %v593
        %1253 = vmatmul.mubr.f32.gmra.mxu0 %v230
        %v1254 = vpop.f32.mrf.mxu0
        %v1255 = vadd.f32 %v1030, %v1254
        %v1256 = vpop.f32.mrf.mxu0
        %1257 = vmatprep.mubr.f32.mxu0 %v676
        %1258 = vmatmul.mubr.f32.gmra.mxu0 %v231
        %v1259 = vpop.f32.mrf.mxu0
        %v1260 = vadd.f32 %v1035, %v1259
        %v1261 = vpop.f32.mrf.mxu0
        %1262 = vmatprep.mubr.f32.mxu0 %v595
        %1263 = vmatmul.mubr.f32.gmra.mxu0 %v232
        %v1264 = vpop.f32.mrf.mxu0
        %v1265 = vadd.f32 %v1040, %v1264
        %v1266 = vpop.f32.mrf.mxu0
        %1267 = vmatprep.mubr.f32.mxu0 %v677
        %1268 = vmatmul.mubr.f32.gmra.mxu0 %v233
        %v1269 = vpop.f32.mrf.mxu0
        %v1270 = vadd.f32 %v1045, %v1269
        %v1271 = vpop.f32.mrf.mxu0
        %1272 = vmatprep.mubr.f32.mxu0 %v597
        %1273 = vmatmul.mubr.f32.gmra.mxu0 %v234
        %v1274 = vpop.f32.mrf.mxu0
        %v1275 = vadd.f32 %v1050, %v1274
        %v1276 = vpop.f32.mrf.mxu0
        %1277 = vmatprep.mubr.f32.mxu0 %v678
        %1278 = vmatmul.mubr.f32.gmra.mxu0 %v235
        %v1279 = vpop.f32.mrf.mxu0
        %v1280 = vadd.f32 %v1055, %v1279
        %v1281 = vpop.f32.mrf.mxu0
        %1282 = vmatprep.mubr.f32.mxu0 %v599
        %1283 = vmatmul.mubr.f32.gmra.mxu0 %v236
        %v1284 = vpop.f32.mrf.mxu0
        %v1285 = vadd.f32 %v1060, %v1284
        %v1286 = vpop.f32.mrf.mxu0
        %1287 = vmatprep.mubr.f32.mxu0 %v679
        %1288 = vmatmul.mubr.f32.gmra.mxu0 %v237
        %v1289 = vpop.f32.mrf.mxu0
        %v1290 = vadd.f32 %v1065, %v1289
        %v1291 = vpop.f32.mrf.mxu0
        %1292 = vmatprep.mubr.f32.mxu0 %v601
        %1293 = vmatmul.mubr.f32.gmra.mxu0 %v238
        %v1294 = vpop.f32.mrf.mxu0
        %v1295 = vadd.f32 %v1070, %v1294
        %v1296 = vpop.f32.mrf.mxu0
        %1297 = vmatprep.mubr.f32.mxu0 %v680
        %1298 = vmatmul.mubr.f32.gmra.mxu0 %v239
        %v1299 = vpop.f32.mrf.mxu0
        %v1300 = vadd.f32 %v1075, %v1299
        %v1301 = vpop.f32.mrf.mxu0
        %1302 = vmatprep.mubr.f32.mxu0 %v603
        %1303 = vmatmul.mubr.f32.gmra.mxu0 %v240
        %v1304 = vpop.f32.mrf.mxu0
        %v1305 = vadd.f32 %v1080, %v1304
        %v1306 = vpop.f32.mrf.mxu0
        %1307 = vmatprep.mubr.f32.mxu0 %v681
        %1308 = vmatmul.mubr.f32.gmra.mxu0 %v241
        %v1309 = vpop.f32.mrf.mxu0
        %v1310 = vadd.f32 %v1085, %v1309
        %v1311 = vpop.f32.mrf.mxu0
        %1312 = vmatprep.mubr.f32.mxu0 %v605
        %1313 = vmatmul.mubr.f32.gmra.mxu0 %v242
        %v1314 = vpop.f32.mrf.mxu0
        %v1315 = vadd.f32 %v1090, %v1314
        %v1316 = vpop.f32.mrf.mxu0
        %1317 = vmatprep.mubr.f32.mxu0 %v682
        %1318 = vmatmul.mubr.f32.gmra.mxu0 %v243
        %v1319 = vpop.f32.mrf.mxu0
        %v1320 = vadd.f32 %v1095, %v1319
        %v1321 = vpop.f32.mrf.mxu0
        %1322 = vmatprep.mubr.f32.mxu0 %v607
        %1323 = vmatmul.mubr.f32.gmra.mxu0 %v244
        %v1324 = vpop.f32.mrf.mxu0
        %v1325 = vadd.f32 %v1100, %v1324
        %v1326 = vpop.f32.mrf.mxu0
        %1327 = vmatprep.mubr.f32.mxu0 %v683
        %1328 = vmatmul.mubr.f32.gmra.mxu0 %v245
        %v1329 = vpop.f32.mrf.mxu0
        %v1330 = vadd.f32 %v1105, %v1329
        %v1331 = vpop.f32.mrf.mxu0
        %1332 = vmatprep.mubr.f32.mxu0 %v609
        %1333 = vmatmul.mubr.f32.gmra.mxu0 %v246
        %v1334 = vpop.f32.mrf.mxu0
        %v1335 = vadd.f32 %v1110, %v1334
        %v1336 = vpop.f32.mrf.mxu0
        %1337 = vmatprep.mubr.f32.mxu0 %v684
        %1338 = vmatmul.mubr.f32.gmra.mxu0 %v247
        %v1339 = vpop.f32.mrf.mxu0
        %v1340 = vadd.f32 %v1115, %v1339
        %v1341 = vpop.f32.mrf.mxu0
        %1342 = vmatprep.mubr.f32.mxu0 %v611
        %1343 = vmatmul.mubr.f32.gmra.mxu0 %v248
        %v1344 = vpop.f32.mrf.mxu0
        %v1345 = vadd.f32 %v1120, %v1344
        %v1346 = vpop.f32.mrf.mxu0
        %1347 = vmatprep.mubr.f32.mxu0 %v685
        %1348 = vmatmul.mubr.f32.gmra.mxu0 %v249
        %v1349 = vpop.f32.mrf.mxu0
        %v1350 = vadd.f32 %v1125, %v1349
        %v1351 = vpop.f32.mrf.mxu0
        %1352 = vmatprep.mubr.f32.mxu0 %v613
        %1353 = vmatmul.mubr.f32.gmra.mxu0 %v250
        %v1354 = vpop.f32.mrf.mxu0
        %v1355 = vadd.f32 %v1130, %v1354
        %v1356 = vpop.f32.mrf.mxu0
        %1357 = vmatprep.mubr.f32.mxu0 %v686
        %1358 = vmatmul.mubr.f32.gmra.mxu0 %v251
        %v1359 = vpop.f32.mrf.mxu0
        %v1360 = vadd.f32 %v1135, %v1359
        %v1361 = vpop.f32.mrf.mxu0
        %1362 = vdwg.mxu0
        %1363 = vmatprep.subr.mxu0 0.0
        %1364 = vmatpush1.msra.mxu0 %v365
        %1365 = vmatprep.subr.mxu0 0.0
        %1366 = vmatpush1.msra.mxu0 %v364
        %1367 = vmatprep.subr.mxu0 0.0
        %1368 = vmatpush1.msra.mxu0 %v363
        %1369 = vmatprep.subr.mxu0 0.0
        %1370 = vmatpush1.msra.mxu0 %v362
        %1371 = vmatprep.subr.mxu0 0.0
        %1372 = vmatpush1.msra.mxu0 %v361
        %1373 = vmatprep.subr.mxu0 0.0
        %1374 = vmatpush1.msra.mxu0 %v360
        %1375 = vmatprep.subr.mxu0 0.0
        %1376 = vmatpush1.msra.mxu0 %v359
        %1377 = vmatprep.subr.mxu0 0.0
        %1378 = vmatpush1.msra.mxu0 %v358
        %1379 = vmatprep.subr.mxu0 0.0
        %1380 = vmatpush1.msra.mxu0 %v357
        %1381 = vmatprep.subr.mxu0 0.0
        %1382 = vmatpush1.msra.mxu0 %v356
        %1383 = vmatprep.subr.mxu0 0.0
        %1384 = vmatpush1.msra.mxu0 %v355
        %1385 = vmatprep.subr.mxu0 0.0
        %1386 = vmatpush1.msra.mxu0 %v354
        %1387 = vmatprep.subr.mxu0 0.0
        %1388 = vmatpush1.msra.mxu0 %v353
        %1389 = vmatprep.subr.mxu0 0.0
        %1390 = vmatpush1.msra.mxu0 %v352
        %1391 = vmatprep.subr.mxu0 0.0
        %1392 = vmatpush1.msra.mxu0 %v351
        %1393 = vmatprep.subr.mxu0 0.0
        %1394 = vmatpush1.msra.mxu0 %v350
        %1395 = vmatprep.subr.mxu0 0.0
        %1396 = vmatpush2.msra.mxu0 %v381
        %1397 = vmatprep.subr.mxu0 0.0
        %1398 = vmatpush2.msra.mxu0 %v380
        %1399 = vmatprep.subr.mxu0 0.0
        %1400 = vmatpush2.msra.mxu0 %v379
        %1401 = vmatprep.subr.mxu0 0.0
        %1402 = vmatpush2.msra.mxu0 %v378
        %1403 = vmatprep.subr.mxu0 0.0
        %1404 = vmatpush2.msra.mxu0 %v377
        %1405 = vmatprep.subr.mxu0 0.0
        %1406 = vmatpush2.msra.mxu0 %v376
        %1407 = vmatprep.subr.mxu0 0.0
        %1408 = vmatpush2.msra.mxu0 %v375
        %1409 = vmatprep.subr.mxu0 0.0
        %1410 = vmatpush2.msra.mxu0 %v374
        %1411 = vmatprep.subr.mxu0 0.0
        %1412 = vmatpush2.msra.mxu0 %v373
        %1413 = vmatprep.subr.mxu0 0.0
        %1414 = vmatpush2.msra.mxu0 %v372
        %1415 = vmatprep.subr.mxu0 0.0
        %1416 = vmatpush2.msra.mxu0 %v371
        %1417 = vmatprep.subr.mxu0 0.0
        %1418 = vmatpush2.msra.mxu0 %v370
        %1419 = vmatprep.subr.mxu0 0.0
        %1420 = vmatpush2.msra.mxu0 %v369
        %1421 = vmatprep.subr.mxu0 0.0
        %1422 = vmatpush2.msra.mxu0 %v368
        %1423 = vmatprep.subr.mxu0 0.0
        %1424 = vmatpush2.msra.mxu0 %v367
        %1425 = vmatprep.subr.mxu0 0.0
        %1426 = vmatpush2.msra.mxu0 %v366
        %1427 = vmatprep.mubr.f32.mxu0 %v222
        %1428 = vmatmul.mubr.f32.gmra.mxu0 %v563
        %v1429 = vpop.f32.mrf.mxu0
        %v1430 = vadd.f32 %v1205, %v1429
        %v1431 = vpop.f32.mrf.mxu0
        %1432 = vmatprep.mubr.f32.mxu0 %v223
        %1433 = vmatmul.mubr.f32.gmra.mxu0 %v479
        %v1434 = vpop.f32.mrf.mxu0
        %v1435 = vadd.f32 %v1210, %v1434
        %v1436 = vpop.f32.mrf.mxu0
        %1437 = vmatprep.mubr.f32.mxu0 %v224
        %1438 = vmatmul.mubr.f32.gmra.mxu0 %v564
        %v1439 = vpop.f32.mrf.mxu0
        %v1440 = vadd.f32 %v1215, %v1439
        %v1441 = vpop.f32.mrf.mxu0
        %1442 = vmatprep.mubr.f32.mxu0 %v225
        %1443 = vmatmul.mubr.f32.gmra.mxu0 %v482
        %v1444 = vpop.f32.mrf.mxu0
        %v1445 = vadd.f32 %v1220, %v1444
        %v1446 = vpop.f32.mrf.mxu0
        %1447 = vmatprep.mubr.f32.mxu0 %v226
        %1448 = vmatmul.mubr.f32.gmra.mxu0 %v565
        %v1449 = vpop.f32.mrf.mxu0
        %v1450 = vadd.f32 %v1225, %v1449
        %v1451 = vpop.f32.mrf.mxu0
        %1452 = vmatprep.mubr.f32.mxu0 %v227
        %1453 = vmatmul.mubr.f32.gmra.mxu0 %v485
        %v1454 = vpop.f32.mrf.mxu0
        %v1455 = vadd.f32 %v1230, %v1454
        %v1456 = vpop.f32.mrf.mxu0
        %1457 = vmatprep.mubr.f32.mxu0 %v228
        %1458 = vmatmul.mubr.f32.gmra.mxu0 %v566
        %v1459 = vpop.f32.mrf.mxu0
        %v1460 = vadd.f32 %v1235, %v1459
        %v1461 = vpop.f32.mrf.mxu0
        %1462 = vmatprep.mubr.f32.mxu0 %v229
        %1463 = vmatmul.mubr.f32.gmra.mxu0 %v488
        %v1464 = vpop.f32.mrf.mxu0
        %v1465 = vadd.f32 %v1240, %v1464
        %v1466 = vpop.f32.mrf.mxu0
        %1467 = vmatprep.mubr.f32.mxu0 %v230
        %1468 = vmatmul.mubr.f32.gmra.mxu0 %v567
        %v1469 = vpop.f32.mrf.mxu0
        %v1470 = vadd.f32 %v1245, %v1469
        %v1471 = vpop.f32.mrf.mxu0
        %1472 = vmatprep.mubr.f32.mxu0 %v231
        %1473 = vmatmul.mubr.f32.gmra.mxu0 %v491
        %v1474 = vpop.f32.mrf.mxu0
        %v1475 = vadd.f32 %v1250, %v1474
        %v1476 = vpop.f32.mrf.mxu0
        %1477 = vmatprep.mubr.f32.mxu0 %v232
        %1478 = vmatmul.mubr.f32.gmra.mxu0 %v568
        %v1479 = vpop.f32.mrf.mxu0
        %v1480 = vadd.f32 %v1255, %v1479
        %v1481 = vpop.f32.mrf.mxu0
        %1482 = vmatprep.mubr.f32.mxu0 %v233
        %1483 = vmatmul.mubr.f32.gmra.mxu0 %v494
        %v1484 = vpop.f32.mrf.mxu0
        %v1485 = vadd.f32 %v1260, %v1484
        %v1486 = vpop.f32.mrf.mxu0
        %1487 = vmatprep.mubr.f32.mxu0 %v234
        %1488 = vmatmul.mubr.f32.gmra.mxu0 %v569
        %v1489 = vpop.f32.mrf.mxu0
        %v1490 = vadd.f32 %v1265, %v1489
        %v1491 = vpop.f32.mrf.mxu0
        %1492 = vmatprep.mubr.f32.mxu0 %v235
        %1493 = vmatmul.mubr.f32.gmra.mxu0 %v497
        %v1494 = vpop.f32.mrf.mxu0
        %v1495 = vadd.f32 %v1270, %v1494
        %v1496 = vpop.f32.mrf.mxu0
        %1497 = vmatprep.mubr.f32.mxu0 %v236
        %1498 = vmatmul.mubr.f32.gmra.mxu0 %v570
        %v1499 = vpop.f32.mrf.mxu0
        %v1500 = vadd.f32 %v1275, %v1499
        %v1501 = vpop.f32.mrf.mxu0
        %1502 = vmatprep.mubr.f32.mxu0 %v237
        %1503 = vmatmul.mubr.f32.gmra.mxu0 %v500
        %v1504 = vpop.f32.mrf.mxu0
        %v1505 = vadd.f32 %v1280, %v1504
        %v1506 = vpop.f32.mrf.mxu0
        %1507 = vmatprep.mubr.f32.mxu0 %v238
        %1508 = vmatmul.mubr.f32.gmra.mxu0 %v571
        %v1509 = vpop.f32.mrf.mxu0
        %v1510 = vadd.f32 %v1285, %v1509
        %v1511 = vpop.f32.mrf.mxu0
        %1512 = vmatprep.mubr.f32.mxu0 %v239
        %1513 = vmatmul.mubr.f32.gmra.mxu0 %v503
        %v1514 = vpop.f32.mrf.mxu0
        %v1515 = vadd.f32 %v1290, %v1514
        %v1516 = vpop.f32.mrf.mxu0
        %1517 = vmatprep.mubr.f32.mxu0 %v240
        %1518 = vmatmul.mubr.f32.gmra.mxu0 %v572
        %v1519 = vpop.f32.mrf.mxu0
        %v1520 = vadd.f32 %v1295, %v1519
        %v1521 = vpop.f32.mrf.mxu0
        %1522 = vmatprep.mubr.f32.mxu0 %v241
        %1523 = vmatmul.mubr.f32.gmra.mxu0 %v506
        %v1524 = vpop.f32.mrf.mxu0
        %v1525 = vadd.f32 %v1300, %v1524
        %v1526 = vpop.f32.mrf.mxu0
        %1527 = vmatprep.mubr.f32.mxu0 %v242
        %1528 = vmatmul.mubr.f32.gmra.mxu0 %v573
        %v1529 = vpop.f32.mrf.mxu0
        %v1530 = vadd.f32 %v1305, %v1529
        %v1531 = vpop.f32.mrf.mxu0
        %1532 = vmatprep.mubr.f32.mxu0 %v243
        %1533 = vmatmul.mubr.f32.gmra.mxu0 %v509
        %v1534 = vpop.f32.mrf.mxu0
        %v1535 = vadd.f32 %v1310, %v1534
        %v1536 = vpop.f32.mrf.mxu0
        %1537 = vmatprep.mubr.f32.mxu0 %v244
        %1538 = vmatmul.mubr.f32.gmra.mxu0 %v574
        %v1539 = vpop.f32.mrf.mxu0
        %v1540 = vadd.f32 %v1315, %v1539
        %v1541 = vpop.f32.mrf.mxu0
        %1542 = vmatprep.mubr.f32.mxu0 %v245
        %1543 = vmatmul.mubr.f32.gmra.mxu0 %v512
        %v1544 = vpop.f32.mrf.mxu0
        %v1545 = vadd.f32 %v1320, %v1544
        %v1546 = vpop.f32.mrf.mxu0
        %1547 = vmatprep.mubr.f32.mxu0 %v246
        %1548 = vmatmul.mubr.f32.gmra.mxu0 %v575
        %v1549 = vpop.f32.mrf.mxu0
        %v1550 = vadd.f32 %v1325, %v1549
        %v1551 = vpop.f32.mrf.mxu0
        %1552 = vmatprep.mubr.f32.mxu0 %v247
        %1553 = vmatmul.mubr.f32.gmra.mxu0 %v515
        %v1554 = vpop.f32.mrf.mxu0
        %v1555 = vadd.f32 %v1330, %v1554
        %v1556 = vpop.f32.mrf.mxu0
        %1557 = vmatprep.mubr.f32.mxu0 %v248
        %1558 = vmatmul.mubr.f32.gmra.mxu0 %v576
        %v1559 = vpop.f32.mrf.mxu0
        %v1560 = vadd.f32 %v1335, %v1559
        %v1561 = vpop.f32.mrf.mxu0
        %1562 = vmatprep.mubr.f32.mxu0 %v249
        %1563 = vmatmul.mubr.f32.gmra.mxu0 %v518
        %v1564 = vpop.f32.mrf.mxu0
        %v1565 = vadd.f32 %v1340, %v1564
        %v1566 = vpop.f32.mrf.mxu0
        %1567 = vmatprep.mubr.f32.mxu0 %v250
        %1568 = vmatmul.mubr.f32.gmra.mxu0 %v577
        %v1569 = vpop.f32.mrf.mxu0
        %v1570 = vadd.f32 %v1345, %v1569
        %v1571 = vpop.f32.mrf.mxu0
        %1572 = vmatprep.mubr.f32.mxu0 %v251
        %1573 = vmatmul.mubr.f32.gmra.mxu0 %v521
        %v1574 = vpop.f32.mrf.mxu0
        %v1575 = vadd.f32 %v1350, %v1574
        %v1576 = vpop.f32.mrf.mxu0
        %1577 = vmatprep.mubr.f32.mxu0 %v252
        %1578 = vmatmul.mubr.f32.gmra.mxu0 %v578
        %v1579 = vpop.f32.mrf.mxu0
        %v1580 = vadd.f32 %v1355, %v1579
        %v1581 = vpop.f32.mrf.mxu0
        %1582 = vmatprep.mubr.f32.mxu0 %v253
        %1583 = vmatmul.mubr.f32.gmra.mxu0 %v524
        %v1584 = vpop.f32.mrf.mxu0
        %v1585 = vadd.f32 %v1360, %v1584
        %v1586 = vpop.f32.mrf.mxu0
        %1587 = vdwg.mxu0
        %1588 = vmatprep.subr.mxu0 0.0
        %1589 = vmatpush1.msra.mxu0 %v397
        %1590 = vmatprep.subr.mxu0 0.0
        %1591 = vmatpush1.msra.mxu0 %v396
        %1592 = vmatprep.subr.mxu0 0.0
        %1593 = vmatpush1.msra.mxu0 %v395
        %1594 = vmatprep.subr.mxu0 0.0
        %1595 = vmatpush1.msra.mxu0 %v394
        %1596 = vmatprep.subr.mxu0 0.0
        %1597 = vmatpush1.msra.mxu0 %v393
        %1598 = vmatprep.subr.mxu0 0.0
        %1599 = vmatpush1.msra.mxu0 %v392
        %1600 = vmatprep.subr.mxu0 0.0
        %1601 = vmatpush1.msra.mxu0 %v391
        %1602 = vmatprep.subr.mxu0 0.0
        %1603 = vmatpush1.msra.mxu0 %v390
        %1604 = vmatprep.subr.mxu0 0.0
        %1605 = vmatpush1.msra.mxu0 %v389
        %1606 = vmatprep.subr.mxu0 0.0
        %1607 = vmatpush1.msra.mxu0 %v388
        %1608 = vmatprep.subr.mxu0 0.0
        %1609 = vmatpush1.msra.mxu0 %v387
        %1610 = vmatprep.subr.mxu0 0.0
        %1611 = vmatpush1.msra.mxu0 %v386
        %1612 = vmatprep.subr.mxu0 0.0
        %1613 = vmatpush1.msra.mxu0 %v385
        %1614 = vmatprep.subr.mxu0 0.0
        %1615 = vmatpush1.msra.mxu0 %v384
        %1616 = vmatprep.subr.mxu0 0.0
        %1617 = vmatpush1.msra.mxu0 %v383
        %1618 = vmatprep.subr.mxu0 0.0
        %1619 = vmatpush1.msra.mxu0 %v382
        %1620 = vmatprep.subr.mxu0 0.0
        %1621 = vmatpush2.msra.mxu0 0.0
        %1622 = vmatprep.subr.mxu0 0.0
        %1623 = vmatpush2.msra.mxu0 0.0
        %1624 = vmatprep.subr.mxu0 0.0
        %1625 = vmatpush2.msra.mxu0 0.0
        %1626 = vmatprep.subr.mxu0 0.0
        %1627 = vmatpush2.msra.mxu0 0.0
        %1628 = vmatprep.subr.mxu0 0.0
        %1629 = vmatpush2.msra.mxu0 0.0
        %1630 = vmatprep.subr.mxu0 0.0
        %1631 = vmatpush2.msra.mxu0 0.0
        %1632 = vmatprep.subr.mxu0 0.0
        %1633 = vmatpush2.msra.mxu0 0.0
        %1634 = vmatprep.subr.mxu0 0.0
        %1635 = vmatpush2.msra.mxu0 0.0
        %1636 = vmatprep.subr.mxu0 0.0
        %1637 = vmatpush2.msra.mxu0 0.0
        %1638 = vmatprep.subr.mxu0 0.0
        %1639 = vmatpush2.msra.mxu0 0.0
        %1640 = vmatprep.subr.mxu0 0.0
        %1641 = vmatpush2.msra.mxu0 0.0
        %1642 = vmatprep.subr.mxu0 0.0
        %1643 = vmatpush2.msra.mxu0 0.0
        %1644 = vmatprep.subr.mxu0 0.0
        %1645 = vmatpush2.msra.mxu0 0.0
        %1646 = vmatprep.subr.mxu0 0.0
        %1647 = vmatpush2.msra.mxu0 0.0
        %1648 = vmatprep.subr.mxu0 0.0
        %1649 = vmatpush2.msra.mxu0 0.0
        %1650 = vmatprep.subr.mxu0 0.0
        %1651 = vmatpush2.msra.mxu0 0.0
        %1652 = vmatprep.mubr.f32.mxu0 0.0
        %1653 = vmatmul.mubr.f32.gmra.mxu0 %v585
        %v1654 = vpop.f32.mrf.mxu0
        %v1655 = vadd.f32 %v1430, %v1654
        %v1656 = vpop.f32.mrf.mxu0
        %1657 = vmatprep.mubr.f32.mxu0 0.0
        %1658 = vmatmul.mubr.f32.gmra.mxu0 %v672
        %v1659 = vpop.f32.mrf.mxu0
        %v1660 = vadd.f32 %v1435, %v1659
        %v1661 = vpop.f32.mrf.mxu0
        %1662 = vmatprep.mubr.f32.mxu0 0.0
        %1663 = vmatmul.mubr.f32.gmra.mxu0 %v587
        %v1664 = vpop.f32.mrf.mxu0
        %v1665 = vadd.f32 %v1440, %v1664
        %v1666 = vpop.f32.mrf.mxu0
        %1667 = vmatprep.mubr.f32.mxu0 0.0
        %1668 = vmatmul.mubr.f32.gmra.mxu0 %v673
        %v1669 = vpop.f32.mrf.mxu0
        %v1670 = vadd.f32 %v1445, %v1669
        %v1671 = vpop.f32.mrf.mxu0
        %1672 = vmatprep.mubr.f32.mxu0 0.0
        %1673 = vmatmul.mubr.f32.gmra.mxu0 %v589
        %v1674 = vpop.f32.mrf.mxu0
        %v1675 = vadd.f32 %v1450, %v1674
        %v1676 = vpop.f32.mrf.mxu0
        %1677 = vmatprep.mubr.f32.mxu0 0.0
        %1678 = vmatmul.mubr.f32.gmra.mxu0 %v674
        %v1679 = vpop.f32.mrf.mxu0
        %v1680 = vadd.f32 %v1455, %v1679
        %v1681 = vpop.f32.mrf.mxu0
        %1682 = vmatprep.mubr.f32.mxu0 0.0
        %1683 = vmatmul.mubr.f32.gmra.mxu0 %v591
        %v1684 = vpop.f32.mrf.mxu0
        %v1685 = vadd.f32 %v1460, %v1684
        %v1686 = vpop.f32.mrf.mxu0
        %1687 = vmatprep.mubr.f32.mxu0 0.0
        %1688 = vmatmul.mubr.f32.gmra.mxu0 %v675
        %v1689 = vpop.f32.mrf.mxu0
        %v1690 = vadd.f32 %v1465, %v1689
        %v1691 = vpop.f32.mrf.mxu0
        %1692 = vmatprep.mubr.f32.mxu0 0.0
        %1693 = vmatmul.mubr.f32.gmra.mxu0 %v593
        %v1694 = vpop.f32.mrf.mxu0
        %v1695 = vadd.f32 %v1470, %v1694
        %v1696 = vpop.f32.mrf.mxu0
        %1697 = vmatprep.mubr.f32.mxu0 0.0
        %1698 = vmatmul.mubr.f32.gmra.mxu0 %v676
        %v1699 = vpop.f32.mrf.mxu0
        %v1700 = vadd.f32 %v1475, %v1699
        %v1701 = vpop.f32.mrf.mxu0
        %1702 = vmatprep.mubr.f32.mxu0 0.0
        %1703 = vmatmul.mubr.f32.gmra.mxu0 %v595
        %v1704 = vpop.f32.mrf.mxu0
        %v1705 = vadd.f32 %v1480, %v1704
        %v1706 = vpop.f32.mrf.mxu0
        %1707 = vmatprep.mubr.f32.mxu0 0.0
        %1708 = vmatmul.mubr.f32.gmra.mxu0 %v677
        %v1709 = vpop.f32.mrf.mxu0
        %v1710 = vadd.f32 %v1485, %v1709
        %v1711 = vpop.f32.mrf.mxu0
        %1712 = vmatprep.mubr.f32.mxu0 0.0
        %1713 = vmatmul.mubr.f32.gmra.mxu0 %v597
        %v1714 = vpop.f32.mrf.mxu0
        %v1715 = vadd.f32 %v1490, %v1714
        %v1716 = vpop.f32.mrf.mxu0
        %1717 = vmatprep.mubr.f32.mxu0 0.0
        %1718 = vmatmul.mubr.f32.gmra.mxu0 %v678
        %v1719 = vpop.f32.mrf.mxu0
        %v1720 = vadd.f32 %v1495, %v1719
        %v1721 = vpop.f32.mrf.mxu0
        %1722 = vmatprep.mubr.f32.mxu0 0.0
        %1723 = vmatmul.mubr.f32.gmra.mxu0 %v599
        %v1724 = vpop.f32.mrf.mxu0
        %v1725 = vadd.f32 %v1500, %v1724
        %v1726 = vpop.f32.mrf.mxu0
        %1727 = vmatprep.mubr.f32.mxu0 0.0
        %1728 = vmatmul.mubr.f32.gmra.mxu0 %v679
        %v1729 = vpop.f32.mrf.mxu0
        %v1730 = vadd.f32 %v1505, %v1729
        %v1731 = vpop.f32.mrf.mxu0
        %1732 = vmatprep.mubr.f32.mxu0 0.0
        %1733 = vmatmul.mubr.f32.gmra.mxu0 %v601
        %v1734 = vpop.f32.mrf.mxu0
        %v1735 = vadd.f32 %v1510, %v1734
        %v1736 = vpop.f32.mrf.mxu0
        %1737 = vmatprep.mubr.f32.mxu0 0.0
        %1738 = vmatmul.mubr.f32.gmra.mxu0 %v680
        %v1739 = vpop.f32.mrf.mxu0
        %v1740 = vadd.f32 %v1515, %v1739
        %v1741 = vpop.f32.mrf.mxu0
        %1742 = vmatprep.mubr.f32.mxu0 0.0
        %1743 = vmatmul.mubr.f32.gmra.mxu0 %v603
        %v1744 = vpop.f32.mrf.mxu0
        %v1745 = vadd.f32 %v1520, %v1744
        %v1746 = vpop.f32.mrf.mxu0
        %1747 = vmatprep.mubr.f32.mxu0 0.0
        %1748 = vmatmul.mubr.f32.gmra.mxu0 %v681
        %v1749 = vpop.f32.mrf.mxu0
        %v1750 = vadd.f32 %v1525, %v1749
        %v1751 = vpop.f32.mrf.mxu0
        %1752 = vmatprep.mubr.f32.mxu0 0.0
        %1753 = vmatmul.mubr.f32.gmra.mxu0 %v605
        %v1754 = vpop.f32.mrf.mxu0
        %v1755 = vadd.f32 %v1530, %v1754
        %v1756 = vpop.f32.mrf.mxu0
        %1757 = vmatprep.mubr.f32.mxu0 0.0
        %1758 = vmatmul.mubr.f32.gmra.mxu0 %v682
        %v1759 = vpop.f32.mrf.mxu0
        %v1760 = vadd.f32 %v1535, %v1759
        %v1761 = vpop.f32.mrf.mxu0
        %1762 = vmatprep.mubr.f32.mxu0 0.0
        %1763 = vmatmul.mubr.f32.gmra.mxu0 %v607
        %v1764 = vpop.f32.mrf.mxu0
        %v1765 = vadd.f32 %v1540, %v1764
        %v1766 = vpop.f32.mrf.mxu0
        %1767 = vmatprep.mubr.f32.mxu0 0.0
        %1768 = vmatmul.mubr.f32.gmra.mxu0 %v683
        %v1769 = vpop.f32.mrf.mxu0
        %v1770 = vadd.f32 %v1545, %v1769
        %v1771 = vpop.f32.mrf.mxu0
        %1772 = vmatprep.mubr.f32.mxu0 0.0
        %1773 = vmatmul.mubr.f32.gmra.mxu0 %v609
        %v1774 = vpop.f32.mrf.mxu0
        %v1775 = vadd.f32 %v1550, %v1774
        %v1776 = vpop.f32.mrf.mxu0
        %1777 = vmatprep.mubr.f32.mxu0 0.0
        %1778 = vmatmul.mubr.f32.gmra.mxu0 %v684
        %v1779 = vpop.f32.mrf.mxu0
        %v1780 = vadd.f32 %v1555, %v1779
        %v1781 = vpop.f32.mrf.mxu0
        %1782 = vmatprep.mubr.f32.mxu0 0.0
        %1783 = vmatmul.mubr.f32.gmra.mxu0 %v611
        %v1784 = vpop.f32.mrf.mxu0
        %v1785 = vadd.f32 %v1560, %v1784
        %v1786 = vpop.f32.mrf.mxu0
        %1787 = vmatprep.mubr.f32.mxu0 0.0
        %1788 = vmatmul.mubr.f32.gmra.mxu0 %v685
        %v1789 = vpop.f32.mrf.mxu0
        %v1790 = vadd.f32 %v1565, %v1789
        %v1791 = vpop.f32.mrf.mxu0
        %1792 = vmatprep.mubr.f32.mxu0 0.0
        %1793 = vmatmul.mubr.f32.gmra.mxu0 %v613
        %v1794 = vpop.f32.mrf.mxu0
        %v1795 = vadd.f32 %v1570, %v1794
        %v1796 = vpop.f32.mrf.mxu0
        %1797 = vmatprep.mubr.f32.mxu0 0.0
        %1798 = vmatmul.mubr.f32.gmra.mxu0 %v686
        %v1799 = vpop.f32.mrf.mxu0
        %v1800 = vadd.f32 %v1575, %v1799
        %v1801 = vpop.f32.mrf.mxu0
        %1802 = vmatprep.mubr.f32.mxu0 0.0
        %1803 = vmatmul.mubr.f32.gmra.mxu0 %v615
        %v1804 = vpop.f32.mrf.mxu0
        %v1805 = vadd.f32 %v1580, %v1804
        %v1806 = vpop.f32.mrf.mxu0
        %1807 = vmatprep.mubr.f32.mxu0 0.0
        %1808 = vmatmul.mubr.f32.gmra.mxu0 %v687
        %v1809 = vpop.f32.mrf.mxu0
        %v1810 = vadd.f32 %v1585, %v1809
        %v1811 = vpop.f32.mrf.mxu0
        %1812 = vdwg.mxu0
        %v1813 = vadd.f32 %v1655, %v1660
        %v1814 = vadd.f32 %v1813, %v1665
        %v1815 = vadd.f32 %v1814, %v1670
        %v1816 = vadd.f32 %v1815, %v1675
        %v1817 = vadd.f32 %v1816, %v1680
        %v1818 = vadd.f32 %v1817, %v1685
        %v1819 = vadd.f32 %v1818, %v1690
        %v1820 = vadd.f32 %v1819, %v1695
        %v1821 = vadd.f32 %v1820, %v1700
        %v1822 = vadd.f32 %v1821, %v1705
        %v1823 = vadd.f32 %v1822, %v1710
        %v1824 = vadd.f32 %v1823, %v1715
        %v1825 = vadd.f32 %v1824, %v1720
        %v1826 = vadd.f32 %v1825, %v1725
        %v1827 = vadd.f32 %v1826, %v1730
        %v1828 = vadd.f32 %v1827, %v1735
        %v1829 = vadd.f32 %v1828, %v1740
        %v1830 = vadd.f32 %v1829, %v1745
        %v1831 = vadd.f32 %v1830, %v1750
        %v1832 = vadd.f32 %v1831, %v1755
        %v1833 = vadd.f32 %v1832, %v1760
        %v1834 = vadd.f32 %v1833, %v1765
        %v1835 = vadd.f32 %v1834, %v1770
        %v1836 = vadd.f32 %v1835, %v1775
        %v1837 = vadd.f32 %v1836, %v1780
        %v1838 = vadd.f32 %v1837, %v1785
        %v1839 = vadd.f32 %v1838, %v1790
        %v1840 = vadd.f32 %v1839, %v1795
        %v1841 = vadd.f32 %v1840, %v1800
        %v1842 = vadd.f32 %v1841, %v1805
        %v1843 = vadd.f32 %v1842, %v1810
        %v1844 = vrot.slane %v1843, 4
        %v1845 = vadd.f32 %v1843, %v1844
        %v1846 = vrot.slane %v1845, 2
        %v1847 = vadd.f32 %v1845, %v1846
        %v1848 = vrot.slane %v1847, 1
        %v1849 = vadd.f32 %v1847, %v1848
        %v1850 = vmul.f32 %v1849, 0.00390625
        %v1851 = vmul.f32 %v1655, %v1655
        %v1852 = vmul.f32 %v1660, %v1660
        %v1853 = vmul.f32 %v1665, %v1665
        %v1854 = vmul.f32 %v1670, %v1670
        %v1855 = vmul.f32 %v1675, %v1675
        %v1856 = vmul.f32 %v1680, %v1680
        %v1857 = vmul.f32 %v1685, %v1685
        %v1858 = vmul.f32 %v1690, %v1690
        %v1859 = vmul.f32 %v1695, %v1695
        %v1860 = vmul.f32 %v1700, %v1700
        %v1861 = vmul.f32 %v1705, %v1705
        %v1862 = vmul.f32 %v1710, %v1710
        %v1863 = vmul.f32 %v1715, %v1715
        %v1864 = vmul.f32 %v1720, %v1720
        %v1865 = vmul.f32 %v1725, %v1725
        %v1866 = vmul.f32 %v1730, %v1730
        %v1867 = vmul.f32 %v1735, %v1735
        %v1868 = vmul.f32 %v1740, %v1740
        %v1869 = vmul.f32 %v1745, %v1745
        %v1870 = vmul.f32 %v1750, %v1750
        %v1871 = vmul.f32 %v1755, %v1755
        %v1872 = vmul.f32 %v1760, %v1760
        %v1873 = vmul.f32 %v1765, %v1765
        %v1874 = vmul.f32 %v1770, %v1770
        %v1875 = vmul.f32 %v1775, %v1775
        %v1876 = vmul.f32 %v1780, %v1780
        %v1877 = vmul.f32 %v1785, %v1785
        %v1878 = vmul.f32 %v1790, %v1790
        %v1879 = vmul.f32 %v1795, %v1795
        %v1880 = vmul.f32 %v1800, %v1800
        %v1881 = vmul.f32 %v1805, %v1805
        %v1882 = vmul.f32 %v1810, %v1810
        %v1883 = vadd.f32 %v1851, %v1852
        %v1884 = vadd.f32 %v1883, %v1853
        %v1885 = vadd.f32 %v1884, %v1854
        %v1886 = vadd.f32 %v1885, %v1855
        %v1887 = vadd.f32 %v1886, %v1856
        %v1888 = vadd.f32 %v1887, %v1857
        %v1889 = vadd.f32 %v1888, %v1858
        %v1890 = vadd.f32 %v1889, %v1859
        %v1891 = vadd.f32 %v1890, %v1860
        %v1892 = vadd.f32 %v1891, %v1861
        %v1893 = vadd.f32 %v1892, %v1862
        %v1894 = vadd.f32 %v1893, %v1863
        %v1895 = vadd.f32 %v1894, %v1864
        %v1896 = vadd.f32 %v1895, %v1865
        %v1897 = vadd.f32 %v1896, %v1866
        %v1898 = vadd.f32 %v1897, %v1867
        %v1899 = vadd.f32 %v1898, %v1868
        %v1900 = vadd.f32 %v1899, %v1869
        %v1901 = vadd.f32 %v1900, %v1870
        %v1902 = vadd.f32 %v1901, %v1871
        %v1903 = vadd.f32 %v1902, %v1872
        %v1904 = vadd.f32 %v1903, %v1873
        %v1905 = vadd.f32 %v1904, %v1874
        %v1906 = vadd.f32 %v1905, %v1875
        %v1907 = vadd.f32 %v1906, %v1876
        %v1908 = vadd.f32 %v1907, %v1877
        %v1909 = vadd.f32 %v1908, %v1878
        %v1910 = vadd.f32 %v1909, %v1879
        %v1911 = vadd.f32 %v1910, %v1880
        %v1912 = vadd.f32 %v1911, %v1881
        %v1913 = vadd.f32 %v1912, %v1882
        %v1914 = vrot.slane %v1913, 4
        %v1915 = vadd.f32 %v1913, %v1914
        %v1916 = vrot.slane %v1915, 2
        %v1917 = vadd.f32 %v1915, %v1916
        %v1918 = vrot.slane %v1917, 1
        %v1919 = vadd.f32 %v1917, %v1918
        %v1920 = vmul.f32 %v1919, 0.00390625
        %v1921 = vmul.f32 %v1850, %v1850
        %v1922 = vsub.f32 %v1920, %v1921
        %v1923 = vmax.f32 %v1922, 0.0
        %v1924 = vadd.f32 %v1923, 1e-05
        %v1925 = vrsqrt.pop %v1924
        %v1926 = vsub.f32 %v1655, %v1850
        %v1927 = vsub.f32 %v1660, %v1850
        %v1928 = vsub.f32 %v1665, %v1850
        %v1929 = vsub.f32 %v1670, %v1850
        %v1930 = vsub.f32 %v1675, %v1850
        %v1931 = vsub.f32 %v1680, %v1850
        %v1932 = vsub.f32 %v1685, %v1850
        %v1933 = vsub.f32 %v1690, %v1850
        %v1934 = vsub.f32 %v1695, %v1850
        %v1935 = vsub.f32 %v1700, %v1850
        %v1936 = vsub.f32 %v1705, %v1850
        %v1937 = vsub.f32 %v1710, %v1850
        %v1938 = vsub.f32 %v1715, %v1850
        %v1939 = vsub.f32 %v1720, %v1850
        %v1940 = vsub.f32 %v1725, %v1850
        %v1941 = vsub.f32 %v1730, %v1850
        %v1942 = vsub.f32 %v1735, %v1850
        %v1943 = vsub.f32 %v1740, %v1850
        %v1944 = vsub.f32 %v1745, %v1850
        %v1945 = vsub.f32 %v1750, %v1850
        %v1946 = vsub.f32 %v1755, %v1850
        %v1947 = vsub.f32 %v1760, %v1850
        %v1948 = vsub.f32 %v1765, %v1850
        %v1949 = vsub.f32 %v1770, %v1850
        %v1950 = vsub.f32 %v1775, %v1850
        %v1951 = vsub.f32 %v1780, %v1850
        %v1952 = vsub.f32 %v1785, %v1850
        %v1953 = vsub.f32 %v1790, %v1850
        %v1954 = vsub.f32 %v1795, %v1850
        %v1955 = vsub.f32 %v1800, %v1850
        %v1956 = vsub.f32 %v1805, %v1850
        %v1957 = vsub.f32 %v1810, %v1850
        %vm1958 = vcmp.ge.f32.partialorder %v1926, 0.0
        %vm1959 = vcmp.ge.f32.partialorder %v1927, 0.0
        %vm1960 = vcmp.ge.f32.partialorder %v1928, 0.0
        %vm1961 = vcmp.ge.f32.partialorder %v1929, 0.0
        %vm1962 = vcmp.ge.f32.partialorder %v1930, 0.0
        %vm1963 = vcmp.ge.f32.partialorder %v1931, 0.0
        %vm1964 = vcmp.ge.f32.partialorder %v1932, 0.0
        %vm1965 = vcmp.ge.f32.partialorder %v1933, 0.0
        %vm1966 = vcmp.ge.f32.partialorder %v1934, 0.0
        %vm1967 = vcmp.ge.f32.partialorder %v1935, 0.0
        %vm1968 = vcmp.ge.f32.partialorder %v1936, 0.0
        %vm1969 = vcmp.ge.f32.partialorder %v1937, 0.0
        %vm1970 = vcmp.ge.f32.partialorder %v1938, 0.0
        %vm1971 = vcmp.ge.f32.partialorder %v1939, 0.0
        %vm1972 = vcmp.ge.f32.partialorder %v1940, 0.0
        %vm1973 = vcmp.ge.f32.partialorder %v1941, 0.0
        %vm1974 = vcmp.ge.f32.partialorder %v1942, 0.0
        %vm1975 = vcmp.ge.f32.partialorder %v1943, 0.0
        %vm1976 = vcmp.ge.f32.partialorder %v1944, 0.0
        %vm1977 = vcmp.ge.f32.partialorder %v1945, 0.0
        %vm1978 = vcmp.ge.f32.partialorder %v1946, 0.0
        %vm1979 = vcmp.ge.f32.partialorder %v1947, 0.0
        %vm1980 = vcmp.ge.f32.partialorder %v1948, 0.0
        %vm1981 = vcmp.ge.f32.partialorder %v1949, 0.0
        %vm1982 = vcmp.ge.f32.partialorder %v1950, 0.0
        %vm1983 = vcmp.ge.f32.partialorder %v1951, 0.0
        %vm1984 = vcmp.ge.f32.partialorder %v1952, 0.0
        %vm1985 = vcmp.ge.f32.partialorder %v1953, 0.0
        %vm1986 = vcmp.ge.f32.partialorder %v1954, 0.0
        %vm1987 = vcmp.ge.f32.partialorder %v1955, 0.0
        %vm1988 = vcmp.ge.f32.partialorder %v1956, 0.0
        %vm1989 = vcmp.ge.f32.partialorder %v1957, 0.0
        %v1990 = vmul.f32 %v1925, 0.2
        %v1991 = vsel %vm1958, %v1925, %v1990
        %v1992 = vsel %vm1959, %v1925, %v1990
        %v1993 = vsel %vm1960, %v1925, %v1990
        %v1994 = vsel %vm1961, %v1925, %v1990
        %v1995 = vsel %vm1962, %v1925, %v1990
        %v1996 = vsel %vm1963, %v1925, %v1990
        %v1997 = vsel %vm1964, %v1925, %v1990
        %v1998 = vsel %vm1965, %v1925, %v1990
        %v1999 = vsel %vm1966, %v1925, %v1990
        %v2000 = vsel %vm1967, %v1925, %v1990
        %v2001 = vsel %vm1968, %v1925, %v1990
        %v2002 = vsel %vm1969, %v1925, %v1990
        %v2003 = vsel %vm1970, %v1925, %v1990
        %v2004 = vsel %vm1971, %v1925, %v1990
        %v2005 = vsel %vm1972, %v1925, %v1990
        %v2006 = vsel %vm1973, %v1925, %v1990
        %v2007 = vsel %vm1974, %v1925, %v1990
        %v2008 = vsel %vm1975, %v1925, %v1990
        %v2009 = vsel %vm1976, %v1925, %v1990
        %v2010 = vsel %vm1977, %v1925, %v1990
        %v2011 = vsel %vm1978, %v1925, %v1990
        %v2012 = vsel %vm1979, %v1925, %v1990
        %v2013 = vsel %vm1980, %v1925, %v1990
        %v2014 = vsel %vm1981, %v1925, %v1990
        %v2015 = vsel %vm1982, %v1925, %v1990
        %v2016 = vsel %vm1983, %v1925, %v1990
        %v2017 = vsel %vm1984, %v1925, %v1990
        %v2018 = vsel %vm1985, %v1925, %v1990
        %v2019 = vsel %vm1986, %v1925, %v1990
        %v2020 = vsel %vm1987, %v1925, %v1990
        %v2021 = vsel %vm1988, %v1925, %v1990
        %v2022 = vsel %vm1989, %v1925, %v1990
        %v2023 = vmul.f32 %v1926, %v1991
        %v2024 = vmul.f32 %v1927, %v1992
        %v2025 = vmul.f32 %v1928, %v1993
        %v2026 = vmul.f32 %v1929, %v1994
        %v2027 = vmul.f32 %v1930, %v1995
        %v2028 = vmul.f32 %v1931, %v1996
        %v2029 = vmul.f32 %v1932, %v1997
        %v2030 = vmul.f32 %v1933, %v1998
        %v2031 = vmul.f32 %v1934, %v1999
        %v2032 = vmul.f32 %v1935, %v2000
        %v2033 = vmul.f32 %v1936, %v2001
        %v2034 = vmul.f32 %v1937, %v2002
        %v2035 = vmul.f32 %v1938, %v2003
        %v2036 = vmul.f32 %v1939, %v2004
        %v2037 = vmul.f32 %v1940, %v2005
        %v2038 = vmul.f32 %v1941, %v2006
        %v2039 = vmul.f32 %v1942, %v2007
        %v2040 = vmul.f32 %v1943, %v2008
        %v2041 = vmul.f32 %v1944, %v2009
        %v2042 = vmul.f32 %v1945, %v2010
        %v2043 = vmul.f32 %v1946, %v2011
        %v2044 = vmul.f32 %v1947, %v2012
        %v2045 = vmul.f32 %v1948, %v2013
        %v2046 = vmul.f32 %v1949, %v2014
        %v2047 = vmul.f32 %v1950, %v2015
        %v2048 = vmul.f32 %v1951, %v2016
        %v2049 = vmul.f32 %v1952, %v2017
        %v2050 = vmul.f32 %v1953, %v2018
        %v2051 = vmul.f32 %v1954, %v2019
        %v2052 = vmul.f32 %v1955, %v2020
        %v2053 = vmul.f32 %v1956, %v2021
        %v2054 = vmul.f32 %v1957, %v2022
        %v2055 = vld [vmem:[#allocation7] sm:$0xff]
        %v2056 = vld [vmem:[#allocation7 + $0x8] sm:$0xff]
        %v2057 = vld [vmem:[#allocation7 + $0x10] sm:$0xff]
        %v2058 = vld [vmem:[#allocation7 + $0x18] sm:$0xff]
        %v2059 = vld [vmem:[#allocation7 + $0x20] sm:$0xff]
        %v2060 = vld [vmem:[#allocation7 + $0x28] sm:$0xff]
        %v2061 = vld [vmem:[#allocation7 + $0x30] sm:$0xff]
        %v2062 = vld [vmem:[#allocation7 + $0x38] sm:$0xff]
        %v2063 = vld [vmem:[#allocation7 + $0x40] sm:$0xff]
        %v2064 = vld [vmem:[#allocation7 + $0x48] sm:$0xff]
        %v2065 = vld [vmem:[#allocation7 + $0x50] sm:$0xff]
        %v2066 = vld [vmem:[#allocation7 + $0x58] sm:$0xff]
        %v2067 = vld [vmem:[#allocation7 + $0x60] sm:$0xff]
        %v2068 = vld [vmem:[#allocation7 + $0x68] sm:$0xff]
        %v2069 = vld [vmem:[#allocation7 + $0x70] sm:$0xff]
        %v2070 = vld [vmem:[#allocation7 + $0x78] sm:$0xff]
        %v2071 = vld [vmem:[#allocation7 + $0x80] sm:$0xff]
        %v2072 = vld [vmem:[#allocation7 + $0x88] sm:$0xff]
        %v2073 = vld [vmem:[#allocation7 + $0x90] sm:$0xff]
        %v2074 = vld [vmem:[#allocation7 + $0x98] sm:$0xff]
        %v2075 = vld [vmem:[#allocation7 + $0xa0] sm:$0xff]
        %v2076 = vld [vmem:[#allocation7 + $0xa8] sm:$0xff]
        %v2077 = vld [vmem:[#allocation7 + $0xb0] sm:$0xff]
        %v2078 = vld [vmem:[#allocation7 + $0xb8] sm:$0xff]
        %v2079 = vld [vmem:[#allocation7 + $0xc0] sm:$0xff]
        %v2080 = vld [vmem:[#allocation7 + $0xc8] sm:$0xff]
        %v2081 = vld [vmem:[#allocation7 + $0xd0] sm:$0xff]
        %v2082 = vld [vmem:[#allocation7 + $0xd8] sm:$0xff]
        %v2083 = vld [vmem:[#allocation7 + $0xe0] sm:$0xff]
        %v2084 = vld [vmem:[#allocation7 + $0xe8] sm:$0xff]
        %v2085 = vld [vmem:[#allocation7 + $0xf0] sm:$0xff]
        %v2086 = vld [vmem:[#allocation7 + $0xf8] sm:$0xff]
        %v2087 = vld [vmem:[#allocation7 + $0x100] sm:$0xff]
        %v2088 = vld [vmem:[#allocation7 + $0x108] sm:$0xff]
        %v2089 = vld [vmem:[#allocation7 + $0x110] sm:$0xff]
        %v2090 = vld [vmem:[#allocation7 + $0x118] sm:$0xff]
        %v2091 = vld [vmem:[#allocation7 + $0x120] sm:$0xff]
        %v2092 = vld [vmem:[#allocation7 + $0x128] sm:$0xff]
        %v2093 = vld [vmem:[#allocation7 + $0x130] sm:$0xff]
        %v2094 = vld [vmem:[#allocation7 + $0x138] sm:$0xff]
        %v2095 = vld [vmem:[#allocation7 + $0x140] sm:$0xff]
        %v2096 = vld [vmem:[#allocation7 + $0x148] sm:$0xff]
        %v2097 = vld [vmem:[#allocation7 + $0x150] sm:$0xff]
        %v2098 = vld [vmem:[#allocation7 + $0x158] sm:$0xff]
        %v2099 = vld [vmem:[#allocation7 + $0x160] sm:$0xff]
        %v2100 = vld [vmem:[#allocation7 + $0x168] sm:$0xff]
        %v2101 = vld [vmem:[#allocation7 + $0x170] sm:$0xff]
        %v2102 = vld [vmem:[#allocation7 + $0x178] sm:$0xff]
        %v2103 = vld [vmem:[#allocation7 + $0x180] sm:$0xff]
        %v2104 = vld [vmem:[#allocation7 + $0x188] sm:$0xff]
        %v2105 = vld [vmem:[#allocation7 + $0x190] sm:$0xff]
        %v2106 = vld [vmem:[#allocation7 + $0x198] sm:$0xff]
        %v2107 = vld [vmem:[#allocation7 + $0x1a0] sm:$0xff]
        %v2108 = vld [vmem:[#allocation7 + $0x1a8] sm:$0xff]
        %v2109 = vld [vmem:[#allocation7 + $0x1b0] sm:$0xff]
        %v2110 = vld [vmem:[#allocation7 + $0x1b8] sm:$0xff]
        %v2111 = vld [vmem:[#allocation7 + $0x1c0] sm:$0xff]
        %v2112 = vld [vmem:[#allocation7 + $0x1c8] sm:$0xff]
        %v2113 = vld [vmem:[#allocation7 + $0x1d0] sm:$0xff]
        %v2114 = vld [vmem:[#allocation7 + $0x1d8] sm:$0xff]
        %v2115 = vld [vmem:[#allocation7 + $0x1e0] sm:$0xff]
        %v2116 = vld [vmem:[#allocation7 + $0x1e8] sm:$0xff]
        %v2117 = vld [vmem:[#allocation7 + $0x1f0] sm:$0xff]
        %v2118 = vld [vmem:[#allocation7 + $0x1f8] sm:$0xff]
        %v2119 = vld [vmem:[#allocation7 + $0x200] sm:$0xff]
        %v2120 = vld [vmem:[#allocation7 + $0x208] sm:$0xff]
        %v2121 = vld [vmem:[#allocation7 + $0x210] sm:$0xff]
        %v2122 = vld [vmem:[#allocation7 + $0x218] sm:$0xff]
        %v2123 = vld [vmem:[#allocation7 + $0x220] sm:$0xff]
        %v2124 = vld [vmem:[#allocation7 + $0x228] sm:$0xff]
        %v2125 = vld [vmem:[#allocation7 + $0x230] sm:$0xff]
        %v2126 = vld [vmem:[#allocation7 + $0x238] sm:$0xff]
        %v2127 = vld [vmem:[#allocation7 + $0x240] sm:$0xff]
        %v2128 = vld [vmem:[#allocation7 + $0x248] sm:$0xff]
        %v2129 = vld [vmem:[#allocation7 + $0x250] sm:$0xff]
        %v2130 = vld [vmem:[#allocation7 + $0x258] sm:$0xff]
        %v2131 = vld [vmem:[#allocation7 + $0x260] sm:$0xff]
        %v2132 = vld [vmem:[#allocation7 + $0x268] sm:$0xff]
        %v2133 = vld [vmem:[#allocation7 + $0x270] sm:$0xff]
        %v2134 = vld [vmem:[#allocation7 + $0x278] sm:$0xff]
        %v2135 = vld [vmem:[#allocation7 + $0x280] sm:$0xff]
        %v2136 = vld [vmem:[#allocation7 + $0x288] sm:$0xff]
        %v2137 = vld [vmem:[#allocation7 + $0x290] sm:$0xff]
        %v2138 = vld [vmem:[#allocation7 + $0x298] sm:$0xff]
        %v2139 = vld [vmem:[#allocation7 + $0x2a0] sm:$0xff]
        %v2140 = vld [vmem:[#allocation7 + $0x2a8] sm:$0xff]
        %v2141 = vld [vmem:[#allocation7 + $0x2b0] sm:$0xff]
        %v2142 = vld [vmem:[#allocation7 + $0x2b8] sm:$0xff]
        %v2143 = vld [vmem:[#allocation7 + $0x2c0] sm:$0xff]
        %v2144 = vld [vmem:[#allocation7 + $0x2c8] sm:$0xff]
        %v2145 = vld [vmem:[#allocation7 + $0x2d0] sm:$0xff]
        %v2146 = vld [vmem:[#allocation7 + $0x2d8] sm:$0xff]
        %v2147 = vld [vmem:[#allocation7 + $0x2e0] sm:$0xff]
        %v2148 = vld [vmem:[#allocation7 + $0x2e8] sm:$0xff]
        %v2149 = vld [vmem:[#allocation7 + $0x2f0] sm:$0xff]
        %v2150 = vld [vmem:[#allocation7 + $0x2f8] sm:$0xff]
        %v2151 = vld [vmem:[#allocation7 + $0x300] sm:$0xff]
        %v2152 = vld [vmem:[#allocation7 + $0x308] sm:$0xff]
        %v2153 = vld [vmem:[#allocation7 + $0x310] sm:$0xff]
        %v2154 = vld [vmem:[#allocation7 + $0x318] sm:$0xff]
        %v2155 = vld [vmem:[#allocation7 + $0x320] sm:$0xff]
        %v2156 = vld [vmem:[#allocation7 + $0x328] sm:$0xff]
        %v2157 = vld [vmem:[#allocation7 + $0x330] sm:$0xff]
        %v2158 = vld [vmem:[#allocation7 + $0x338] sm:$0xff]
        %v2159 = vld [vmem:[#allocation7 + $0x340] sm:$0xff]
        %v2160 = vld [vmem:[#allocation7 + $0x348] sm:$0xff]
        %v2161 = vld [vmem:[#allocation7 + $0x350] sm:$0xff]
        %v2162 = vld [vmem:[#allocation7 + $0x358] sm:$0xff]
        %v2163 = vld [vmem:[#allocation7 + $0x360] sm:$0xff]
        %v2164 = vld [vmem:[#allocation7 + $0x368] sm:$0xff]
        %v2165 = vld [vmem:[#allocation7 + $0x370] sm:$0xff]
        %v2166 = vld [vmem:[#allocation7 + $0x378] sm:$0xff]
        %v2167 = vld [vmem:[#allocation7 + $0x380] sm:$0xff]
        %v2168 = vld [vmem:[#allocation7 + $0x388] sm:$0xff]
        %v2169 = vld [vmem:[#allocation7 + $0x390] sm:$0xff]
        %v2170 = vld [vmem:[#allocation7 + $0x398] sm:$0xff]
        %v2171 = vld [vmem:[#allocation7 + $0x3a0] sm:$0xff]
        %v2172 = vld [vmem:[#allocation7 + $0x3a8] sm:$0xff]
        %v2173 = vld [vmem:[#allocation7 + $0x3b0] sm:$0xff]
        %v2174 = vld [vmem:[#allocation7 + $0x3b8] sm:$0xff]
        %v2175 = vld [vmem:[#allocation7 + $0x3c0] sm:$0xff]
        %v2176 = vld [vmem:[#allocation7 + $0x3c8] sm:$0xff]
        %v2177 = vld [vmem:[#allocation7 + $0x3d0] sm:$0xff]
        %v2178 = vld [vmem:[#allocation7 + $0x3d8] sm:$0xff]
        %v2179 = vld [vmem:[#allocation7 + $0x3e0] sm:$0xff]
        %v2180 = vld [vmem:[#allocation7 + $0x3e8] sm:$0xff]
        %v2181 = vld [vmem:[#allocation7 + $0x3f0] sm:$0xff]
        %v2182 = vld [vmem:[#allocation7 + $0x3f8] sm:$0xff]
        %v2183 = vld [vmem:[#allocation7 + $0x400] sm:$0xff]
        %v2184 = vld [vmem:[#allocation7 + $0x408] sm:$0xff]
        %v2185 = vld [vmem:[#allocation7 + $0x410] sm:$0xff]
        %v2186 = vld [vmem:[#allocation7 + $0x418] sm:$0xff]
        %v2187 = vld [vmem:[#allocation7 + $0x420] sm:$0xff]
        %v2188 = vld [vmem:[#allocation7 + $0x428] sm:$0xff]
        %v2189 = vld [vmem:[#allocation7 + $0x430] sm:$0xff]
        %v2190 = vld [vmem:[#allocation7 + $0x438] sm:$0xff]
        %v2191 = vld [vmem:[#allocation7 + $0x440] sm:$0xff]
        %v2192 = vld [vmem:[#allocation7 + $0x448] sm:$0xff]
        %v2193 = vld [vmem:[#allocation7 + $0x450] sm:$0xff]
        %v2194 = vld [vmem:[#allocation7 + $0x458] sm:$0xff]
        %v2195 = vld [vmem:[#allocation7 + $0x460] sm:$0xff]
        %v2196 = vld [vmem:[#allocation7 + $0x468] sm:$0xff]
        %v2197 = vld [vmem:[#allocation7 + $0x470] sm:$0xff]
        %v2198 = vld [vmem:[#allocation7 + $0x478] sm:$0xff]
        %v2215 = vrot.slane %v2025, 1
        %v2216 = vrot.slane %v2023, 1
        %v2217 = vrot.slane %v2027, 1
        %v2218 = vrot.slane %v2029, 1
        %v2219 = vrot.slane %v2031, 1
        %v2220 = vrot.slane %v2033, 1
        %v2221 = vrot.slane %v2035, 1
        %v2222 = vrot.slane %v2037, 1
        %v2223 = vrot.slane %v2039, 1
        %v2224 = vrot.slane %v2041, 1
        %v2225 = vrot.slane %v2043, 1
        %v2226 = vrot.slane %v2045, 1
        %v2227 = vrot.slane %v2047, 1
        %v2228 = vrot.slane %v2049, 1
        %v2229 = vrot.slane %v2051, 1
        %v2230 = vrot.slane %v2053, 1
        %v2263 = vrot.slane %v2025, 7
        %v2264 = vrot.slane %v2026, 7
        %v2265 = vsel %vm470, %v2263, %v2264
        %v2266 = vrot.slane %v2023, 7
        %v2267 = vrot.slane %v2024, 7
        %v2268 = vsel %vm470, %v2266, %v2267
        %v2269 = vrot.slane %v2027, 7
        %v2270 = vrot.slane %v2028, 7
        %v2271 = vsel %vm470, %v2269, %v2270
        %v2272 = vrot.slane %v2029, 7
        %v2273 = vrot.slane %v2030, 7
        %v2274 = vsel %vm470, %v2272, %v2273
        %v2275 = vrot.slane %v2031, 7
        %v2276 = vrot.slane %v2032, 7
        %v2277 = vsel %vm470, %v2275, %v2276
        %v2278 = vrot.slane %v2033, 7
        %v2279 = vrot.slane %v2034, 7
        %v2280 = vsel %vm470, %v2278, %v2279
        %v2281 = vrot.slane %v2035, 7
        %v2282 = vrot.slane %v2036, 7
        %v2283 = vsel %vm470, %v2281, %v2282
        %v2284 = vrot.slane %v2037, 7
        %v2285 = vrot.slane %v2038, 7
        %v2286 = vsel %vm470, %v2284, %v2285
        %v2287 = vrot.slane %v2039, 7
        %v2288 = vrot.slane %v2040, 7
        %v2289 = vsel %vm470, %v2287, %v2288
        %v2290 = vrot.slane %v2041, 7
        %v2291 = vrot.slane %v2042, 7
        %v2292 = vsel %vm470, %v2290, %v2291
        %v2293 = vrot.slane %v2043, 7
        %v2294 = vrot.slane %v2044, 7
        %v2295 = vsel %vm470, %v2293, %v2294
        %v2296 = vrot.slane %v2045, 7
        %v2297 = vrot.slane %v2046, 7
        %v2298 = vsel %vm470, %v2296, %v2297
        %v2299 = vrot.slane %v2047, 7
        %v2300 = vrot.slane %v2048, 7
        %v2301 = vsel %vm470, %v2299, %v2300
        %v2302 = vrot.slane %v2049, 7
        %v2303 = vrot.slane %v2050, 7
        %v2304 = vsel %vm470, %v2302, %v2303
        %v2305 = vrot.slane %v2051, 7
        %v2306 = vrot.slane %v2052, 7
        %v2307 = vsel %vm470, %v2305, %v2306
        %v2308 = vrot.slane %v2053, 7
        %v2309 = vrot.slane %v2054, 7
        %v2310 = vsel %vm470, %v2308, %v2309
        %v2343 = vsel %vm470, %v2215, %v2263
        %v2344 = vsel %vm470, %v2216, %v2266
        %v2345 = vsel %vm470, %v2217, %v2269
        %v2346 = vsel %vm470, %v2218, %v2272
        %v2347 = vsel %vm470, %v2219, %v2275
        %v2348 = vsel %vm470, %v2220, %v2278
        %v2349 = vsel %vm470, %v2221, %v2281
        %v2350 = vsel %vm470, %v2222, %v2284
        %v2351 = vsel %vm470, %v2223, %v2287
        %v2352 = vsel %vm470, %v2224, %v2290
        %v2353 = vsel %vm470, %v2225, %v2293
        %v2354 = vsel %vm470, %v2226, %v2296
        %v2355 = vsel %vm470, %v2227, %v2299
        %v2356 = vsel %vm470, %v2228, %v2302
        %v2357 = vsel %vm470, %v2229, %v2305
        %v2358 = vsel %vm470, %v2230, %v2308
        %v2359 = vrot.slane %v2026, 1
        %v2360 = vsel %vm579, %v2215, %v2359
        %v2361 = vrot.slane %v2024, 1
        %v2362 = vsel %vm579, %v2216, %v2361
        %v2363 = vrot.slane %v2028, 1
        %v2364 = vsel %vm579, %v2217, %v2363
        %v2365 = vrot.slane %v2030, 1
        %v2366 = vsel %vm579, %v2218, %v2365
        %v2367 = vrot.slane %v2032, 1
        %v2368 = vsel %vm579, %v2219, %v2367
        %v2369 = vrot.slane %v2034, 1
        %v2370 = vsel %vm579, %v2220, %v2369
        %v2371 = vrot.slane %v2036, 1
        %v2372 = vsel %vm579, %v2221, %v2371
        %v2373 = vrot.slane %v2038, 1
        %v2374 = vsel %vm579, %v2222, %v2373
        %v2375 = vrot.slane %v2040, 1
        %v2376 = vsel %vm579, %v2223, %v2375
        %v2377 = vrot.slane %v2042, 1
        %v2378 = vsel %vm579, %v2224, %v2377
        %v2379 = vrot.slane %v2044, 1
        %v2380 = vsel %vm579, %v2225, %v2379
        %v2381 = vrot.slane %v2046, 1
        %v2382 = vsel %vm579, %v2226, %v2381
        %v2383 = vrot.slane %v2048, 1
        %v2384 = vsel %vm579, %v2227, %v2383
        %v2385 = vrot.slane %v2050, 1
        %v2386 = vsel %vm579, %v2228, %v2385
        %v2387 = vrot.slane %v2052, 1
        %v2388 = vsel %vm579, %v2229, %v2387
        %v2389 = vrot.slane %v2054, 1
        %v2390 = vsel %vm579, %v2230, %v2389
        %v2439 = vsel %vm579, %v2359, %v2264
        %v2440 = vsel %vm579, %v2361, %v2267
        %v2441 = vsel %vm579, %v2363, %v2270
        %v2442 = vsel %vm579, %v2365, %v2273
        %v2443 = vsel %vm579, %v2367, %v2276
        %v2444 = vsel %vm579, %v2369, %v2279
        %v2445 = vsel %vm579, %v2371, %v2282
        %v2446 = vsel %vm579, %v2373, %v2285
        %v2447 = vsel %vm579, %v2375, %v2288
        %v2448 = vsel %vm579, %v2377, %v2291
        %v2449 = vsel %vm579, %v2379, %v2294
        %v2450 = vsel %vm579, %v2381, %v2297
        %v2451 = vsel %vm579, %v2383, %v2300
        %v2452 = vsel %vm579, %v2385, %v2303
        %v2453 = vsel %vm579, %v2387, %v2306
        %v2454 = vsel %vm579, %v2389, %v2309
        %2455 = vmatprep.subr.mxu0 0.0
        %2456 = vmatpush1.msra.mxu0 %v2070
        %2457 = vmatprep.subr.mxu0 0.0
        %2458 = vmatpush1.msra.mxu0 %v2069
        %2459 = vmatprep.subr.mxu0 0.0
        %2460 = vmatpush1.msra.mxu0 %v2068
        %2461 = vmatprep.subr.mxu0 0.0
        %2462 = vmatpush1.msra.mxu0 %v2067
        %2463 = vmatprep.subr.mxu0 0.0
        %2464 = vmatpush1.msra.mxu0 %v2066
        %2465 = vmatprep.subr.mxu0 0.0
        %2466 = vmatpush1.msra.mxu0 %v2065
        %2467 = vmatprep.subr.mxu0 0.0
        %2468 = vmatpush1.msra.mxu0 %v2064
        %2469 = vmatprep.subr.mxu0 0.0
        %2470 = vmatpush1.msra.mxu0 %v2063
        %2471 = vmatprep.subr.mxu0 0.0
        %2472 = vmatpush1.msra.mxu0 %v2062
        %2473 = vmatprep.subr.mxu0 0.0
        %2474 = vmatpush1.msra.mxu0 %v2061
        %2475 = vmatprep.subr.mxu0 0.0
        %2476 = vmatpush1.msra.mxu0 %v2060
        %2477 = vmatprep.subr.mxu0 0.0
        %2478 = vmatpush1.msra.mxu0 %v2059
        %2479 = vmatprep.subr.mxu0 0.0
        %2480 = vmatpush1.msra.mxu0 %v2058
        %2481 = vmatprep.subr.mxu0 0.0
        %2482 = vmatpush1.msra.mxu0 %v2057
        %2483 = vmatprep.subr.mxu0 0.0
        %2484 = vmatpush1.msra.mxu0 %v2056
        %2485 = vmatprep.subr.mxu0 0.0
        %2486 = vmatpush1.msra.mxu0 %v2055
        %2487 = vmatprep.subr.mxu0 0.0
        %2488 = vmatpush2.msra.mxu0 %v2086
        %2489 = vmatprep.subr.mxu0 0.0
        %2490 = vmatpush2.msra.mxu0 %v2085
        %2491 = vmatprep.subr.mxu0 0.0
        %2492 = vmatpush2.msra.mxu0 %v2084
        %2493 = vmatprep.subr.mxu0 0.0
        %2494 = vmatpush2.msra.mxu0 %v2083
        %2495 = vmatprep.subr.mxu0 0.0
        %2496 = vmatpush2.msra.mxu0 %v2082
        %2497 = vmatprep.subr.mxu0 0.0
        %2498 = vmatpush2.msra.mxu0 %v2081
        %2499 = vmatprep.subr.mxu0 0.0
        %2500 = vmatpush2.msra.mxu0 %v2080
        %2501 = vmatprep.subr.mxu0 0.0
        %2502 = vmatpush2.msra.mxu0 %v2079
        %2503 = vmatprep.subr.mxu0 0.0
        %2504 = vmatpush2.msra.mxu0 %v2078
        %2505 = vmatprep.subr.mxu0 0.0
        %2506 = vmatpush2.msra.mxu0 %v2077
        %2507 = vmatprep.subr.mxu0 0.0
        %2508 = vmatpush2.msra.mxu0 %v2076
        %2509 = vmatprep.subr.mxu0 0.0
        %2510 = vmatpush2.msra.mxu0 %v2075
        %2511 = vmatprep.subr.mxu0 0.0
        %2512 = vmatpush2.msra.mxu0 %v2074
        %2513 = vmatprep.subr.mxu0 0.0
        %2514 = vmatpush2.msra.mxu0 %v2073
        %2515 = vmatprep.subr.mxu0 0.0
        %2516 = vmatpush2.msra.mxu0 %v2072
        %2517 = vmatprep.subr.mxu0 0.0
        %2518 = vmatpush2.msra.mxu0 %v2071
        %2519 = vmatprep.mubr.f32.mxu0 %v2025
        %2520 = vmatmul.mubr.f32.gmra.mxu0 %v2343
        %v2521 = vpop.f32.mrf.mxu0
        %v2522 = vadd.f32 0.0, %v2521
        %v2523 = vpop.f32.mrf.mxu0
        %2524 = vmatprep.mubr.f32.mxu0 %v2026
        %2525 = vmatmul.mubr.f32.gmra.mxu0 %v2265
        %v2526 = vpop.f32.mrf.mxu0
        %v2527 = vadd.f32 0.0, %v2526
        %v2528 = vpop.f32.mrf.mxu0
        %2529 = vmatprep.mubr.f32.mxu0 %v2023
        %2530 = vmatmul.mubr.f32.gmra.mxu0 %v2344
        %v2531 = vpop.f32.mrf.mxu0
        %v2532 = vadd.f32 0.0, %v2531
        %v2533 = vpop.f32.mrf.mxu0
        %2534 = vmatprep.mubr.f32.mxu0 %v2024
        %2535 = vmatmul.mubr.f32.gmra.mxu0 %v2268
        %v2536 = vpop.f32.mrf.mxu0
        %v2537 = vadd.f32 0.0, %v2536
        %v2538 = vpop.f32.mrf.mxu0
        %2539 = vmatprep.mubr.f32.mxu0 %v2025
        %2540 = vmatmul.mubr.f32.gmra.mxu0 %v2343
        %v2541 = vpop.f32.mrf.mxu0
        %v2542 = vadd.f32 0.0, %v2541
        %v2543 = vpop.f32.mrf.mxu0
        %2544 = vmatprep.mubr.f32.mxu0 %v2026
        %2545 = vmatmul.mubr.f32.gmra.mxu0 %v2265
        %v2546 = vpop.f32.mrf.mxu0
        %v2547 = vadd.f32 0.0, %v2546
        %v2548 = vpop.f32.mrf.mxu0
        %2549 = vmatprep.mubr.f32.mxu0 %v2027
        %2550 = vmatmul.mubr.f32.gmra.mxu0 %v2345
        %v2551 = vpop.f32.mrf.mxu0
        %v2552 = vadd.f32 0.0, %v2551
        %v2553 = vpop.f32.mrf.mxu0
        %2554 = vmatprep.mubr.f32.mxu0 %v2028
        %2555 = vmatmul.mubr.f32.gmra.mxu0 %v2271
        %v2556 = vpop.f32.mrf.mxu0
        %v2557 = vadd.f32 0.0, %v2556
        %v2558 = vpop.f32.mrf.mxu0
        %2559 = vmatprep.mubr.f32.mxu0 %v2029
        %2560 = vmatmul.mubr.f32.gmra.mxu0 %v2346
        %v2561 = vpop.f32.mrf.mxu0
        %v2562 = vadd.f32 0.0, %v2561
        %v2563 = vpop.f32.mrf.mxu0
        %2564 = vmatprep.mubr.f32.mxu0 %v2030
        %2565 = vmatmul.mubr.f32.gmra.mxu0 %v2274
        %v2566 = vpop.f32.mrf.mxu0
        %v2567 = vadd.f32 0.0, %v2566
        %v2568 = vpop.f32.mrf.mxu0
        %2569 = vmatprep.mubr.f32.mxu0 %v2031
        %2570 = vmatmul.mubr.f32.gmra.mxu0 %v2347
        %v2571 = vpop.f32.mrf.mxu0
        %v2572 = vadd.f32 0.0, %v2571
        %v2573 = vpop.f32.mrf.mxu0
        %2574 = vmatprep.mubr.f32.mxu0 %v2032
        %2575 = vmatmul.mubr.f32.gmra.mxu0 %v2277
        %v2576 = vpop.f32.mrf.mxu0
        %v2577 = vadd.f32 0.0, %v2576
        %v2578 = vpop.f32.mrf.mxu0
        %2579 = vmatprep.mubr.f32.mxu0 %v2033
        %2580 = vmatmul.mubr.f32.gmra.mxu0 %v2348
        %v2581 = vpop.f32.mrf.mxu0
        %v2582 = vadd.f32 0.0, %v2581
        %v2583 = vpop.f32.mrf.mxu0
        %2584 = vmatprep.mubr.f32.mxu0 %v2034
        %2585 = vmatmul.mubr.f32.gmra.mxu0 %v2280
        %v2586 = vpop.f32.mrf.mxu0
        %v2587 = vadd.f32 0.0, %v2586
        %v2588 = vpop.f32.mrf.mxu0
        %2589 = vmatprep.mubr.f32.mxu0 %v2035
        %2590 = vmatmul.mubr.f32.gmra.mxu0 %v2349
        %v2591 = vpop.f32.mrf.mxu0
        %v2592 = vadd.f32 0.0, %v2591
        %v2593 = vpop.f32.mrf.mxu0
        %2594 = vmatprep.mubr.f32.mxu0 %v2036
        %2595 = vmatmul.mubr.f32.gmra.mxu0 %v2283
        %v2596 = vpop.f32.mrf.mxu0
        %v2597 = vadd.f32 0.0, %v2596
        %v2598 = vpop.f32.mrf.mxu0
        %2599 = vmatprep.mubr.f32.mxu0 %v2037
        %2600 = vmatmul.mubr.f32.gmra.mxu0 %v2350
        %v2601 = vpop.f32.mrf.mxu0
        %v2602 = vadd.f32 0.0, %v2601
        %v2603 = vpop.f32.mrf.mxu0
        %2604 = vmatprep.mubr.f32.mxu0 %v2038
        %2605 = vmatmul.mubr.f32.gmra.mxu0 %v2286
        %v2606 = vpop.f32.mrf.mxu0
        %v2607 = vadd.f32 0.0, %v2606
        %v2608 = vpop.f32.mrf.mxu0
        %2609 = vmatprep.mubr.f32.mxu0 %v2039
        %2610 = vmatmul.mubr.f32.gmra.mxu0 %v2351
        %v2611 = vpop.f32.mrf.mxu0
        %v2612 = vadd.f32 0.0, %v2611
        %v2613 = vpop.f32.mrf.mxu0
        %2614 = vmatprep.mubr.f32.mxu0 %v2040
        %2615 = vmatmul.mubr.f32.gmra.mxu0 %v2289
        %v2616 = vpop.f32.mrf.mxu0
        %v2617 = vadd.f32 0.0, %v2616
        %v2618 = vpop.f32.mrf.mxu0
        %2619 = vmatprep.mubr.f32.mxu0 %v2041
        %2620 = vmatmul.mubr.f32.gmra.mxu0 %v2352
        %v2621 = vpop.f32.mrf.mxu0
        %v2622 = vadd.f32 0.0, %v2621
        %v2623 = vpop.f32.mrf.mxu0
        %2624 = vmatprep.mubr.f32.mxu0 %v2042
        %2625 = vmatmul.mubr.f32.gmra.mxu0 %v2292
        %v2626 = vpop.f32.mrf.mxu0
        %v2627 = vadd.f32 0.0, %v2626
        %v2628 = vpop.f32.mrf.mxu0
        %2629 = vmatprep.mubr.f32.mxu0 %v2043
        %2630 = vmatmul.mubr.f32.gmra.mxu0 %v2353
        %v2631 = vpop.f32.mrf.mxu0
        %v2632 = vadd.f32 0.0, %v2631
        %v2633 = vpop.f32.mrf.mxu0
        %2634 = vmatprep.mubr.f32.mxu0 %v2044
        %2635 = vmatmul.mubr.f32.gmra.mxu0 %v2295
        %v2636 = vpop.f32.mrf.mxu0
        %v2637 = vadd.f32 0.0, %v2636
        %v2638 = vpop.f32.mrf.mxu0
        %2639 = vmatprep.mubr.f32.mxu0 %v2045
        %2640 = vmatmul.mubr.f32.gmra.mxu0 %v2354
        %v2641 = vpop.f32.mrf.mxu0
        %v2642 = vadd.f32 0.0, %v2641
        %v2643 = vpop.f32.mrf.mxu0
        %2644 = vmatprep.mubr.f32.mxu0 %v2046
        %2645 = vmatmul.mubr.f32.gmra.mxu0 %v2298
        %v2646 = vpop.f32.mrf.mxu0
        %v2647 = vadd.f32 0.0, %v2646
        %v2648 = vpop.f32.mrf.mxu0
        %2649 = vmatprep.mubr.f32.mxu0 %v2047
        %2650 = vmatmul.mubr.f32.gmra.mxu0 %v2355
        %v2651 = vpop.f32.mrf.mxu0
        %v2652 = vadd.f32 0.0, %v2651
        %v2653 = vpop.f32.mrf.mxu0
        %2654 = vmatprep.mubr.f32.mxu0 %v2048
        %2655 = vmatmul.mubr.f32.gmra.mxu0 %v2301
        %v2656 = vpop.f32.mrf.mxu0
        %v2657 = vadd.f32 0.0, %v2656
        %v2658 = vpop.f32.mrf.mxu0
        %2659 = vmatprep.mubr.f32.mxu0 %v2049
        %2660 = vmatmul.mubr.f32.gmra.mxu0 %v2356
        %v2661 = vpop.f32.mrf.mxu0
        %v2662 = vadd.f32 0.0, %v2661
        %v2663 = vpop.f32.mrf.mxu0
        %2664 = vmatprep.mubr.f32.mxu0 %v2050
        %2665 = vmatmul.mubr.f32.gmra.mxu0 %v2304
        %v2666 = vpop.f32.mrf.mxu0
        %v2667 = vadd.f32 0.0, %v2666
        %v2668 = vpop.f32.mrf.mxu0
        %2669 = vmatprep.mubr.f32.mxu0 %v2051
        %2670 = vmatmul.mubr.f32.gmra.mxu0 %v2357
        %v2671 = vpop.f32.mrf.mxu0
        %v2672 = vadd.f32 0.0, %v2671
        %v2673 = vpop.f32.mrf.mxu0
        %2674 = vmatprep.mubr.f32.mxu0 %v2052
        %2675 = vmatmul.mubr.f32.gmra.mxu0 %v2307
        %v2676 = vpop.f32.mrf.mxu0
        %v2677 = vadd.f32 0.0, %v2676
        %v2678 = vpop.f32.mrf.mxu0
        %2679 = vdwg.mxu0
        %2680 = vmatprep.subr.mxu0 0.0
        %2681 = vmatpush1.msra.mxu0 %v2102
        %2682 = vmatprep.subr.mxu0 0.0
        %2683 = vmatpush1.msra.mxu0 %v2101
        %2684 = vmatprep.subr.mxu0 0.0
        %2685 = vmatpush1.msra.mxu0 %v2100
        %2686 = vmatprep.subr.mxu0 0.0
        %2687 = vmatpush1.msra.mxu0 %v2099
        %2688 = vmatprep.subr.mxu0 0.0
        %2689 = vmatpush1.msra.mxu0 %v2098
        %2690 = vmatprep.subr.mxu0 0.0
        %2691 = vmatpush1.msra.mxu0 %v2097
        %2692 = vmatprep.subr.mxu0 0.0
        %2693 = vmatpush1.msra.mxu0 %v2096
        %2694 = vmatprep.subr.mxu0 0.0
        %2695 = vmatpush1.msra.mxu0 %v2095
        %2696 = vmatprep.subr.mxu0 0.0
        %2697 = vmatpush1.msra.mxu0 %v2094
        %2698 = vmatprep.subr.mxu0 0.0
        %2699 = vmatpush1.msra.mxu0 %v2093
        %2700 = vmatprep.subr.mxu0 0.0
        %2701 = vmatpush1.msra.mxu0 %v2092
        %2702 = vmatprep.subr.mxu0 0.0
        %2703 = vmatpush1.msra.mxu0 %v2091
        %2704 = vmatprep.subr.mxu0 0.0
        %2705 = vmatpush1.msra.mxu0 %v2090
        %2706 = vmatprep.subr.mxu0 0.0
        %2707 = vmatpush1.msra.mxu0 %v2089
        %2708 = vmatprep.subr.mxu0 0.0
        %2709 = vmatpush1.msra.mxu0 %v2088
        %2710 = vmatprep.subr.mxu0 0.0
        %2711 = vmatpush1.msra.mxu0 %v2087
        %2712 = vmatprep.subr.mxu0 0.0
        %2713 = vmatpush2.msra.mxu0 %v2118
        %2714 = vmatprep.subr.mxu0 0.0
        %2715 = vmatpush2.msra.mxu0 %v2117
        %2716 = vmatprep.subr.mxu0 0.0
        %2717 = vmatpush2.msra.mxu0 %v2116
        %2718 = vmatprep.subr.mxu0 0.0
        %2719 = vmatpush2.msra.mxu0 %v2115
        %2720 = vmatprep.subr.mxu0 0.0
        %2721 = vmatpush2.msra.mxu0 %v2114
        %2722 = vmatprep.subr.mxu0 0.0
        %2723 = vmatpush2.msra.mxu0 %v2113
        %2724 = vmatprep.subr.mxu0 0.0
        %2725 = vmatpush2.msra.mxu0 %v2112
        %2726 = vmatprep.subr.mxu0 0.0
        %2727 = vmatpush2.msra.mxu0 %v2111
        %2728 = vmatprep.subr.mxu0 0.0
        %2729 = vmatpush2.msra.mxu0 %v2110
        %2730 = vmatprep.subr.mxu0 0.0
        %2731 = vmatpush2.msra.mxu0 %v2109
        %2732 = vmatprep.subr.mxu0 0.0
        %2733 = vmatpush2.msra.mxu0 %v2108
        %2734 = vmatprep.subr.mxu0 0.0
        %2735 = vmatpush2.msra.mxu0 %v2107
        %2736 = vmatprep.subr.mxu0 0.0
        %2737 = vmatpush2.msra.mxu0 %v2106
        %2738 = vmatprep.subr.mxu0 0.0
        %2739 = vmatpush2.msra.mxu0 %v2105
        %2740 = vmatprep.subr.mxu0 0.0
        %2741 = vmatpush2.msra.mxu0 %v2104
        %2742 = vmatprep.subr.mxu0 0.0
        %2743 = vmatpush2.msra.mxu0 %v2103
        %2744 = vmatprep.mubr.f32.mxu0 %v2344
        %2745 = vmatmul.mubr.f32.gmra.mxu0 %v2360
        %v2746 = vpop.f32.mrf.mxu0
        %v2747 = vadd.f32 %v2522, %v2746
        %v2748 = vpop.f32.mrf.mxu0
        %2749 = vmatprep.mubr.f32.mxu0 %v2268
        %2750 = vmatmul.mubr.f32.gmra.mxu0 %v2439
        %v2751 = vpop.f32.mrf.mxu0
        %v2752 = vadd.f32 %v2527, %v2751
        %v2753 = vpop.f32.mrf.mxu0
        %2754 = vmatprep.mubr.f32.mxu0 %v2343
        %2755 = vmatmul.mubr.f32.gmra.mxu0 %v2362
        %v2756 = vpop.f32.mrf.mxu0
        %v2757 = vadd.f32 %v2532, %v2756
        %v2758 = vpop.f32.mrf.mxu0
        %2759 = vmatprep.mubr.f32.mxu0 %v2265
        %2760 = vmatmul.mubr.f32.gmra.mxu0 %v2440
        %v2761 = vpop.f32.mrf.mxu0
        %v2762 = vadd.f32 %v2537, %v2761
        %v2763 = vpop.f32.mrf.mxu0
        %2764 = vmatprep.mubr.f32.mxu0 %v2345
        %2765 = vmatmul.mubr.f32.gmra.mxu0 %v2360
        %v2766 = vpop.f32.mrf.mxu0
        %v2767 = vadd.f32 %v2542, %v2766
        %v2768 = vpop.f32.mrf.mxu0
        %2769 = vmatprep.mubr.f32.mxu0 %v2271
        %2770 = vmatmul.mubr.f32.gmra.mxu0 %v2439
        %v2771 = vpop.f32.mrf.mxu0
        %v2772 = vadd.f32 %v2547, %v2771
        %v2773 = vpop.f32.mrf.mxu0
        %2774 = vmatprep.mubr.f32.mxu0 %v2346
        %2775 = vmatmul.mubr.f32.gmra.mxu0 %v2364
        %v2776 = vpop.f32.mrf.mxu0
        %v2777 = vadd.f32 %v2552, %v2776
        %v2778 = vpop.f32.mrf.mxu0
        %2779 = vmatprep.mubr.f32.mxu0 %v2274
        %2780 = vmatmul.mubr.f32.gmra.mxu0 %v2441
        %v2781 = vpop.f32.mrf.mxu0
        %v2782 = vadd.f32 %v2557, %v2781
        %v2783 = vpop.f32.mrf.mxu0
        %2784 = vmatprep.mubr.f32.mxu0 %v2347
        %2785 = vmatmul.mubr.f32.gmra.mxu0 %v2366
        %v2786 = vpop.f32.mrf.mxu0
        %v2787 = vadd.f32 %v2562, %v2786
        %v2788 = vpop.f32.mrf.mxu0
        %2789 = vmatprep.mubr.f32.mxu0 %v2277
        %2790 = vmatmul.mubr.f32.gmra.mxu0 %v2442
        %v2791 = vpop.f32.mrf.mxu0
        %v2792 = vadd.f32 %v2567, %v2791
        %v2793 = vpop.f32.mrf.mxu0
        %2794 = vmatprep.mubr.f32.mxu0 %v2348
        %2795 = vmatmul.mubr.f32.gmra.mxu0 %v2368
        %v2796 = vpop.f32.mrf.mxu0
        %v2797 = vadd.f32 %v2572, %v2796
        %v2798 = vpop.f32.mrf.mxu0
        %2799 = vmatprep.mubr.f32.mxu0 %v2280
        %2800 = vmatmul.mubr.f32.gmra.mxu0 %v2443
        %v2801 = vpop.f32.mrf.mxu0
        %v2802 = vadd.f32 %v2577, %v2801
        %v2803 = vpop.f32.mrf.mxu0
        %2804 = vmatprep.mubr.f32.mxu0 %v2349
        %2805 = vmatmul.mubr.f32.gmra.mxu0 %v2370
        %v2806 = vpop.f32.mrf.mxu0
        %v2807 = vadd.f32 %v2582, %v2806
        %v2808 = vpop.f32.mrf.mxu0
        %2809 = vmatprep.mubr.f32.mxu0 %v2283
        %2810 = vmatmul.mubr.f32.gmra.mxu0 %v2444
        %v2811 = vpop.f32.mrf.mxu0
        %v2812 = vadd.f32 %v2587, %v2811
        %v2813 = vpop.f32.mrf.mxu0
        %2814 = vmatprep.mubr.f32.mxu0 %v2350
        %2815 = vmatmul.mubr.f32.gmra.mxu0 %v2372
        %v2816 = vpop.f32.mrf.mxu0
        %v2817 = vadd.f32 %v2592, %v2816
        %v2818 = vpop.f32.mrf.mxu0
        %2819 = vmatprep.mubr.f32.mxu0 %v2286
        %2820 = vmatmul.mubr.f32.gmra.mxu0 %v2445
        %v2821 = vpop.f32.mrf.mxu0
        %v2822 = vadd.f32 %v2597, %v2821
        %v2823 = vpop.f32.mrf.mxu0
        %2824 = vmatprep.mubr.f32.mxu0 %v2351
        %2825 = vmatmul.mubr.f32.gmra.mxu0 %v2374
        %v2826 = vpop.f32.mrf.mxu0
        %v2827 = vadd.f32 %v2602, %v2826
        %v2828 = vpop.f32.mrf.mxu0
        %2829 = vmatprep.mubr.f32.mxu0 %v2289
        %2830 = vmatmul.mubr.f32.gmra.mxu0 %v2446
        %v2831 = vpop.f32.mrf.mxu0
        %v2832 = vadd.f32 %v2607, %v2831
        %v2833 = vpop.f32.mrf.mxu0
        %2834 = vmatprep.mubr.f32.mxu0 %v2352
        %2835 = vmatmul.mubr.f32.gmra.mxu0 %v2376
        %v2836 = vpop.f32.mrf.mxu0
        %v2837 = vadd.f32 %v2612, %v2836
        %v2838 = vpop.f32.mrf.mxu0
        %2839 = vmatprep.mubr.f32.mxu0 %v2292
        %2840 = vmatmul.mubr.f32.gmra.mxu0 %v2447
        %v2841 = vpop.f32.mrf.mxu0
        %v2842 = vadd.f32 %v2617, %v2841
        %v2843 = vpop.f32.mrf.mxu0
        %2844 = vmatprep.mubr.f32.mxu0 %v2353
        %2845 = vmatmul.mubr.f32.gmra.mxu0 %v2378
        %v2846 = vpop.f32.mrf.mxu0
        %v2847 = vadd.f32 %v2622, %v2846
        %v2848 = vpop.f32.mrf.mxu0
        %2849 = vmatprep.mubr.f32.mxu0 %v2295
        %2850 = vmatmul.mubr.f32.gmra.mxu0 %v2448
        %v2851 = vpop.f32.mrf.mxu0
        %v2852 = vadd.f32 %v2627, %v2851
        %v2853 = vpop.f32.mrf.mxu0
        %2854 = vmatprep.mubr.f32.mxu0 %v2354
        %2855 = vmatmul.mubr.f32.gmra.mxu0 %v2380
        %v2856 = vpop.f32.mrf.mxu0
        %v2857 = vadd.f32 %v2632, %v2856
        %v2858 = vpop.f32.mrf.mxu0
        %2859 = vmatprep.mubr.f32.mxu0 %v2298
        %2860 = vmatmul.mubr.f32.gmra.mxu0 %v2449
        %v2861 = vpop.f32.mrf.mxu0
        %v2862 = vadd.f32 %v2637, %v2861
        %v2863 = vpop.f32.mrf.mxu0
        %2864 = vmatprep.mubr.f32.mxu0 %v2355
        %2865 = vmatmul.mubr.f32.gmra.mxu0 %v2382
        %v2866 = vpop.f32.mrf.mxu0
        %v2867 = vadd.f32 %v2642, %v2866
        %v2868 = vpop.f32.mrf.mxu0
        %2869 = vmatprep.mubr.f32.mxu0 %v2301
        %2870 = vmatmul.mubr.f32.gmra.mxu0 %v2450
        %v2871 = vpop.f32.mrf.mxu0
        %v2872 = vadd.f32 %v2647, %v2871
        %v2873 = vpop.f32.mrf.mxu0
        %2874 = vmatprep.mubr.f32.mxu0 %v2356
        %2875 = vmatmul.mubr.f32.gmra.mxu0 %v2384
        %v2876 = vpop.f32.mrf.mxu0
        %v2877 = vadd.f32 %v2652, %v2876
        %v2878 = vpop.f32.mrf.mxu0
        %2879 = vmatprep.mubr.f32.mxu0 %v2304
        %2880 = vmatmul.mubr.f32.gmra.mxu0 %v2451
        %v2881 = vpop.f32.mrf.mxu0
        %v2882 = vadd.f32 %v2657, %v2881
        %v2883 = vpop.f32.mrf.mxu0
        %2884 = vmatprep.mubr.f32.mxu0 %v2357
        %2885 = vmatmul.mubr.f32.gmra.mxu0 %v2386
        %v2886 = vpop.f32.mrf.mxu0
        %v2887 = vadd.f32 %v2662, %v2886
        %v2888 = vpop.f32.mrf.mxu0
        %2889 = vmatprep.mubr.f32.mxu0 %v2307
        %2890 = vmatmul.mubr.f32.gmra.mxu0 %v2452
        %v2891 = vpop.f32.mrf.mxu0
        %v2892 = vadd.f32 %v2667, %v2891
        %v2893 = vpop.f32.mrf.mxu0
        %2894 = vmatprep.mubr.f32.mxu0 %v2358
        %2895 = vmatmul.mubr.f32.gmra.mxu0 %v2388
        %v2896 = vpop.f32.mrf.mxu0
        %v2897 = vadd.f32 %v2672, %v2896
        %v2898 = vpop.f32.mrf.mxu0
        %2899 = vmatprep.mubr.f32.mxu0 %v2310
        %2900 = vmatmul.mubr.f32.gmra.mxu0 %v2453
        %v2901 = vpop.f32.mrf.mxu0
        %v2902 = vadd.f32 %v2677, %v2901
        %v2903 = vpop.f32.mrf.mxu0
        %2904 = vdwg.mxu0
        %2905 = vmatprep.subr.mxu0 0.0
        %2906 = vmatpush1.msra.mxu0 %v2134
        %2907 = vmatprep.subr.mxu0 0.0
        %2908 = vmatpush1.msra.mxu0 %v2133
        %2909 = vmatprep.subr.mxu0 0.0
        %2910 = vmatpush1.msra.mxu0 %v2132
        %2911 = vmatprep.subr.mxu0 0.0
        %2912 = vmatpush1.msra.mxu0 %v2131
        %2913 = vmatprep.subr.mxu0 0.0
        %2914 = vmatpush1.msra.mxu0 %v2130
        %2915 = vmatprep.subr.mxu0 0.0
        %2916 = vmatpush1.msra.mxu0 %v2129
        %2917 = vmatprep.subr.mxu0 0.0
        %2918 = vmatpush1.msra.mxu0 %v2128
        %2919 = vmatprep.subr.mxu0 0.0
        %2920 = vmatpush1.msra.mxu0 %v2127
        %2921 = vmatprep.subr.mxu0 0.0
        %2922 = vmatpush1.msra.mxu0 %v2126
        %2923 = vmatprep.subr.mxu0 0.0
        %2924 = vmatpush1.msra.mxu0 %v2125
        %2925 = vmatprep.subr.mxu0 0.0
        %2926 = vmatpush1.msra.mxu0 %v2124
        %2927 = vmatprep.subr.mxu0 0.0
        %2928 = vmatpush1.msra.mxu0 %v2123
        %2929 = vmatprep.subr.mxu0 0.0
        %2930 = vmatpush1.msra.mxu0 %v2122
        %2931 = vmatprep.subr.mxu0 0.0
        %2932 = vmatpush1.msra.mxu0 %v2121
        %2933 = vmatprep.subr.mxu0 0.0
        %2934 = vmatpush1.msra.mxu0 %v2120
        %2935 = vmatprep.subr.mxu0 0.0
        %2936 = vmatpush1.msra.mxu0 %v2119
        %2937 = vmatprep.subr.mxu0 0.0
        %2938 = vmatpush2.msra.mxu0 %v2150
        %2939 = vmatprep.subr.mxu0 0.0
        %2940 = vmatpush2.msra.mxu0 %v2149
        %2941 = vmatprep.subr.mxu0 0.0
        %2942 = vmatpush2.msra.mxu0 %v2148
        %2943 = vmatprep.subr.mxu0 0.0
        %2944 = vmatpush2.msra.mxu0 %v2147
        %2945 = vmatprep.subr.mxu0 0.0
        %2946 = vmatpush2.msra.mxu0 %v2146
        %2947 = vmatprep.subr.mxu0 0.0
        %2948 = vmatpush2.msra.mxu0 %v2145
        %2949 = vmatprep.subr.mxu0 0.0
        %2950 = vmatpush2.msra.mxu0 %v2144
        %2951 = vmatprep.subr.mxu0 0.0
        %2952 = vmatpush2.msra.mxu0 %v2143
        %2953 = vmatprep.subr.mxu0 0.0
        %2954 = vmatpush2.msra.mxu0 %v2142
        %2955 = vmatprep.subr.mxu0 0.0
        %2956 = vmatpush2.msra.mxu0 %v2141
        %2957 = vmatprep.subr.mxu0 0.0
        %2958 = vmatpush2.msra.mxu0 %v2140
        %2959 = vmatprep.subr.mxu0 0.0
        %2960 = vmatpush2.msra.mxu0 %v2139
        %2961 = vmatprep.subr.mxu0 0.0
        %2962 = vmatpush2.msra.mxu0 %v2138
        %2963 = vmatprep.subr.mxu0 0.0
        %2964 = vmatpush2.msra.mxu0 %v2137
        %2965 = vmatprep.subr.mxu0 0.0
        %2966 = vmatpush2.msra.mxu0 %v2136
        %2967 = vmatprep.subr.mxu0 0.0
        %2968 = vmatpush2.msra.mxu0 %v2135
        %2969 = vmatprep.mubr.f32.mxu0 %v2362
        %2970 = vmatmul.mubr.f32.gmra.mxu0 %v2023
        %v2971 = vpop.f32.mrf.mxu0
        %v2972 = vadd.f32 %v2747, %v2971
        %v2973 = vpop.f32.mrf.mxu0
        %2974 = vmatprep.mubr.f32.mxu0 %v2440
        %2975 = vmatmul.mubr.f32.gmra.mxu0 %v2024
        %v2976 = vpop.f32.mrf.mxu0
        %v2977 = vadd.f32 %v2752, %v2976
        %v2978 = vpop.f32.mrf.mxu0
        %2979 = vmatprep.mubr.f32.mxu0 %v2360
        %2980 = vmatmul.mubr.f32.gmra.mxu0 %v2025
        %v2981 = vpop.f32.mrf.mxu0
        %v2982 = vadd.f32 %v2757, %v2981
        %v2983 = vpop.f32.mrf.mxu0
        %2984 = vmatprep.mubr.f32.mxu0 %v2439
        %2985 = vmatmul.mubr.f32.gmra.mxu0 %v2026
        %v2986 = vpop.f32.mrf.mxu0
        %v2987 = vadd.f32 %v2762, %v2986
        %v2988 = vpop.f32.mrf.mxu0
        %2989 = vmatprep.mubr.f32.mxu0 %v2364
        %2990 = vmatmul.mubr.f32.gmra.mxu0 %v2027
        %v2991 = vpop.f32.mrf.mxu0
        %v2992 = vadd.f32 %v2767, %v2991
        %v2993 = vpop.f32.mrf.mxu0
        %2994 = vmatprep.mubr.f32.mxu0 %v2441
        %2995 = vmatmul.mubr.f32.gmra.mxu0 %v2028
        %v2996 = vpop.f32.mrf.mxu0
        %v2997 = vadd.f32 %v2772, %v2996
        %v2998 = vpop.f32.mrf.mxu0
        %2999 = vmatprep.mubr.f32.mxu0 %v2366
        %3000 = vmatmul.mubr.f32.gmra.mxu0 %v2029
        %v3001 = vpop.f32.mrf.mxu0
        %v3002 = vadd.f32 %v2777, %v3001
        %v3003 = vpop.f32.mrf.mxu0
        %3004 = vmatprep.mubr.f32.mxu0 %v2442
        %3005 = vmatmul.mubr.f32.gmra.mxu0 %v2030
        %v3006 = vpop.f32.mrf.mxu0
        %v3007 = vadd.f32 %v2782, %v3006
        %v3008 = vpop.f32.mrf.mxu0
        %3009 = vmatprep.mubr.f32.mxu0 %v2368
        %3010 = vmatmul.mubr.f32.gmra.mxu0 %v2031
        %v3011 = vpop.f32.mrf.mxu0
        %v3012 = vadd.f32 %v2787, %v3011
        %v3013 = vpop.f32.mrf.mxu0
        %3014 = vmatprep.mubr.f32.mxu0 %v2443
        %3015 = vmatmul.mubr.f32.gmra.mxu0 %v2032
        %v3016 = vpop.f32.mrf.mxu0
        %v3017 = vadd.f32 %v2792, %v3016
        %v3018 = vpop.f32.mrf.mxu0
        %3019 = vmatprep.mubr.f32.mxu0 %v2370
        %3020 = vmatmul.mubr.f32.gmra.mxu0 %v2033
        %v3021 = vpop.f32.mrf.mxu0
        %v3022 = vadd.f32 %v2797, %v3021
        %v3023 = vpop.f32.mrf.mxu0
        %3024 = vmatprep.mubr.f32.mxu0 %v2444
        %3025 = vmatmul.mubr.f32.gmra.mxu0 %v2034
        %v3026 = vpop.f32.mrf.mxu0
        %v3027 = vadd.f32 %v2802, %v3026
        %v3028 = vpop.f32.mrf.mxu0
        %3029 = vmatprep.mubr.f32.mxu0 %v2372
        %3030 = vmatmul.mubr.f32.gmra.mxu0 %v2035
        %v3031 = vpop.f32.mrf.mxu0
        %v3032 = vadd.f32 %v2807, %v3031
        %v3033 = vpop.f32.mrf.mxu0
        %3034 = vmatprep.mubr.f32.mxu0 %v2445
        %3035 = vmatmul.mubr.f32.gmra.mxu0 %v2036
        %v3036 = vpop.f32.mrf.mxu0
        %v3037 = vadd.f32 %v2812, %v3036
        %v3038 = vpop.f32.mrf.mxu0
        %3039 = vmatprep.mubr.f32.mxu0 %v2374
        %3040 = vmatmul.mubr.f32.gmra.mxu0 %v2037
        %v3041 = vpop.f32.mrf.mxu0
        %v3042 = vadd.f32 %v2817, %v3041
        %v3043 = vpop.f32.mrf.mxu0
        %3044 = vmatprep.mubr.f32.mxu0 %v2446
        %3045 = vmatmul.mubr.f32.gmra.mxu0 %v2038
        %v3046 = vpop.f32.mrf.mxu0
        %v3047 = vadd.f32 %v2822, %v3046
        %v3048 = vpop.f32.mrf.mxu0
        %3049 = vmatprep.mubr.f32.mxu0 %v2376
        %3050 = vmatmul.mubr.f32.gmra.mxu0 %v2039
        %v3051 = vpop.f32.mrf.mxu0
        %v3052 = vadd.f32 %v2827, %v3051
        %v3053 = vpop.f32.mrf.mxu0
        %3054 = vmatprep.mubr.f32.mxu0 %v2447
        %3055 = vmatmul.mubr.f32.gmra.mxu0 %v2040
        %v3056 = vpop.f32.mrf.mxu0
        %v3057 = vadd.f32 %v2832, %v3056
        %v3058 = vpop.f32.mrf.mxu0
        %3059 = vmatprep.mubr.f32.mxu0 %v2378
        %3060 = vmatmul.mubr.f32.gmra.mxu0 %v2041
        %v3061 = vpop.f32.mrf.mxu0
        %v3062 = vadd.f32 %v2837, %v3061
        %v3063 = vpop.f32.mrf.mxu0
        %3064 = vmatprep.mubr.f32.mxu0 %v2448
        %3065 = vmatmul.mubr.f32.gmra.mxu0 %v2042
        %v3066 = vpop.f32.mrf.mxu0
        %v3067 = vadd.f32 %v2842, %v3066
        %v3068 = vpop.f32.mrf.mxu0
        %3069 = vmatprep.mubr.f32.mxu0 %v2380
        %3070 = vmatmul.mubr.f32.gmra.mxu0 %v2043
        %v3071 = vpop.f32.mrf.mxu0
        %v3072 = vadd.f32 %v2847, %v3071
        %v3073 = vpop.f32.mrf.mxu0
        %3074 = vmatprep.mubr.f32.mxu0 %v2449
        %3075 = vmatmul.mubr.f32.gmra.mxu0 %v2044
        %v3076 = vpop.f32.mrf.mxu0
        %v3077 = vadd.f32 %v2852, %v3076
        %v3078 = vpop.f32.mrf.mxu0
        %3079 = vmatprep.mubr.f32.mxu0 %v2382
        %3080 = vmatmul.mubr.f32.gmra.mxu0 %v2045
        %v3081 = vpop.f32.mrf.mxu0
        %v3082 = vadd.f32 %v2857, %v3081
        %v3083 = vpop.f32.mrf.mxu0
        %3084 = vmatprep.mubr.f32.mxu0 %v2450
        %3085 = vmatmul.mubr.f32.gmra.mxu0 %v2046
        %v3086 = vpop.f32.mrf.mxu0
        %v3087 = vadd.f32 %v2862, %v3086
        %v3088 = vpop.f32.mrf.mxu0
        %3089 = vmatprep.mubr.f32.mxu0 %v2384
        %3090 = vmatmul.mubr.f32.gmra.mxu0 %v2047
        %v3091 = vpop.f32.mrf.mxu0
        %v3092 = vadd.f32 %v2867, %v3091
        %v3093 = vpop.f32.mrf.mxu0
        %3094 = vmatprep.mubr.f32.mxu0 %v2451
        %3095 = vmatmul.mubr.f32.gmra.mxu0 %v2048
        %v3096 = vpop.f32.mrf.mxu0
        %v3097 = vadd.f32 %v2872, %v3096
        %v3098 = vpop.f32.mrf.mxu0
        %3099 = vmatprep.mubr.f32.mxu0 %v2386
        %3100 = vmatmul.mubr.f32.gmra.mxu0 %v2049
        %v3101 = vpop.f32.mrf.mxu0
        %v3102 = vadd.f32 %v2877, %v3101
        %v3103 = vpop.f32.mrf.mxu0
        %3104 = vmatprep.mubr.f32.mxu0 %v2452
        %3105 = vmatmul.mubr.f32.gmra.mxu0 %v2050
        %v3106 = vpop.f32.mrf.mxu0
        %v3107 = vadd.f32 %v2882, %v3106
        %v3108 = vpop.f32.mrf.mxu0
        %3109 = vmatprep.mubr.f32.mxu0 %v2388
        %3110 = vmatmul.mubr.f32.gmra.mxu0 %v2051
        %v3111 = vpop.f32.mrf.mxu0
        %v3112 = vadd.f32 %v2887, %v3111
        %v3113 = vpop.f32.mrf.mxu0
        %3114 = vmatprep.mubr.f32.mxu0 %v2453
        %3115 = vmatmul.mubr.f32.gmra.mxu0 %v2052
        %v3116 = vpop.f32.mrf.mxu0
        %v3117 = vadd.f32 %v2892, %v3116
        %v3118 = vpop.f32.mrf.mxu0
        %3119 = vmatprep.mubr.f32.mxu0 %v2390
        %3120 = vmatmul.mubr.f32.gmra.mxu0 %v2053
        %v3121 = vpop.f32.mrf.mxu0
        %v3122 = vadd.f32 %v2897, %v3121
        %v3123 = vpop.f32.mrf.mxu0
        %3124 = vmatprep.mubr.f32.mxu0 %v2454
        %3125 = vmatmul.mubr.f32.gmra.mxu0 %v2054
        %v3126 = vpop.f32.mrf.mxu0
        %v3127 = vadd.f32 %v2902, %v3126
        %v3128 = vpop.f32.mrf.mxu0
        %3129 = vdwg.mxu0
        %3130 = vmatprep.subr.mxu0 0.0
        %3131 = vmatpush1.msra.mxu0 %v2166
        %3132 = vmatprep.subr.mxu0 0.0
        %3133 = vmatpush1.msra.mxu0 %v2165
        %3134 = vmatprep.subr.mxu0 0.0
        %3135 = vmatpush1.msra.mxu0 %v2164
        %3136 = vmatprep.subr.mxu0 0.0
        %3137 = vmatpush1.msra.mxu0 %v2163
        %3138 = vmatprep.subr.mxu0 0.0
        %3139 = vmatpush1.msra.mxu0 %v2162
        %3140 = vmatprep.subr.mxu0 0.0
        %3141 = vmatpush1.msra.mxu0 %v2161
        %3142 = vmatprep.subr.mxu0 0.0
        %3143 = vmatpush1.msra.mxu0 %v2160
        %3144 = vmatprep.subr.mxu0 0.0
        %3145 = vmatpush1.msra.mxu0 %v2159
        %3146 = vmatprep.subr.mxu0 0.0
        %3147 = vmatpush1.msra.mxu0 %v2158
        %3148 = vmatprep.subr.mxu0 0.0
        %3149 = vmatpush1.msra.mxu0 %v2157
        %3150 = vmatprep.subr.mxu0 0.0
        %3151 = vmatpush1.msra.mxu0 %v2156
        %3152 = vmatprep.subr.mxu0 0.0
        %3153 = vmatpush1.msra.mxu0 %v2155
        %3154 = vmatprep.subr.mxu0 0.0
        %3155 = vmatpush1.msra.mxu0 %v2154
        %3156 = vmatprep.subr.mxu0 0.0
        %3157 = vmatpush1.msra.mxu0 %v2153
        %3158 = vmatprep.subr.mxu0 0.0
        %3159 = vmatpush1.msra.mxu0 %v2152
        %3160 = vmatprep.subr.mxu0 0.0
        %3161 = vmatpush1.msra.mxu0 %v2151
        %3162 = vmatprep.subr.mxu0 0.0
        %3163 = vmatpush2.msra.mxu0 %v2182
        %3164 = vmatprep.subr.mxu0 0.0
        %3165 = vmatpush2.msra.mxu0 %v2181
        %3166 = vmatprep.subr.mxu0 0.0
        %3167 = vmatpush2.msra.mxu0 %v2180
        %3168 = vmatprep.subr.mxu0 0.0
        %3169 = vmatpush2.msra.mxu0 %v2179
        %3170 = vmatprep.subr.mxu0 0.0
        %3171 = vmatpush2.msra.mxu0 %v2178
        %3172 = vmatprep.subr.mxu0 0.0
        %3173 = vmatpush2.msra.mxu0 %v2177
        %3174 = vmatprep.subr.mxu0 0.0
        %3175 = vmatpush2.msra.mxu0 %v2176
        %3176 = vmatprep.subr.mxu0 0.0
        %3177 = vmatpush2.msra.mxu0 %v2175
        %3178 = vmatprep.subr.mxu0 0.0
        %3179 = vmatpush2.msra.mxu0 %v2174
        %3180 = vmatprep.subr.mxu0 0.0
        %3181 = vmatpush2.msra.mxu0 %v2173
        %3182 = vmatprep.subr.mxu0 0.0
        %3183 = vmatpush2.msra.mxu0 %v2172
        %3184 = vmatprep.subr.mxu0 0.0
        %3185 = vmatpush2.msra.mxu0 %v2171
        %3186 = vmatprep.subr.mxu0 0.0
        %3187 = vmatpush2.msra.mxu0 %v2170
        %3188 = vmatprep.subr.mxu0 0.0
        %3189 = vmatpush2.msra.mxu0 %v2169
        %3190 = vmatprep.subr.mxu0 0.0
        %3191 = vmatpush2.msra.mxu0 %v2168
        %3192 = vmatprep.subr.mxu0 0.0
        %3193 = vmatpush2.msra.mxu0 %v2167
        %3194 = vmatprep.mubr.f32.mxu0 %v2025
        %3195 = vmatmul.mubr.f32.gmra.mxu0 %v2343
        %v3196 = vpop.f32.mrf.mxu0
        %v3197 = vadd.f32 %v2972, %v3196
        %v3198 = vpop.f32.mrf.mxu0
        %3199 = vmatprep.mubr.f32.mxu0 %v2026
        %3200 = vmatmul.mubr.f32.gmra.mxu0 %v2265
        %v3201 = vpop.f32.mrf.mxu0
        %v3202 = vadd.f32 %v2977, %v3201
        %v3203 = vpop.f32.mrf.mxu0
        %3204 = vmatprep.mubr.f32.mxu0 %v2027
        %3205 = vmatmul.mubr.f32.gmra.mxu0 %v2345
        %v3206 = vpop.f32.mrf.mxu0
        %v3207 = vadd.f32 %v2982, %v3206
        %v3208 = vpop.f32.mrf.mxu0
        %3209 = vmatprep.mubr.f32.mxu0 %v2028
        %3210 = vmatmul.mubr.f32.gmra.mxu0 %v2271
        %v3211 = vpop.f32.mrf.mxu0
        %v3212 = vadd.f32 %v2987, %v3211
        %v3213 = vpop.f32.mrf.mxu0
        %3214 = vmatprep.mubr.f32.mxu0 %v2029
        %3215 = vmatmul.mubr.f32.gmra.mxu0 %v2346
        %v3216 = vpop.f32.mrf.mxu0
        %v3217 = vadd.f32 %v2992, %v3216
        %v3218 = vpop.f32.mrf.mxu0
        %3219 = vmatprep.mubr.f32.mxu0 %v2030
        %3220 = vmatmul.mubr.f32.gmra.mxu0 %v2274
        %v3221 = vpop.f32.mrf.mxu0
        %v3222 = vadd.f32 %v2997, %v3221
        %v3223 = vpop.f32.mrf.mxu0
        %3224 = vmatprep.mubr.f32.mxu0 %v2031
        %3225 = vmatmul.mubr.f32.gmra.mxu0 %v2347
        %v3226 = vpop.f32.mrf.mxu0
        %v3227 = vadd.f32 %v3002, %v3226
        %v3228 = vpop.f32.mrf.mxu0
        %3229 = vmatprep.mubr.f32.mxu0 %v2032
        %3230 = vmatmul.mubr.f32.gmra.mxu0 %v2277
        %v3231 = vpop.f32.mrf.mxu0
        %v3232 = vadd.f32 %v3007, %v3231
        %v3233 = vpop.f32.mrf.mxu0
        %3234 = vmatprep.mubr.f32.mxu0 %v2033
        %3235 = vmatmul.mubr.f32.gmra.mxu0 %v2348
        %v3236 = vpop.f32.mrf.mxu0
        %v3237 = vadd.f32 %v3012, %v3236
        %v3238 = vpop.f32.mrf.mxu0
        %3239 = vmatprep.mubr.f32.mxu0 %v2034
        %3240 = vmatmul.mubr.f32.gmra.mxu0 %v2280
        %v3241 = vpop.f32.mrf.mxu0
        %v3242 = vadd.f32 %v3017, %v3241
        %v3243 = vpop.f32.mrf.mxu0
        %3244 = vmatprep.mubr.f32.mxu0 %v2035
        %3245 = vmatmul.mubr.f32.gmra.mxu0 %v2349
        %v3246 = vpop.f32.mrf.mxu0
        %v3247 = vadd.f32 %v3022, %v3246
        %v3248 = vpop.f32.mrf.mxu0
        %3249 = vmatprep.mubr.f32.mxu0 %v2036
        %3250 = vmatmul.mubr.f32.gmra.mxu0 %v2283
        %v3251 = vpop.f32.mrf.mxu0
        %v3252 = vadd.f32 %v3027, %v3251
        %v3253 = vpop.f32.mrf.mxu0
        %3254 = vmatprep.mubr.f32.mxu0 %v2037
        %3255 = vmatmul.mubr.f32.gmra.mxu0 %v2350
        %v3256 = vpop.f32.mrf.mxu0
        %v3257 = vadd.f32 %v3032, %v3256
        %v3258 = vpop.f32.mrf.mxu0
        %3259 = vmatprep.mubr.f32.mxu0 %v2038
        %3260 = vmatmul.mubr.f32.gmra.mxu0 %v2286
        %v3261 = vpop.f32.mrf.mxu0
        %v3262 = vadd.f32 %v3037, %v3261
        %v3263 = vpop.f32.mrf.mxu0
        %3264 = vmatprep.mubr.f32.mxu0 %v2039
        %3265 = vmatmul.mubr.f32.gmra.mxu0 %v2351
        %v3266 = vpop.f32.mrf.mxu0
        %v3267 = vadd.f32 %v3042, %v3266
        %v3268 = vpop.f32.mrf.mxu0
        %3269 = vmatprep.mubr.f32.mxu0 %v2040
        %3270 = vmatmul.mubr.f32.gmra.mxu0 %v2289
        %v3271 = vpop.f32.mrf.mxu0
        %v3272 = vadd.f32 %v3047, %v3271
        %v3273 = vpop.f32.mrf.mxu0
        %3274 = vmatprep.mubr.f32.mxu0 %v2041
        %3275 = vmatmul.mubr.f32.gmra.mxu0 %v2352
        %v3276 = vpop.f32.mrf.mxu0
        %v3277 = vadd.f32 %v3052, %v3276
        %v3278 = vpop.f32.mrf.mxu0
        %3279 = vmatprep.mubr.f32.mxu0 %v2042
        %3280 = vmatmul.mubr.f32.gmra.mxu0 %v2292
        %v3281 = vpop.f32.mrf.mxu0
        %v3282 = vadd.f32 %v3057, %v3281
        %v3283 = vpop.f32.mrf.mxu0
        %3284 = vmatprep.mubr.f32.mxu0 %v2043
        %3285 = vmatmul.mubr.f32.gmra.mxu0 %v2353
        %v3286 = vpop.f32.mrf.mxu0
        %v3287 = vadd.f32 %v3062, %v3286
        %v3288 = vpop.f32.mrf.mxu0
        %3289 = vmatprep.mubr.f32.mxu0 %v2044
        %3290 = vmatmul.mubr.f32.gmra.mxu0 %v2295
        %v3291 = vpop.f32.mrf.mxu0
        %v3292 = vadd.f32 %v3067, %v3291
        %v3293 = vpop.f32.mrf.mxu0
        %3294 = vmatprep.mubr.f32.mxu0 %v2045
        %3295 = vmatmul.mubr.f32.gmra.mxu0 %v2354
        %v3296 = vpop.f32.mrf.mxu0
        %v3297 = vadd.f32 %v3072, %v3296
        %v3298 = vpop.f32.mrf.mxu0
        %3299 = vmatprep.mubr.f32.mxu0 %v2046
        %3300 = vmatmul.mubr.f32.gmra.mxu0 %v2298
        %v3301 = vpop.f32.mrf.mxu0
        %v3302 = vadd.f32 %v3077, %v3301
        %v3303 = vpop.f32.mrf.mxu0
        %3304 = vmatprep.mubr.f32.mxu0 %v2047
        %3305 = vmatmul.mubr.f32.gmra.mxu0 %v2355
        %v3306 = vpop.f32.mrf.mxu0
        %v3307 = vadd.f32 %v3082, %v3306
        %v3308 = vpop.f32.mrf.mxu0
        %3309 = vmatprep.mubr.f32.mxu0 %v2048
        %3310 = vmatmul.mubr.f32.gmra.mxu0 %v2301
        %v3311 = vpop.f32.mrf.mxu0
        %v3312 = vadd.f32 %v3087, %v3311
        %v3313 = vpop.f32.mrf.mxu0
        %3314 = vmatprep.mubr.f32.mxu0 %v2049
        %3315 = vmatmul.mubr.f32.gmra.mxu0 %v2356
        %v3316 = vpop.f32.mrf.mxu0
        %v3317 = vadd.f32 %v3092, %v3316
        %v3318 = vpop.f32.mrf.mxu0
        %3319 = vmatprep.mubr.f32.mxu0 %v2050
        %3320 = vmatmul.mubr.f32.gmra.mxu0 %v2304
        %v3321 = vpop.f32.mrf.mxu0
        %v3322 = vadd.f32 %v3097, %v3321
        %v3323 = vpop.f32.mrf.mxu0
        %3324 = vmatprep.mubr.f32.mxu0 %v2051
        %3325 = vmatmul.mubr.f32.gmra.mxu0 %v2357
        %v3326 = vpop.f32.mrf.mxu0
        %v3327 = vadd.f32 %v3102, %v3326
        %v3328 = vpop.f32.mrf.mxu0
        %3329 = vmatprep.mubr.f32.mxu0 %v2052
        %3330 = vmatmul.mubr.f32.gmra.mxu0 %v2307
        %v3331 = vpop.f32.mrf.mxu0
        %v3332 = vadd.f32 %v3107, %v3331
        %v3333 = vpop.f32.mrf.mxu0
        %3334 = vmatprep.mubr.f32.mxu0 %v2053
        %3335 = vmatmul.mubr.f32.gmra.mxu0 %v2358
        %v3336 = vpop.f32.mrf.mxu0
        %v3337 = vadd.f32 %v3112, %v3336
        %v3338 = vpop.f32.mrf.mxu0
        %3339 = vmatprep.mubr.f32.mxu0 %v2054
        %3340 = vmatmul.mubr.f32.gmra.mxu0 %v2310
        %v3341 = vpop.f32.mrf.mxu0
        %v3342 = vadd.f32 %v3117, %v3341
        %v3343 = vpop.f32.mrf.mxu0
        %3344 = vmatprep.mubr.f32.mxu0 %v2051
        %3345 = vmatmul.mubr.f32.gmra.mxu0 %v2357
        %v3346 = vpop.f32.mrf.mxu0
        %v3347 = vadd.f32 %v3122, %v3346
        %v3348 = vpop.f32.mrf.mxu0
        %3349 = vmatprep.mubr.f32.mxu0 %v2052
        %3350 = vmatmul.mubr.f32.gmra.mxu0 %v2307
        %v3351 = vpop.f32.mrf.mxu0
        %v3352 = vadd.f32 %v3127, %v3351
        %v3353 = vpop.f32.mrf.mxu0
        %3354 = vdwg.mxu0
        %3355 = vmatprep.subr.mxu0 0.0
        %3356 = vmatpush1.msra.mxu0 %v2198
        %3357 = vmatprep.subr.mxu0 0.0
        %3358 = vmatpush1.msra.mxu0 %v2197
        %3359 = vmatprep.subr.mxu0 0.0
        %3360 = vmatpush1.msra.mxu0 %v2196
        %3361 = vmatprep.subr.mxu0 0.0
        %3362 = vmatpush1.msra.mxu0 %v2195
        %3363 = vmatprep.subr.mxu0 0.0
        %3364 = vmatpush1.msra.mxu0 %v2194
        %3365 = vmatprep.subr.mxu0 0.0
        %3366 = vmatpush1.msra.mxu0 %v2193
        %3367 = vmatprep.subr.mxu0 0.0
        %3368 = vmatpush1.msra.mxu0 %v2192
        %3369 = vmatprep.subr.mxu0 0.0
        %3370 = vmatpush1.msra.mxu0 %v2191
        %3371 = vmatprep.subr.mxu0 0.0
        %3372 = vmatpush1.msra.mxu0 %v2190
        %3373 = vmatprep.subr.mxu0 0.0
        %3374 = vmatpush1.msra.mxu0 %v2189
        %3375 = vmatprep.subr.mxu0 0.0
        %3376 = vmatpush1.msra.mxu0 %v2188
        %3377 = vmatprep.subr.mxu0 0.0
        %3378 = vmatpush1.msra.mxu0 %v2187
        %3379 = vmatprep.subr.mxu0 0.0
        %3380 = vmatpush1.msra.mxu0 %v2186
        %3381 = vmatprep.subr.mxu0 0.0
        %3382 = vmatpush1.msra.mxu0 %v2185
        %3383 = vmatprep.subr.mxu0 0.0
        %3384 = vmatpush1.msra.mxu0 %v2184
        %3385 = vmatprep.subr.mxu0 0.0
        %3386 = vmatpush1.msra.mxu0 %v2183
        %3387 = vmatprep.subr.mxu0 0.0
        %3388 = vmatpush2.msra.mxu0 0.0
        %3389 = vmatprep.subr.mxu0 0.0
        %3390 = vmatpush2.msra.mxu0 0.0
        %3391 = vmatprep.subr.mxu0 0.0
        %3392 = vmatpush2.msra.mxu0 0.0
        %3393 = vmatprep.subr.mxu0 0.0
        %3394 = vmatpush2.msra.mxu0 0.0
        %3395 = vmatprep.subr.mxu0 0.0
        %3396 = vmatpush2.msra.mxu0 0.0
        %3397 = vmatprep.subr.mxu0 0.0
        %3398 = vmatpush2.msra.mxu0 0.0
        %3399 = vmatprep.subr.mxu0 0.0
        %3400 = vmatpush2.msra.mxu0 0.0
        %3401 = vmatprep.subr.mxu0 0.0
        %3402 = vmatpush2.msra.mxu0 0.0
        %3403 = vmatprep.subr.mxu0 0.0
        %3404 = vmatpush2.msra.mxu0 0.0
        %3405 = vmatprep.subr.mxu0 0.0
        %3406 = vmatpush2.msra.mxu0 0.0
        %3407 = vmatprep.subr.mxu0 0.0
        %3408 = vmatpush2.msra.mxu0 0.0
        %3409 = vmatprep.subr.mxu0 0.0
        %3410 = vmatpush2.msra.mxu0 0.0
        %3411 = vmatprep.subr.mxu0 0.0
        %3412 = vmatpush2.msra.mxu0 0.0
        %3413 = vmatprep.subr.mxu0 0.0
        %3414 = vmatpush2.msra.mxu0 0.0
        %3415 = vmatprep.subr.mxu0 0.0
        %3416 = vmatpush2.msra.mxu0 0.0
        %3417 = vmatprep.subr.mxu0 0.0
        %3418 = vmatpush2.msra.mxu0 0.0
        %3419 = vmatprep.mubr.f32.mxu0 0.0
        %3420 = vmatmul.mubr.f32.gmra.mxu0 %v2360
        %v3421 = vpop.f32.mrf.mxu0
        %v3422 = vadd.f32 %v3197, %v3421
        %v3423 = vpop.f32.mrf.mxu0
        %3424 = vmatprep.mubr.f32.mxu0 0.0
        %3425 = vmatmul.mubr.f32.gmra.mxu0 %v2439
        %v3426 = vpop.f32.mrf.mxu0
        %v3427 = vadd.f32 %v3202, %v3426
        %v3428 = vpop.f32.mrf.mxu0
        %3429 = vmatprep.mubr.f32.mxu0 0.0
        %3430 = vmatmul.mubr.f32.gmra.mxu0 %v2364
        %v3431 = vpop.f32.mrf.mxu0
        %v3432 = vadd.f32 %v3207, %v3431
        %v3433 = vpop.f32.mrf.mxu0
        %3434 = vmatprep.mubr.f32.mxu0 0.0
        %3435 = vmatmul.mubr.f32.gmra.mxu0 %v2441
        %v3436 = vpop.f32.mrf.mxu0
        %v3437 = vadd.f32 %v3212, %v3436
        %v3438 = vpop.f32.mrf.mxu0
        %3439 = vmatprep.mubr.f32.mxu0 0.0
        %3440 = vmatmul.mubr.f32.gmra.mxu0 %v2366
        %v3441 = vpop.f32.mrf.mxu0
        %v3442 = vadd.f32 %v3217, %v3441
        %v3443 = vpop.f32.mrf.mxu0
        %3444 = vmatprep.mubr.f32.mxu0 0.0
        %3445 = vmatmul.mubr.f32.gmra.mxu0 %v2442
        %v3446 = vpop.f32.mrf.mxu0
        %v3447 = vadd.f32 %v3222, %v3446
        %v3448 = vpop.f32.mrf.mxu0
        %3449 = vmatprep.mubr.f32.mxu0 0.0
        %3450 = vmatmul.mubr.f32.gmra.mxu0 %v2368
        %v3451 = vpop.f32.mrf.mxu0
        %v3452 = vadd.f32 %v3227, %v3451
        %v3453 = vpop.f32.mrf.mxu0
        %3454 = vmatprep.mubr.f32.mxu0 0.0
        %3455 = vmatmul.mubr.f32.gmra.mxu0 %v2443
        %v3456 = vpop.f32.mrf.mxu0
        %v3457 = vadd.f32 %v3232, %v3456
        %v3458 = vpop.f32.mrf.mxu0
        %3459 = vmatprep.mubr.f32.mxu0 0.0
        %3460 = vmatmul.mubr.f32.gmra.mxu0 %v2370
        %v3461 = vpop.f32.mrf.mxu0
        %v3462 = vadd.f32 %v3237, %v3461
        %v3463 = vpop.f32.mrf.mxu0
        %3464 = vmatprep.mubr.f32.mxu0 0.0
        %3465 = vmatmul.mubr.f32.gmra.mxu0 %v2444
        %v3466 = vpop.f32.mrf.mxu0
        %v3467 = vadd.f32 %v3242, %v3466
        %v3468 = vpop.f32.mrf.mxu0
        %3469 = vmatprep.mubr.f32.mxu0 0.0
        %3470 = vmatmul.mubr.f32.gmra.mxu0 %v2372
        %v3471 = vpop.f32.mrf.mxu0
        %v3472 = vadd.f32 %v3247, %v3471
        %v3473 = vpop.f32.mrf.mxu0
        %3474 = vmatprep.mubr.f32.mxu0 0.0
        %3475 = vmatmul.mubr.f32.gmra.mxu0 %v2445
        %v3476 = vpop.f32.mrf.mxu0
        %v3477 = vadd.f32 %v3252, %v3476
        %v3478 = vpop.f32.mrf.mxu0
        %3479 = vmatprep.mubr.f32.mxu0 0.0
        %3480 = vmatmul.mubr.f32.gmra.mxu0 %v2374
        %v3481 = vpop.f32.mrf.mxu0
        %v3482 = vadd.f32 %v3257, %v3481
        %v3483 = vpop.f32.mrf.mxu0
        %3484 = vmatprep.mubr.f32.mxu0 0.0
        %3485 = vmatmul.mubr.f32.gmra.mxu0 %v2446
        %v3486 = vpop.f32.mrf.mxu0
        %v3487 = vadd.f32 %v3262, %v3486
        %v3488 = vpop.f32.mrf.mxu0
        %3489 = vmatprep.mubr.f32.mxu0 0.0
        %3490 = vmatmul.mubr.f32.gmra.mxu0 %v2376
        %v3491 = vpop.f32.mrf.mxu0
        %v3492 = vadd.f32 %v3267, %v3491
        %v3493 = vpop.f32.mrf.mxu0
        %3494 = vmatprep.mubr.f32.mxu0 0.0
        %3495 = vmatmul.mubr.f32.gmra.mxu0 %v2447
        %v3496 = vpop.f32.mrf.mxu0
        %v3497 = vadd.f32 %v3272, %v3496
        %v3498 = vpop.f32.mrf.mxu0
        %3499 = vmatprep.mubr.f32.mxu0 0.0
        %3500 = vmatmul.mubr.f32.gmra.mxu0 %v2378
        %v3501 = vpop.f32.mrf.mxu0
        %v3502 = vadd.f32 %v3277, %v3501
        %v3503 = vpop.f32.mrf.mxu0
        %3504 = vmatprep.mubr.f32.mxu0 0.0
        %3505 = vmatmul.mubr.f32.gmra.mxu0 %v2448
        %v3506 = vpop.f32.mrf.mxu0
        %v3507 = vadd.f32 %v3282, %v3506
        %v3508 = vpop.f32.mrf.mxu0
        %3509 = vmatprep.mubr.f32.mxu0 0.0
        %3510 = vmatmul.mubr.f32.gmra.mxu0 %v2380
        %v3511 = vpop.f32.mrf.mxu0
        %v3512 = vadd.f32 %v3287, %v3511
        %v3513 = vpop.f32.mrf.mxu0
        %3514 = vmatprep.mubr.f32.mxu0 0.0
        %3515 = vmatmul.mubr.f32.gmra.mxu0 %v2449
        %v3516 = vpop.f32.mrf.mxu0
        %v3517 = vadd.f32 %v3292, %v3516
        %v3518 = vpop.f32.mrf.mxu0
        %3519 = vmatprep.mubr.f32.mxu0 0.0
        %3520 = vmatmul.mubr.f32.gmra.mxu0 %v2382
        %v3521 = vpop.f32.mrf.mxu0
        %v3522 = vadd.f32 %v3297, %v3521
        %v3523 = vpop.f32.mrf.mxu0
        %3524 = vmatprep.mubr.f32.mxu0 0.0
        %3525 = vmatmul.mubr.f32.gmra.mxu0 %v2450
        %v3526 = vpop.f32.mrf.mxu0
        %v3527 = vadd.f32 %v3302, %v3526
        %v3528 = vpop.f32.mrf.mxu0
        %3529 = vmatprep.mubr.f32.mxu0 0.0
        %3530 = vmatmul.mubr.f32.gmra.mxu0 %v2384
        %v3531 = vpop.f32.mrf.mxu0
        %v3532 = vadd.f32 %v3307, %v3531
        %v3533 = vpop.f32.mrf.mxu0
        %3534 = vmatprep.mubr.f32.mxu0 0.0
        %3535 = vmatmul.mubr.f32.gmra.mxu0 %v2451
        %v3536 = vpop.f32.mrf.mxu0
        %v3537 = vadd.f32 %v3312, %v3536
        %v3538 = vpop.f32.mrf.mxu0
        %3539 = vmatprep.mubr.f32.mxu0 0.0
        %3540 = vmatmul.mubr.f32.gmra.mxu0 %v2386
        %v3541 = vpop.f32.mrf.mxu0
        %v3542 = vadd.f32 %v3317, %v3541
        %v3543 = vpop.f32.mrf.mxu0
        %3544 = vmatprep.mubr.f32.mxu0 0.0
        %3545 = vmatmul.mubr.f32.gmra.mxu0 %v2452
        %v3546 = vpop.f32.mrf.mxu0
        %v3547 = vadd.f32 %v3322, %v3546
        %v3548 = vpop.f32.mrf.mxu0
        %3549 = vmatprep.mubr.f32.mxu0 0.0
        %3550 = vmatmul.mubr.f32.gmra.mxu0 %v2388
        %v3551 = vpop.f32.mrf.mxu0
        %v3552 = vadd.f32 %v3327, %v3551
        %v3553 = vpop.f32.mrf.mxu0
        %3554 = vmatprep.mubr.f32.mxu0 0.0
        %3555 = vmatmul.mubr.f32.gmra.mxu0 %v2453
        %v3556 = vpop.f32.mrf.mxu0
        %v3557 = vadd.f32 %v3332, %v3556
        %v3558 = vpop.f32.mrf.mxu0
        %3559 = vmatprep.mubr.f32.mxu0 0.0
        %3560 = vmatmul.mubr.f32.gmra.mxu0 %v2390
        %v3561 = vpop.f32.mrf.mxu0
        %v3562 = vadd.f32 %v3337, %v3561
        %v3563 = vpop.f32.mrf.mxu0
        %3564 = vmatprep.mubr.f32.mxu0 0.0
        %3565 = vmatmul.mubr.f32.gmra.mxu0 %v2454
        %v3566 = vpop.f32.mrf.mxu0
        %v3567 = vadd.f32 %v3342, %v3566
        %v3568 = vpop.f32.mrf.mxu0
        %3569 = vmatprep.mubr.f32.mxu0 0.0
        %3570 = vmatmul.mubr.f32.gmra.mxu0 %v2388
        %v3571 = vpop.f32.mrf.mxu0
        %v3572 = vadd.f32 %v3347, %v3571
        %v3573 = vpop.f32.mrf.mxu0
        %3574 = vmatprep.mubr.f32.mxu0 0.0
        %3575 = vmatmul.mubr.f32.gmra.mxu0 %v2453
        %v3576 = vpop.f32.mrf.mxu0
        %v3577 = vadd.f32 %v3352, %v3576
        %v3578 = vpop.f32.mrf.mxu0
        %3579 = vdwg.mxu0
        %v3580 = vadd.f32 %v3422, %v3427
        %v3581 = vadd.f32 %v3580, %v3432
        %v3582 = vadd.f32 %v3581, %v3437
        %v3583 = vadd.f32 %v3582, %v3442
        %v3584 = vadd.f32 %v3583, %v3447
        %v3585 = vadd.f32 %v3584, %v3452
        %v3586 = vadd.f32 %v3585, %v3457
        %v3587 = vadd.f32 %v3586, %v3462
        %v3588 = vadd.f32 %v3587, %v3467
        %v3589 = vadd.f32 %v3588, %v3472
        %v3590 = vadd.f32 %v3589, %v3477
        %v3591 = vadd.f32 %v3590, %v3482
        %v3592 = vadd.f32 %v3591, %v3487
        %v3593 = vadd.f32 %v3592, %v3492
        %v3594 = vadd.f32 %v3593, %v3497
        %v3595 = vadd.f32 %v3594, %v3502
        %v3596 = vadd.f32 %v3595, %v3507
        %v3597 = vadd.f32 %v3596, %v3512
        %v3598 = vadd.f32 %v3597, %v3517
        %v3599 = vadd.f32 %v3598, %v3522
        %v3600 = vadd.f32 %v3599, %v3527
        %v3601 = vadd.f32 %v3600, %v3532
        %v3602 = vadd.f32 %v3601, %v3537
        %v3603 = vadd.f32 %v3602, %v3542
        %v3604 = vadd.f32 %v3603, %v3547
        %v3605 = vadd.f32 %v3604, %v3552
        %v3606 = vadd.f32 %v3605, %v3557
        %v3607 = vadd.f32 %v3606, %v3562
        %v3608 = vadd.f32 %v3607, %v3567
        %v3609 = vadd.f32 %v3608, %v3572
        %v3610 = vadd.f32 %v3609, %v3577
        %v3611 = vrot.slane %v3610, 4
        %v3612 = vadd.f32 %v3610, %v3611
        %v3613 = vrot.slane %v3612, 2
        %v3614 = vadd.f32 %v3612, %v3613
        %v3615 = vrot.slane %v3614, 1
        %v3616 = vadd.f32 %v3614, %v3615
        %v3617 = vmul.f32 %v3616, 0.00390625
        %v3618 = vmul.f32 %v3422, %v3422
        %v3619 = vmul.f32 %v3427, %v3427
        %v3620 = vmul.f32 %v3432, %v3432
        %v3621 = vmul.f32 %v3437, %v3437
        %v3622 = vmul.f32 %v3442, %v3442
        %v3623 = vmul.f32 %v3447, %v3447
        %v3624 = vmul.f32 %v3452, %v3452
        %v3625 = vmul.f32 %v3457, %v3457
        %v3626 = vmul.f32 %v3462, %v3462
        %v3627 = vmul.f32 %v3467, %v3467
        %v3628 = vmul.f32 %v3472, %v3472
        %v3629 = vmul.f32 %v3477, %v3477
        %v3630 = vmul.f32 %v3482, %v3482
        %v3631 = vmul.f32 %v3487, %v3487
        %v3632 = vmul.f32 %v3492, %v3492
        %v3633 = vmul.f32 %v3497, %v3497
        %v3634 = vmul.f32 %v3502, %v3502
        %v3635 = vmul.f32 %v3507, %v3507
        %v3636 = vmul.f32 %v3512, %v3512
        %v3637 = vmul.f32 %v3517, %v3517
        %v3638 = vmul.f32 %v3522, %v3522
        %v3639 = vmul.f32 %v3527, %v3527
        %v3640 = vmul.f32 %v3532, %v3532
        %v3641 = vmul.f32 %v3537, %v3537
        %v3642 = vmul.f32 %v3542, %v3542
        %v3643 = vmul.f32 %v3547, %v3547
        %v3644 = vmul.f32 %v3552, %v3552
        %v3645 = vmul.f32 %v3557, %v3557
        %v3646 = vmul.f32 %v3562, %v3562
        %v3647 = vmul.f32 %v3567, %v3567
        %v3648 = vmul.f32 %v3572, %v3572
        %v3649 = vmul.f32 %v3577, %v3577
        %v3650 = vadd.f32 %v3618, %v3619
        %v3651 = vadd.f32 %v3650, %v3620
        %v3652 = vadd.f32 %v3651, %v3621
        %v3653 = vadd.f32 %v3652, %v3622
        %v3654 = vadd.f32 %v3653, %v3623
        %v3655 = vadd.f32 %v3654, %v3624
        %v3656 = vadd.f32 %v3655, %v3625
        %v3657 = vadd.f32 %v3656, %v3626
        %v3658 = vadd.f32 %v3657, %v3627
        %v3659 = vadd.f32 %v3658, %v3628
        %v3660 = vadd.f32 %v3659, %v3629
        %v3661 = vadd.f32 %v3660, %v3630
        %v3662 = vadd.f32 %v3661, %v3631
        %v3663 = vadd.f32 %v3662, %v3632
        %v3664 = vadd.f32 %v3663, %v3633
        %v3665 = vadd.f32 %v3664, %v3634
        %v3666 = vadd.f32 %v3665, %v3635
        %v3667 = vadd.f32 %v3666, %v3636
        %v3668 = vadd.f32 %v3667, %v3637
        %v3669 = vadd.f32 %v3668, %v3638
        %v3670 = vadd.f32 %v3669, %v3639
        %v3671 = vadd.f32 %v3670, %v3640
        %v3672 = vadd.f32 %v3671, %v3641
        %v3673 = vadd.f32 %v3672, %v3642
        %v3674 = vadd.f32 %v3673, %v3643
        %v3675 = vadd.f32 %v3674, %v3644
        %v3676 = vadd.f32 %v3675, %v3645
        %v3677 = vadd.f32 %v3676, %v3646
        %v3678 = vadd.f32 %v3677, %v3647
        %v3679 = vadd.f32 %v3678, %v3648
        %v3680 = vadd.f32 %v3679, %v3649
        %v3681 = vrot.slane %v3680, 4
        %v3682 = vadd.f32 %v3680, %v3681
        %v3683 = vrot.slane %v3682, 2
        %v3684 = vadd.f32 %v3682, %v3683
        %v3685 = vrot.slane %v3684, 1
        %v3686 = vadd.f32 %v3684, %v3685
        %v3687 = vmul.f32 %v3686, 0.00390625
        %v3688 = vmul.f32 %v3617, %v3617
        %v3689 = vsub.f32 %v3687, %v3688
        %v3690 = vmax.f32 %v3689, 0.0
        %v3691 = vadd.f32 %v3690, 1e-05
        %v3692 = vrsqrt.pop %v3691
        %v3693 = vsub.f32 %v3422, %v3617
        %v3694 = vsub.f32 %v3427, %v3617
        %v3695 = vsub.f32 %v3432, %v3617
        %v3696 = vsub.f32 %v3437, %v3617
        %v3697 = vsub.f32 %v3442, %v3617
        %v3698 = vsub.f32 %v3447, %v3617
        %v3699 = vsub.f32 %v3452, %v3617
        %v3700 = vsub.f32 %v3457, %v3617
        %v3701 = vsub.f32 %v3462, %v3617
        %v3702 = vsub.f32 %v3467, %v3617
        %v3703 = vsub.f32 %v3472, %v3617
        %v3704 = vsub.f32 %v3477, %v3617
        %v3705 = vsub.f32 %v3482, %v3617
        %v3706 = vsub.f32 %v3487, %v3617
        %v3707 = vsub.f32 %v3492, %v3617
        %v3708 = vsub.f32 %v3497, %v3617
        %v3709 = vsub.f32 %v3502, %v3617
        %v3710 = vsub.f32 %v3507, %v3617
        %v3711 = vsub.f32 %v3512, %v3617
        %v3712 = vsub.f32 %v3517, %v3617
        %v3713 = vsub.f32 %v3522, %v3617
        %v3714 = vsub.f32 %v3527, %v3617
        %v3715 = vsub.f32 %v3532, %v3617
        %v3716 = vsub.f32 %v3537, %v3617
        %v3717 = vsub.f32 %v3542, %v3617
        %v3718 = vsub.f32 %v3547, %v3617
        %v3719 = vsub.f32 %v3552, %v3617
        %v3720 = vsub.f32 %v3557, %v3617
        %v3721 = vsub.f32 %v3562, %v3617
        %v3722 = vsub.f32 %v3567, %v3617
        %v3723 = vsub.f32 %v3572, %v3617
        %v3724 = vsub.f32 %v3577, %v3617
        %v3725 = vmul.f32 %v3693, %v3692
        %v3726 = vmul.f32 %v3694, %v3692
        %v3727 = vmul.f32 %v3695, %v3692
        %v3728 = vmul.f32 %v3696, %v3692
        %v3729 = vmul.f32 %v3697, %v3692
        %v3730 = vmul.f32 %v3698, %v3692
        %v3731 = vmul.f32 %v3699, %v3692
        %v3732 = vmul.f32 %v3700, %v3692
        %v3733 = vmul.f32 %v3701, %v3692
        %v3734 = vmul.f32 %v3702, %v3692
        %v3735 = vmul.f32 %v3703, %v3692
        %v3736 = vmul.f32 %v3704, %v3692
        %v3737 = vmul.f32 %v3705, %v3692
        %v3738 = vmul.f32 %v3706, %v3692
        %v3739 = vmul.f32 %v3707, %v3692
        %v3740 = vmul.f32 %v3708, %v3692
        %v3741 = vmul.f32 %v3709, %v3692
        %v3742 = vmul.f32 %v3710, %v3692
        %v3743 = vmul.f32 %v3711, %v3692
        %v3744 = vmul.f32 %v3712, %v3692
        %v3745 = vmul.f32 %v3713, %v3692
        %v3746 = vmul.f32 %v3714, %v3692
        %v3747 = vmul.f32 %v3715, %v3692
        %v3748 = vmul.f32 %v3716, %v3692
        %v3749 = vmul.f32 %v3717, %v3692
        %v3750 = vmul.f32 %v3718, %v3692
        %v3751 = vmul.f32 %v3719, %v3692
        %v3752 = vmul.f32 %v3720, %v3692
        %v3753 = vmul.f32 %v3721, %v3692
        %v3754 = vmul.f32 %v3722, %v3692
        %v3755 = vmul.f32 %v3723, %v3692
        %v3756 = vmul.f32 %v3724, %v3692
        %v3757 = vadd.f32 %v220, %v3725
        %v3758 = vadd.f32 %v221, %v3726
        %v3759 = vadd.f32 %v222, %v3727
        %v3760 = vadd.f32 %v223, %v3728
        %v3761 = vadd.f32 %v224, %v3729
        %v3762 = vadd.f32 %v225, %v3730
        %v3763 = vadd.f32 %v226, %v3731
        %v3764 = vadd.f32 %v227, %v3732
        %v3765 = vadd.f32 %v228, %v3733
        %v3766 = vadd.f32 %v229, %v3734
        %v3767 = vadd.f32 %v230, %v3735
        %v3768 = vadd.f32 %v231, %v3736
        %v3769 = vadd.f32 %v232, %v3737
        %v3770 = vadd.f32 %v233, %v3738
        %v3771 = vadd.f32 %v234, %v3739
        %v3772 = vadd.f32 %v235, %v3740
        %v3773 = vadd.f32 %v236, %v3741
        %v3774 = vadd.f32 %v237, %v3742
        %v3775 = vadd.f32 %v238, %v3743
        %v3776 = vadd.f32 %v239, %v3744
        %v3777 = vadd.f32 %v240, %v3745
        %v3778 = vadd.f32 %v241, %v3746
        %v3779 = vadd.f32 %v242, %v3747
        %v3780 = vadd.f32 %v243, %v3748
        %v3781 = vadd.f32 %v244, %v3749
        %v3782 = vadd.f32 %v245, %v3750
        %v3783 = vadd.f32 %v246, %v3751
        %v3784 = vadd.f32 %v247, %v3752
        %v3785 = vadd.f32 %v248, %v3753
        %v3786 = vadd.f32 %v249, %v3754
        %v3787 = vadd.f32 %v250, %v3755
        %v3788 = vadd.f32 %v251, %v3756
        %3789 = vst [vmem:[%s217] sm:$0xff] %v3757
        %3790 = vst [vmem:[%s217 + $0x8] sm:$0xff] %v3758
        %3791 = vst [vmem:[%s217 + $0x10] sm:$0xff] %v3759
        %3792 = vst [vmem:[%s217 + $0x18] sm:$0xff] %v3760
        %3793 = vst [vmem:[%s217 + $0x20] sm:$0xff] %v3761
        %3794 = vst [vmem:[%s217 + $0x28] sm:$0xff] %v3762
        %3795 = vst [vmem:[%s217 + $0x30] sm:$0xff] %v3763
        %3796 = vst [vmem:[%s217 + $0x38] sm:$0xff] %v3764
        %3797 = vst [vmem:[%s217 + $0x40] sm:$0xff] %v3765
        %3798 = vst [vmem:[%s217 + $0x48] sm:$0xff] %v3766
        %3799 = vst [vmem:[%s217 + $0x50] sm:$0xff] %v3767
        %3800 = vst [vmem:[%s217 + $0x58] sm:$0xff] %v3768
        %3801 = vst [vmem:[%s217 + $0x60] sm:$0xff] %v3769
        %3802 = vst [vmem:[%s217 + $0x68] sm:$0xff] %v3770
        %3803 = vst [vmem:[%s217 + $0x70] sm:$0xff] %v3771
        %3804 = vst [vmem:[%s217 + $0x78] sm:$0xff] %v3772
        %3805 = vst [vmem:[%s217 + $0x80] sm:$0xff] %v3773
        %3806 = vst [vmem:[%s217 + $0x88] sm:$0xff] %v3774
        %3807 = vst [vmem:[%s217 + $0x90] sm:$0xff] %v3775
        %3808 = vst [vmem:[%s217 + $0x98] sm:$0xff] %v3776
        %3809 = vst [vmem:[%s217 + $0xa0] sm:$0xff] %v3777
        %3810 = vst [vmem:[%s217 + $0xa8] sm:$0xff] %v3778
        %3811 = vst [vmem:[%s217 + $0xb0] sm:$0xff] %v3779
        %3812 = vst [vmem:[%s217 + $0xb8] sm:$0xff] %v3780
        %3813 = vst [vmem:[%s217 + $0xc0] sm:$0xff] %v3781
        %3814 = vst [vmem:[%s217 + $0xc8] sm:$0xff] %v3782
        %3815 = vst [vmem:[%s217 + $0xd0] sm:$0xff] %v3783
        %3816 = vst [vmem:[%s217 + $0xd8] sm:$0xff] %v3784
        %3817 = vst [vmem:[%s217 + $0xe0] sm:$0xff] %v3785
        %3818 = vst [vmem:[%s217 + $0xe8] sm:$0xff] %v3786
        %3819 = vst [vmem:[%s217 + $0xf0] sm:$0xff] %v3787
        %3820 = vst [vmem:[%s217 + $0xf8] sm:$0xff] %v3788
        %s3821 = sand.u32 %s97, 1
        %s3822 = scalar_lea.sflag [#allocation4], %s3821
        %s3823 = sand.u32 %s97, 1
        %s3824 = smul.addr %s3823, 256
        %s3825 = scalar_lea.vmem [#allocation8], %s3824
        // Predicated region
        $region45: #{tpu_custom_call.1} parent=31 // pred_check
          %p3826 = pneg %p107
        $region46: #{tpu_custom_call.1} parent=31 // pred_check_branch
          %3828 = sbr.rel (%p3826) target = $region48
        $region47: #{tpu_custom_call.1} parent=31 // pred_region
          %s3830 = ssub.s32 4096, 4096
          %3831 = vsyncadd %s3822, %s3830
          %s3832 = smul.addr %s21, 32
          %s3833 = smul.addr %s3832, 128
          %s3834 = scalar_lea.hbm %s3, %s3833
          %s3835 = sshll.u32 %s3825, 4
          %s3836 = int_to_ptr.vmem [resolvable:$true] %s3835
          %3841 = dma.vmem_to_hbm [thread:$0]  %s3836, 4096, %s3834, %s3822, 128, 128, 8
        $region48: #{tpu_custom_call.1} parent=31 // pred_fallthru
          _
      $region32: #{tpu_custom_call.1} parent=5 // pred_fallthru
        _
      %p3842 = scmp.le.s32.totalorder 2, %s16
      // Predicated region
      $region49: #{tpu_custom_call.1} parent=5 // pred_check
        %p3843 = pneg %p3842
      $region50: #{tpu_custom_call.1} parent=5 // pred_check_branch
        %3845 = sbr.rel (%p3843) target = $region52
      $region51: #{tpu_custom_call.1} parent=5 // pred_region
        %s3846 = ssub.s32 %s16, 2
        // Predicated region
        $region53: #{tpu_custom_call.1} parent=51 // pred_check
          %p3847 = pneg %p113
        $region54: #{tpu_custom_call.1} parent=51 // pred_check_branch
          %3849 = sbr.rel (%p3847) target = $region56
        $region55: #{tpu_custom_call.1} parent=51 // pred_region
          %s3850 = sand.u32 %s98, 1
          %s3851 = scalar_lea.sflag [#allocation4], %s3850
          %s3852 = sand.u32 %s98, 1
          %s3853 = smul.addr %s3852, 256
          %s3854 = scalar_lea.vmem [#allocation8], %s3853
          %3855 = dma.done %s3851, 4096
        $region56: #{tpu_custom_call.1} parent=51 // pred_fallthru
          _
      $region52: #{tpu_custom_call.1} parent=5 // pred_fallthru
        _
    $region6: #{tpu_custom_call.1} parent=1 // loop_footer
      %s20 = sadd.s32 1, %s16
    $region7: #{tpu_custom_call.1} parent=1 // loop_footer_branch
      %15 = sbr.rel target = $region3
    $region8: #{tpu_custom_call.1} parent=1 // loop_exit
      _
    %3856 = vsyncpa [#allocation3], 1
    %s3857 = scalar_lea.sflag [#allocation3], 1
    %3858 = vsyncpa %s3857, 1
    %3859 = vsyncpa [#allocation6], 1
    %3860 = vsyncpa [#allocation4], 1
    %s3861 = scalar_lea.sflag [#allocation4], 1
    %3862 = vsyncpa %s3861, 1

</llo_original>
